<compile_context>
chip_gen: v7x
topology: tpu7x:2x2x1
jax: 0.10.0
libtpu: 0.0.40
codegen_flags: <defaults>
</compile_context>

<pallas_src>
import math
from functools import partial

import numpy as np
import jax
import jax.numpy as jnp
from jax.experimental import pallas as pl
from jax.experimental.pallas import tpu as pltpu

# ----------------------------- synthetic GPT-2 config ------------------------
VOCAB = 128            # stands in for 50257
HIDDEN = 32
N_HEAD = 4
HEAD_DIM = HIDDEN // N_HEAD
N_LAYER = 2
MAX_POS = 64
PAD_TOKEN_ID = 0
PSEUDO_TOKEN_ID = VOCAB        # analog of 50257 (out-of-vocab pseudo token)
NUM_ENTITY_TYPES = 4           # conll2003 branch
NEG_INF = -1e9
LM_VOCAB_TILE = 512            # vocab tile for the LM-head grid (>=V -> one tile)


# ------------------------------- Pallas kernels ------------------------------
def _make_block_kernel(Tq, T):
    """Fused GPT-2 block: ln1 -> QKV -> MHA(causal+pad mask) -> proj -> res
                          -> ln2 -> MLP(gelu_new) -> res.   One batch elem/step."""
    scale = 1.0 / math.sqrt(HEAD_DIM)

    def kernel(x_ref, kv_ref, ln1g_ref, ln1b_ref, wqkv_ref, bqkv_ref,
               wproj_ref, bproj_ref, ln2g_ref, ln2b_ref,
               wfc_ref, bfc_ref, wpr_ref, bpr_ref, o_ref):
        x = x_ref[0]                                             # (T, H) f32

        # ---- ln_1 (f32 statistics) ----
        mu = jnp.mean(x, axis=-1, keepdims=True)
        var = jnp.mean((x - mu) ** 2, axis=-1, keepdims=True)
        h1 = (x - mu) * jax.lax.rsqrt(var + 1e-5) * ln1g_ref[...] + ln1b_ref[...]
        h1b = h1.astype(jnp.bfloat16)

        # ---- causal + key-padding mask, built in-kernel (no HBM bias tensor) ----
        row = jax.lax.broadcasted_iota(jnp.int32, (T, T), 0)
        col = jax.lax.broadcasted_iota(jnp.int32, (T, T), 1)
        kv_ok = kv_ref[0] > 0.5                                  # (1, T) bool
        allowed = (col <= row) & ((row >= Tq) | kv_ok)           # HF semantics:
        bias = jnp.where(allowed, 0.0, NEG_INF).astype(jnp.float32)
        # rows < Tq: causal & non-pad keys; rows >= Tq (generated): causal only.

        # ---- multi-head attention; out-projection folded into the head loop ----
        attn_proj = jnp.zeros((T, HIDDEN), jnp.float32)
        for hh in range(N_HEAD):
            q = (jnp.dot(h1b, wqkv_ref[hh],
                         preferred_element_type=jnp.float32) + bqkv_ref[hh])
            k = (jnp.dot(h1b, wqkv_ref[N_HEAD + hh],
                         preferred_element_type=jnp.float32) + bqkv_ref[N_HEAD + hh])
            v = (jnp.dot(h1b, wqkv_ref[2 * N_HEAD + hh],
                         preferred_element_type=jnp.float32) + bqkv_ref[2 * N_HEAD + hh])
            s = jax.lax.dot_general(q, k, (((1,), (1,)), ((), ())),
                                    preferred_element_type=jnp.float32) * scale + bias
            m = jnp.max(s, axis=-1, keepdims=True)
            p = jnp.exp(s - m)
            p = p * pl.reciprocal(jnp.sum(p, axis=-1, keepdims=True), approx=True)
            oh = jnp.dot(p, v, preferred_element_type=jnp.float32)      # (T, HD)
            attn_proj = attn_proj + jnp.dot(oh.astype(jnp.bfloat16), wproj_ref[hh],
                                            preferred_element_type=jnp.float32)
        x = x + attn_proj + bproj_ref[...]

        # ---- ln_2 + MLP (gelu_new) ----
        mu2 = jnp.mean(x, axis=-1, keepdims=True)
        var2 = jnp.mean((x - mu2) ** 2, axis=-1, keepdims=True)
        h2 = (x - mu2) * jax.lax.rsqrt(var2 + 1e-5) * ln2g_ref[...] + ln2b_ref[...]
        f = (jnp.dot(h2.astype(jnp.bfloat16), wfc_ref[...],
                     preferred_element_type=jnp.float32) + bfc_ref[...])
        c = 0.7978845608028654                                   # sqrt(2/pi)
        f = 0.5 * f * (1.0 + jnp.tanh(c * (f + 0.044715 * f * f * f)))
        o_ref[0] = x + (jnp.dot(f.astype(jnp.bfloat16), wpr_ref[...],
                                preferred_element_type=jnp.float32) + bpr_ref[...])

    return kernel


def block_forward(x, kv_valid, blk, Tq):
    """x: [B, T, H] f32; kv_valid: [B, 1, T] f32 (1=real prompt token)."""
    B, T, H = x.shape

    def spec_full(arr):
        nd = arr.ndim
        return pl.BlockSpec(arr.shape, lambda b, _nd=nd: (0,) * _nd)

    return pl.pallas_call(
        _make_block_kernel(Tq, T),
        out_shape=jax.ShapeDtypeStruct((B, T, H), jnp.float32),
        grid=(B,),
        in_specs=[pl.BlockSpec((1, T, H), lambda b: (b, 0, 0)),
                  pl.BlockSpec((1, 1, T), lambda b: (b, 0, 0)),
                  spec_full(blk["ln1_g"]), spec_full(blk["ln1_b"]),
                  spec_full(blk["wqkv"]), spec_full(blk["bqkv"]),
                  spec_full(blk["wproj"]), spec_full(blk["bproj"]),
                  spec_full(blk["ln2_g"]), spec_full(blk["ln2_b"]),
                  spec_full(blk["wfc"]), spec_full(blk["bfc"]),
                  spec_full(blk["wpr"]), spec_full(blk["bpr"])],
        out_specs=pl.BlockSpec((1, T, H), lambda b: (b, 0, 0)),
        compiler_params=pltpu.CompilerParams(dimension_semantics=("parallel",)),
    )(x, kv_valid, blk["ln1_g"], blk["ln1_b"], blk["wqkv"], blk["bqkv"],
      blk["wproj"], blk["bproj"], blk["ln2_g"], blk["ln2_b"],
      blk["wfc"], blk["bfc"], blk["wpr"], blk["bpr"])


def _lnf_lmhead_kernel(x_ref, g_ref, b_ref, w_ref, o_ref):
    x = x_ref[...]                                               # (M, H) f32
    mu = jnp.mean(x, axis=-1, keepdims=True)
    var = jnp.mean((x - mu) ** 2, axis=-1, keepdims=True)
    xn = (x - mu) * jax.lax.rsqrt(var + 1e-5) * g_ref[...] + b_ref[...]
    o_ref[...] = jnp.dot(xn.astype(jnp.bfloat16), w_ref[...],
                         preferred_element_type=jnp.float32)


def lnf_lm_head(x, g, b, wte_t):
    """Fused final layernorm + tied LM head, grid tiled over the vocab axis."""
    M, H = x.shape
    V = wte_t.shape[1]
    tv = min(LM_VOCAB_TILE, V)
    assert V % tv == 0
    return pl.pallas_call(
        _lnf_lmhead_kernel,
        out_shape=jax.ShapeDtypeStruct((M, V), jnp.float32),
        grid=(V // tv,),
        in_specs=[pl.BlockSpec((M, H), lambda j: (0, 0)),
                  pl.BlockSpec((1, H), lambda j: (0, 0)),
                  pl.BlockSpec((1, H), lambda j: (0, 0)),
                  pl.BlockSpec((H, tv), lambda j: (0, j))],
        out_specs=pl.BlockSpec((M, tv), lambda j: (0, j)),
        compiler_params=pltpu.CompilerParams(dimension_semantics=("parallel",)),
    )(x, g, b, wte_t)


def _ce_kernel(logits_ref, tgt_ref, nll_ref, valid_ref):
    logits = logits_ref[...]                                     # (N, V)
    tgt = tgt_ref[...]                                           # (N, 1) int32
    m = jnp.max(logits, axis=-1, keepdims=True)
    lse = m + jnp.log(jnp.sum(jnp.exp(logits - m), axis=-1, keepdims=True))
    col = jax.lax.broadcasted_iota(jnp.int32, logits.shape, 1)
    onehot = col == tgt
    tlogit = jnp.sum(jnp.where(onehot, logits, 0.0), axis=-1, keepdims=True)
    valid = tgt != -100                                          # ignore_index
    nll_ref[...] = jnp.where(valid, lse - tlogit, 0.0)
    valid_ref[...] = valid.astype(jnp.float32)


def cross_entropy(logits, targets):
    N, V = logits.shape
    nll, valid = pl.pallas_call(
        _ce_kernel,
        out_shape=(jax.ShapeDtypeStruct((N, 1), jnp.float32),
                   jax.ShapeDtypeStruct((N, 1), jnp.float32)),
        grid=(1,),
        in_specs=[pl.BlockSpec((N, V), lambda i: (0, 0)),
                  pl.BlockSpec((N, 1), lambda i: (0, 0))],
        out_specs=(pl.BlockSpec((N, 1), lambda i: (0, 0)),
                   pl.BlockSpec((N, 1), lambda i: (0, 0))),
    )(logits, targets.reshape(N, 1))
    return jnp.sum(nll) / jnp.sum(valid)          # mean over non-ignored


# ------------------------------- mini GPT-2 body ------------------------------
def init_params(key):
    keys = jax.random.split(key, 4 + N_LAYER)

    def nrm(k, shape):
        return 0.02 * jax.random.normal(k, shape, dtype=jnp.float32)

    wte = nrm(keys[0], (VOCAB, HIDDEN))
    params = {
        "wte": wte.astype(jnp.bfloat16),           # embedding table (bf16)
        "wte_T": wte.T.astype(jnp.bfloat16),       # tied LM head, transposed ONCE
        "wpe": nrm(keys[1], (MAX_POS, HIDDEN)),
        "ln_f_g": jnp.ones((1, HIDDEN), jnp.float32),
        "ln_f_b": jnp.zeros((1, HIDDEN), jnp.float32),
        "blocks": [],
    }
    for l in range(N_LAYER):
        ks = jax.random.split(keys[4 + l], 4)
        c_attn_w = nrm(ks[0], (HIDDEN, 3 * HIDDEN))
        c_attn_b = jnp.zeros((3 * HIDDEN,), jnp.float32)
        c_proj_w = nrm(ks[1], (HIDDEN, HIDDEN))
        c_proj_b = jnp.zeros((HIDDEN,), jnp.float32)
        fc_w = nrm(ks[2], (HIDDEN, 4 * HIDDEN))
        fc_b = jnp.zeros((4 * HIDDEN,), jnp.float32)
        pr_w = nrm(ks[3], (4 * HIDDEN, HIDDEN))
        pr_b = jnp.zeros((HIDDEN,), jnp.float32)

        def per_head_cols(w_slice):               # (H, H) -> (N_HEAD, H, HD)
            return w_slice.reshape(HIDDEN, N_HEAD, HEAD_DIM).transpose(1, 0, 2)

        wqkv = jnp.concatenate(
            [per_head_cols(c_attn_w[:, i * HIDDEN:(i + 1) * HIDDEN])
             for i in range(3)], axis=0).astype(jnp.bfloat16)     # (3*NH, H, HD)
        bqkv = jnp.concatenate(
            [c_attn_b[i * HIDDEN:(i + 1) * HIDDEN].reshape(N_HEAD, 1, HEAD_DIM)
             for i in range(3)], axis=0)                          # (3*NH, 1, HD)

        params["blocks"].append({
            "ln1_g": jnp.ones((1, HIDDEN), jnp.float32),
            "ln1_b": jnp.zeros((1, HIDDEN), jnp.float32),
            "wqkv": wqkv,
            "bqkv": bqkv,
            "wproj": c_proj_w.reshape(N_HEAD, HEAD_DIM, HIDDEN).astype(jnp.bfloat16),
            "bproj": c_proj_b.reshape(1, HIDDEN),
            "ln2_g": jnp.ones((1, HIDDEN), jnp.float32),
            "ln2_b": jnp.zeros((1, HIDDEN), jnp.float32),
            "wfc": fc_w.astype(jnp.bfloat16),
            "bfc": fc_b.reshape(1, 4 * HIDDEN),
            "wpr": pr_w.astype(jnp.bfloat16),
            "bpr": pr_b.reshape(1, HIDDEN),
        })
    return params


def gpt2_hidden(params, tokens, kv_valid, Tq):
    """tokens: [B, T] int32; kv_valid: [B, 1, T] f32. Returns pre-ln_f hidden [B,T,H]."""
    B, T = tokens.shape
    x = (jnp.take(params["wte"], tokens, axis=0).astype(jnp.float32)
         + params["wpe"][:T][None])
    for blk in params["blocks"]:
        x = block_forward(x, kv_valid, blk, Tq)
    return x


@partial(jax.jit, static_argnames=("Tq", "max_len"))
def run_generation(params, q_ids, kv_valid, Tq, max_len):
    """Fixed-shape prompt pass + on-device greedy decode (single compile)."""
    B = q_ids.shape[0]
    T = Tq + max_len

    tokens = jnp.full((B, T), PAD_TOKEN_ID, jnp.int32).at[:, :Tq].set(q_ids)

    # ---- prompt pass: full logits (needed for the `example` top-1 row) ----
    x = gpt2_hidden(params, tokens, kv_valid, Tq)
    logits_full = lnf_lm_head(x.reshape(B * T, HIDDEN), params["ln_f_g"],
                              params["ln_f_b"], params["wte_T"]).reshape(B, T, VOCAB)
    prompt_argmax = jnp.argmax(logits_full[0, :Tq], axis=-1).astype(jnp.int32)
    logit0 = logits_full[:, Tq - 1, :]
    gen0 = jnp.argmax(logit0, axis=-1).astype(jnp.int32)

    all_logits = jnp.zeros((B, max_len, VOCAB), jnp.float32).at[:, 0, :].set(logit0)
    generated = jnp.zeros((B, max_len), jnp.int32).at[:, 0].set(gen0)
    tokens = tokens.at[:, Tq].set(gen0)

    # ---- greedy decode, fully on-device (no host sync / recompile per step) ----
    def step(i, carry):
        tokens, all_logits, generated = carry
        xh = gpt2_hidden(params, tokens, kv_valid, Tq)
        pos = Tq - 1 + i
        h_last = jax.lax.dynamic_slice(xh, (0, pos, 0), (B, 1, HIDDEN)).reshape(B, HIDDEN)
        logit = lnf_lm_head(h_last, params["ln_f_g"], params["ln_f_b"],
                            params["wte_T"])                      # [B, V]
        nxt = jnp.argmax(logit, axis=-1).astype(jnp.int32)
        all_logits = jax.lax.dynamic_update_slice(all_logits, logit[:, None, :], (0, i, 0))
        generated = jax.lax.dynamic_update_slice(generated, nxt[:, None], (0, i))
        tokens = jax.lax.dynamic_update_slice(tokens, nxt[:, None], (0, Tq + i))
        return (tokens, all_logits, generated)

    tokens, all_logits, generated = jax.lax.fori_loop(
        1, max_len, step, (tokens, all_logits, generated))
    return all_logits, generated, prompt_argmax


# ------------------------ BareGPT2_loop forward (host glue) -------------------
def compute_hit1(num_entity_types, bz, entities, max_len, assume_true_length,
                 generated, entity_type):
    hit1 = [0] * num_entity_types
    pred_right_ids = []
    for i in range(bz):
        use_label = [int(entities[i][j]) for j in range(max_len)
                     if int(entities[i][j]) != -100]
        if len(use_label) == 0:
            continue
        b = use_label[:assume_true_length]
        c = [int(x) for x in generated[i][:assume_true_length]]
        if b == c:
            hit1[int(entity_type[i])] += 1
            pred_right_ids.append(generated[i][:assume_true_length + 1])
    true_entities = entities.tolist()
    return hit1, generated, true_entities


def bare_gpt2_loop_forward(params, discrete_prompt, input_ids, entities,
                           entity_type, assume_true_length=1, test=False):
    input_ids = np.asarray(input_ids)
    entities = np.asarray(entities)
    entity_type = np.asarray(entity_type).reshape(-1)
    bz = input_ids.shape[0]
    max_len = entities.shape[1]

    # get_query: strip pads, append per-type discrete prompt, pad_sequence
    queries_list = []
    for i in range(bz):
        inp = [int(t) for t in input_ids[i] if int(t) != PAD_TOKEN_ID]
        queries_list.append(inp + list(discrete_prompt[int(entity_type[i])]))
    Tq = max(len(q) for q in queries_list)
    queries = np.full((bz, Tq), PAD_TOKEN_ID, dtype=np.int32)
    for i, q in enumerate(queries_list):
        queries[i, :len(q)] = q
    key_valid = queries != PAD_TOKEN_ID                       # attention_mask1
    q_embed_ids = np.where(queries == PSEUDO_TOKEN_ID,
                           PSEUDO_TOKEN_ID - 1, queries).astype(np.int32)

    # key-valid vector for the in-kernel mask (generated positions always valid)
    T_total = Tq + max_len
    kv_valid_f = np.ones((bz, 1, T_total), dtype=np.float32)
    kv_valid_f[:, 0, :Tq] = key_valid.astype(np.float32)

    all_logits, generated_dev, prompt_argmax = run_generation(
        params, jnp.asarray(q_embed_ids), jnp.asarray(kv_valid_f),
        Tq=Tq, max_len=max_len)

    generated = np.asarray(generated_dev)                      # single host sync
    example = np.zeros((2, max_len + Tq), dtype=np.float32)
    example[0, :Tq] = np.asarray(prompt_argmax)
    example[0, Tq:] = generated[0, :]
    example[1, :input_ids.shape[1]] = input_ids[0]

    hit1, pred_entity_ids, true_entities = compute_hit1(
        NUM_ENTITY_TYPES, bz, entities, max_len, assume_true_length,
        generated, entity_type)

    if not test:
        loss = cross_entropy(
            all_logits.reshape(-1, VOCAB),
            jnp.asarray(entities.reshape(-1).astype(np.int32)))
        return loss, hit1, pred_entity_ids, example, true_entities
    return hit1, pred_entity_ids, example, true_entities


# ------------------------------------ main ------------------------------------
if __name__ == "__main__":
    key = jax.random.PRNGKey(0)
    k_par, k_inp, k_ent, k_prompt = jax.random.split(key, 4)
    params = init_params(k_par)

    bz, in_len, max_len = 2, 8, 8

    # padded input_ids [bz, max_length]
    tok = np.asarray(jax.random.randint(k_inp, (bz, in_len), 1, VOCAB))
    input_ids = np.zeros((bz, in_len), dtype=np.int32)
    for i, L in enumerate([6, 4]):
        input_ids[i, :L] = tok[i, :L]

    # entities [bz, max_len] padded with -100
    ent_tok = np.asarray(jax.random.randint(k_ent, (bz, max_len), 1, VOCAB))
    entities = np.full((bz, max_len), -100, dtype=np.int32)
    for i, L in enumerate([3, 5]):
        entities[i, :L] = ent_tok[i, :L]

    entity_type = np.array([1, 3], dtype=np.int32)

    # synthetic "discrete prompts" (stand-in for tokenizer-encoded questions)
    prompt_tok = np.asarray(jax.random.randint(k_prompt, (4, 5), 1, VOCAB))
    prompt_lens = [3, 4, 5, 3]
    discrete_prompt = [list(map(int, prompt_tok[i, :prompt_lens[i]]))
                       for i in range(NUM_ENTITY_TYPES)]

    loss, hit1, pred_entity_ids, example, true_entities = bare_gpt2_loop_forward(
        params, discrete_prompt, input_ids, entities, entity_type,
        assume_true_length=1, test=False)

    jax.block_until_ready(loss)
    print("KERNEL_OK")
</pallas_src>

<mosaic_0001>
module attributes {stable_mosaic.version = 11 : i64} {
  func.func @_lnf_lmhead_kernel(%arg0: i32, %arg1: memref<36x32xf32, #tpu.memory_space<vmem>>, %arg2: memref<1x32xf32, #tpu.memory_space<vmem>>, %arg3: memref<1x32xf32, #tpu.memory_space<vmem>>, %arg4: memref<32x128xbf16, #tpu.memory_space<vmem>>, %arg5: memref<36x128xf32, #tpu.memory_space<vmem>>) attributes {dimension_semantics = [#tpu.dimension_semantics<parallel>], iteration_bounds = array<i64: 1>, scalar_prefetch = 0 : i64, scratch_operands = 0 : i64, tpu.core_type = #tpu.core_type<tc>, window_params = [{pipeline_mode = #tpu.pipeline_mode<synchronous>, transform_indices = @transform_0, window_bounds = array<i64: 36, 32>}, {pipeline_mode = #tpu.pipeline_mode<synchronous>, transform_indices = @transform_1, window_bounds = array<i64: 1, 32>}, {pipeline_mode = #tpu.pipeline_mode<synchronous>, transform_indices = @transform_2, window_bounds = array<i64: 1, 32>}, {transform_indices = @transform_3, window_bounds = array<i64: 32, 128>}, {transform_indices = @transform_4, window_bounds = array<i64: 36, 128>}]} {
    %c0 = arith.constant 0 : index
    %c0_0 = arith.constant 0 : index
    %0 = vector.load %arg1[%c0, %c0_0] : memref<36x32xf32, #tpu.memory_space<vmem>>, vector<36x32xf32>
    %cst = arith.constant dense<0.000000e+00> : vector<36xf32>
    %1 = vector.multi_reduction <add>, %0, %cst [1] : vector<36x32xf32> to vector<36xf32>
    %2 = vector.shape_cast %1 : vector<36xf32> to vector<36x1xf32>
    %cst_1 = arith.constant 3.200000e+01 : f32
    %3 = vector.broadcast %cst_1 : f32 to vector<36x1xf32>
    %4 = arith.divf %2, %3 : vector<36x1xf32>
    %5 = vector.broadcast %4 : vector<36x1xf32> to vector<36x32xf32>
    %6 = arith.subf %0, %5 : vector<36x32xf32>
    %7 = arith.mulf %6, %6 : vector<36x32xf32>
    %cst_2 = arith.constant dense<0.000000e+00> : vector<36xf32>
    %8 = vector.multi_reduction <add>, %7, %cst_2 [1] : vector<36x32xf32> to vector<36xf32>
    %9 = vector.shape_cast %8 : vector<36xf32> to vector<36x1xf32>
    %cst_3 = arith.constant 3.200000e+01 : f32
    %10 = vector.broadcast %cst_3 : f32 to vector<36x1xf32>
    %11 = arith.divf %9, %10 : vector<36x1xf32>
    %12 = vector.broadcast %4 : vector<36x1xf32> to vector<36x32xf32>
    %13 = arith.subf %0, %12 : vector<36x32xf32>
    %cst_4 = arith.constant 9.99999974E-6 : f32
    %14 = vector.broadcast %cst_4 : f32 to vector<36x1xf32>
    %15 = arith.addf %11, %14 : vector<36x1xf32>
    %16 = math.rsqrt %15 : vector<36x1xf32>
    %17 = vector.broadcast %16 : vector<36x1xf32> to vector<36x32xf32>
    %18 = arith.mulf %13, %17 : vector<36x32xf32>
    %c0_5 = arith.constant 0 : index
    %c0_6 = arith.constant 0 : index
    %19 = vector.load %arg2[%c0_5, %c0_6] : memref<1x32xf32, #tpu.memory_space<vmem>>, vector<1x32xf32>
    %20 = vector.broadcast %19 : vector<1x32xf32> to vector<36x32xf32>
    %21 = arith.mulf %18, %20 : vector<36x32xf32>
    %c0_7 = arith.constant 0 : index
    %c0_8 = arith.constant 0 : index
    %22 = vector.load %arg3[%c0_7, %c0_8] : memref<1x32xf32, #tpu.memory_space<vmem>>, vector<1x32xf32>
    %23 = vector.broadcast %22 : vector<1x32xf32> to vector<36x32xf32>
    %24 = arith.addf %21, %23 : vector<36x32xf32>
    %25 = arith.truncf %24 : vector<36x32xf32> to vector<36x32xbf16>
    %c0_9 = arith.constant 0 : index
    %c0_10 = arith.constant 0 : index
    %26 = vector.load %arg4[%c0_9, %c0_10] : memref<32x128xbf16, #tpu.memory_space<vmem>>, vector<32x128xbf16>
    %cst_11 = arith.constant dense<0.000000e+00> : vector<36x128xf32>
    %27 = tpu.matmul %25, %26, %cst_11 {dimension_numbers = #tpu.dot_dimension_numbers<[1], [0], [0], [1], [0, 0, 1, 1], [], []>} : vector<36x32xbf16>, vector<32x128xbf16>, vector<36x128xf32> -> vector<36x128xf32>
    %c0_12 = arith.constant 0 : index
    %c0_13 = arith.constant 0 : index
    %28 = vector.load %arg5[%c0_12, %c0_13] : memref<36x128xf32, #tpu.memory_space<vmem>>, vector<36x128xf32>
    tpu.vector_store %arg5[%c0_12, %c0_13], %27 {strides = array<i32>} : memref<36x128xf32, #tpu.memory_space<vmem>>, vector<36x128xf32>,
    return
  }
  func.func @transform_0(%arg0: i32) -> (i32, i32) {
    %c0_i32 = arith.constant 0 : i32
    %c0_i32_0 = arith.constant 0 : i32
    %c0_i32_1 = arith.constant 0 : i32
    return %c0_i32, %c0_i32_0 : i32, i32
  }
  func.func @transform_1(%arg0: i32) -> (i32, i32) {
    %c0_i32 = arith.constant 0 : i32
    %c0_i32_0 = arith.constant 0 : i32
    %c0_i32_1 = arith.constant 0 : i32
    return %c0_i32, %c0_i32_0 : i32, i32
  }
  func.func @transform_2(%arg0: i32) -> (i32, i32) {
    %c0_i32 = arith.constant 0 : i32
    %c0_i32_0 = arith.constant 0 : i32
    %c0_i32_1 = arith.constant 0 : i32
    return %c0_i32, %c0_i32_0 : i32, i32
  }
  func.func @transform_3(%arg0: i32) -> (i32, i32) {
    %c0_i32 = arith.constant 0 : i32
    %c0_i32_0 = arith.constant 0 : i32
    return %c0_i32, %arg0 : i32, i32
  }
  func.func @transform_4(%arg0: i32) -> (i32, i32) {
    %c0_i32 = arith.constant 0 : i32
    %c0_i32_0 = arith.constant 0 : i32
    return %c0_i32, %arg0 : i32, i32
  }
}

module attributes {stable_mosaic.version = 11 : i64} {
  func.func @_lnf_lmhead_kernel(%arg0: i32, %arg1: memref<2x32xf32, #tpu.memory_space<vmem>>, %arg2: memref<1x32xf32, #tpu.memory_space<vmem>>, %arg3: memref<1x32xf32, #tpu.memory_space<vmem>>, %arg4: memref<32x128xbf16, #tpu.memory_space<vmem>>, %arg5: memref<2x128xf32, #tpu.memory_space<vmem>>) attributes {dimension_semantics = [#tpu.dimension_semantics<parallel>], iteration_bounds = array<i64: 1>, scalar_prefetch = 0 : i64, scratch_operands = 0 : i64, tpu.core_type = #tpu.core_type<tc>, window_params = [{pipeline_mode = #tpu.pipeline_mode<synchronous>, transform_indices = @transform_0, window_bounds = array<i64: 2, 32>}, {pipeline_mode = #tpu.pipeline_mode<synchronous>, transform_indices = @transform_1, window_bounds = array<i64: 1, 32>}, {pipeline_mode = #tpu.pipeline_mode<synchronous>, transform_indices = @transform_2, window_bounds = array<i64: 1, 32>}, {transform_indices = @transform_3, window_bounds = array<i64: 32, 128>}, {transform_indices = @transform_4, window_bounds = array<i64: 2, 128>}]} {
    %c0 = arith.constant 0 : index
    %c0_0 = arith.constant 0 : index
    %0 = vector.load %arg1[%c0, %c0_0] : memref<2x32xf32, #tpu.memory_space<vmem>>, vector<2x32xf32>
    %cst = arith.constant dense<0.000000e+00> : vector<2xf32>
    %1 = vector.multi_reduction <add>, %0, %cst [1] : vector<2x32xf32> to vector<2xf32>
    %2 = vector.shape_cast %1 : vector<2xf32> to vector<2x1xf32>
    %cst_1 = arith.constant 3.200000e+01 : f32
    %3 = vector.broadcast %cst_1 : f32 to vector<2x1xf32>
    %4 = arith.divf %2, %3 : vector<2x1xf32>
    %5 = vector.broadcast %4 : vector<2x1xf32> to vector<2x32xf32>
    %6 = arith.subf %0, %5 : vector<2x32xf32>
    %7 = arith.mulf %6, %6 : vector<2x32xf32>
    %cst_2 = arith.constant dense<0.000000e+00> : vector<2xf32>
    %8 = vector.multi_reduction <add>, %7, %cst_2 [1] : vector<2x32xf32> to vector<2xf32>
    %9 = vector.shape_cast %8 : vector<2xf32> to vector<2x1xf32>
    %cst_3 = arith.constant 3.200000e+01 : f32
    %10 = vector.broadcast %cst_3 : f32 to vector<2x1xf32>
    %11 = arith.divf %9, %10 : vector<2x1xf32>
    %12 = vector.broadcast %4 : vector<2x1xf32> to vector<2x32xf32>
    %13 = arith.subf %0, %12 : vector<2x32xf32>
    %cst_4 = arith.constant 9.99999974E-6 : f32
    %14 = vector.broadcast %cst_4 : f32 to vector<2x1xf32>
    %15 = arith.addf %11, %14 : vector<2x1xf32>
    %16 = math.rsqrt %15 : vector<2x1xf32>
    %17 = vector.broadcast %16 : vector<2x1xf32> to vector<2x32xf32>
    %18 = arith.mulf %13, %17 : vector<2x32xf32>
    %c0_5 = arith.constant 0 : index
    %c0_6 = arith.constant 0 : index
    %19 = vector.load %arg2[%c0_5, %c0_6] : memref<1x32xf32, #tpu.memory_space<vmem>>, vector<1x32xf32>
    %20 = vector.broadcast %19 : vector<1x32xf32> to vector<2x32xf32>
    %21 = arith.mulf %18, %20 : vector<2x32xf32>
    %c0_7 = arith.constant 0 : index
    %c0_8 = arith.constant 0 : index
    %22 = vector.load %arg3[%c0_7, %c0_8] : memref<1x32xf32, #tpu.memory_space<vmem>>, vector<1x32xf32>
    %23 = vector.broadcast %22 : vector<1x32xf32> to vector<2x32xf32>
    %24 = arith.addf %21, %23 : vector<2x32xf32>
    %25 = arith.truncf %24 : vector<2x32xf32> to vector<2x32xbf16>
    %c0_9 = arith.constant 0 : index
    %c0_10 = arith.constant 0 : index
    %26 = vector.load %arg4[%c0_9, %c0_10] : memref<32x128xbf16, #tpu.memory_space<vmem>>, vector<32x128xbf16>
    %cst_11 = arith.constant dense<0.000000e+00> : vector<2x128xf32>
    %27 = tpu.matmul %25, %26, %cst_11 {dimension_numbers = #tpu.dot_dimension_numbers<[1], [0], [0], [1], [0, 0, 1, 1], [], []>} : vector<2x32xbf16>, vector<32x128xbf16>, vector<2x128xf32> -> vector<2x128xf32>
    %c0_12 = arith.constant 0 : index
    %c0_13 = arith.constant 0 : index
    %28 = vector.load %arg5[%c0_12, %c0_13] : memref<2x128xf32, #tpu.memory_space<vmem>>, vector<2x128xf32>
    tpu.vector_store %arg5[%c0_12, %c0_13], %27 {strides = array<i32>} : memref<2x128xf32, #tpu.memory_space<vmem>>, vector<2x128xf32>,
    return
  }
  func.func @transform_0(%arg0: i32) -> (i32, i32) {
    %c0_i32 = arith.constant 0 : i32
    %c0_i32_0 = arith.constant 0 : i32
    %c0_i32_1 = arith.constant 0 : i32
    return %c0_i32, %c0_i32_0 : i32, i32
  }
  func.func @transform_1(%arg0: i32) -> (i32, i32) {
    %c0_i32 = arith.constant 0 : i32
    %c0_i32_0 = arith.constant 0 : i32
    %c0_i32_1 = arith.constant 0 : i32
    return %c0_i32, %c0_i32_0 : i32, i32
  }
  func.func @transform_2(%arg0: i32) -> (i32, i32) {
    %c0_i32 = arith.constant 0 : i32
    %c0_i32_0 = arith.constant 0 : i32
    %c0_i32_1 = arith.constant 0 : i32
    return %c0_i32, %c0_i32_0 : i32, i32
  }
  func.func @transform_3(%arg0: i32) -> (i32, i32) {
    %c0_i32 = arith.constant 0 : i32
    %c0_i32_0 = arith.constant 0 : i32
    return %c0_i32, %arg0 : i32, i32
  }
  func.func @transform_4(%arg0: i32) -> (i32, i32) {
    %c0_i32 = arith.constant 0 : i32
    %c0_i32_0 = arith.constant 0 : i32
    return %c0_i32, %arg0 : i32, i32
  }
}

module attributes {stable_mosaic.version = 11 : i64} {
  func.func @kernel(%arg0: i32, %arg1: memref<1x18x32xf32, #tpu.memory_space<vmem>>, %arg2: memref<1x1x18xf32, #tpu.memory_space<vmem>>, %arg3: memref<1x32xf32, #tpu.memory_space<vmem>>, %arg4: memref<1x32xf32, #tpu.memory_space<vmem>>, %arg5: memref<12x32x8xbf16, #tpu.memory_space<vmem>>, %arg6: memref<12x1x8xf32, #tpu.memory_space<vmem>>, %arg7: memref<4x8x32xbf16, #tpu.memory_space<vmem>>, %arg8: memref<1x32xf32, #tpu.memory_space<vmem>>, %arg9: memref<1x32xf32, #tpu.memory_space<vmem>>, %arg10: memref<1x32xf32, #tpu.memory_space<vmem>>, %arg11: memref<32x128xbf16, #tpu.memory_space<vmem>>, %arg12: memref<1x128xf32, #tpu.memory_space<vmem>>, %arg13: memref<128x32xbf16, #tpu.memory_space<vmem>>, %arg14: memref<1x32xf32, #tpu.memory_space<vmem>>, %arg15: memref<1x18x32xf32, #tpu.memory_space<vmem>>) attributes {dimension_semantics = [#tpu.dimension_semantics<parallel>], iteration_bounds = array<i64: 2>, scalar_prefetch = 0 : i64, scratch_operands = 0 : i64, tpu.core_type = #tpu.core_type<tc>, window_params = [{transform_indices = @transform_0, window_bounds = array<i64: 1, 18, 32>}, {transform_indices = @transform_1, window_bounds = array<i64: 1, 1, 18>}, {pipeline_mode = #tpu.pipeline_mode<synchronous>, transform_indices = @transform_2, window_bounds = array<i64: 1, 32>}, {pipeline_mode = #tpu.pipeline_mode<synchronous>, transform_indices = @transform_3, window_bounds = array<i64: 1, 32>}, {pipeline_mode = #tpu.pipeline_mode<synchronous>, transform_indices = @transform_4, window_bounds = array<i64: 12, 32, 8>}, {pipeline_mode = #tpu.pipeline_mode<synchronous>, transform_indices = @transform_5, window_bounds = array<i64: 12, 1, 8>}, {pipeline_mode = #tpu.pipeline_mode<synchronous>, transform_indices = @transform_6, window_bounds = array<i64: 4, 8, 32>}, {pipeline_mode = #tpu.pipeline_mode<synchronous>, transform_indices = @transform_7, window_bounds = array<i64: 1, 32>}, {pipeline_mode = #tpu.pipeline_mode<synchronous>, transform_indices = @transform_8, window_bounds = array<i64: 1, 32>}, {pipeline_mode = #tpu.pipeline_mode<synchronous>, transform_indices = @transform_9, window_bounds = array<i64: 1, 32>}, {pipeline_mode = #tpu.pipeline_mode<synchronous>, transform_indices = @transform_10, window_bounds = array<i64: 32, 128>}, {pipeline_mode = #tpu.pipeline_mode<synchronous>, transform_indices = @transform_11, window_bounds = array<i64: 1, 128>}, {pipeline_mode = #tpu.pipeline_mode<synchronous>, transform_indices = @transform_12, window_bounds = array<i64: 128, 32>}, {pipeline_mode = #tpu.pipeline_mode<synchronous>, transform_indices = @transform_13, window_bounds = array<i64: 1, 32>}, {transform_indices = @transform_14, window_bounds = array<i64: 1, 18, 32>}]} {
    %c0 = arith.constant 0 : index
    %c0_0 = arith.constant 0 : index
    %c0_1 = arith.constant 0 : index
    %0 = vector.load %arg1[%c0, %c0_0, %c0_1] : memref<1x18x32xf32, #tpu.memory_space<vmem>>, vector<1x18x32xf32>
    %1 = vector.shape_cast %0 : vector<1x18x32xf32> to vector<18x32xf32>
    %cst = arith.constant dense<0.000000e+00> : vector<18xf32>
    %2 = vector.multi_reduction <add>, %1, %cst [1] : vector<18x32xf32> to vector<18xf32>
    %3 = vector.shape_cast %2 : vector<18xf32> to vector<18x1xf32>
    %cst_2 = arith.constant 3.200000e+01 : f32
    %4 = vector.broadcast %cst_2 : f32 to vector<18x1xf32>
    %5 = arith.divf %3, %4 : vector<18x1xf32>
    %6 = vector.broadcast %5 : vector<18x1xf32> to vector<18x32xf32>
    %7 = arith.subf %1, %6 : vector<18x32xf32>
    %8 = arith.mulf %7, %7 : vector<18x32xf32>
    %cst_3 = arith.constant dense<0.000000e+00> : vector<18xf32>
    %9 = vector.multi_reduction <add>, %8, %cst_3 [1] : vector<18x32xf32> to vector<18xf32>
    %10 = vector.shape_cast %9 : vector<18xf32> to vector<18x1xf32>
    %cst_4 = arith.constant 3.200000e+01 : f32
    %11 = vector.broadcast %cst_4 : f32 to vector<18x1xf32>
    %12 = arith.divf %10, %11 : vector<18x1xf32>
    %13 = vector.broadcast %5 : vector<18x1xf32> to vector<18x32xf32>
    %14 = arith.subf %1, %13 : vector<18x32xf32>
    %cst_5 = arith.constant 9.99999974E-6 : f32
    %15 = vector.broadcast %cst_5 : f32 to vector<18x1xf32>
    %16 = arith.addf %12, %15 : vector<18x1xf32>
    %17 = math.rsqrt %16 : vector<18x1xf32>
    %18 = vector.broadcast %17 : vector<18x1xf32> to vector<18x32xf32>
    %19 = arith.mulf %14, %18 : vector<18x32xf32>
    %c0_6 = arith.constant 0 : index
    %c0_7 = arith.constant 0 : index
    %20 = vector.load %arg3[%c0_6, %c0_7] : memref<1x32xf32, #tpu.memory_space<vmem>>, vector<1x32xf32>
    %21 = vector.broadcast %20 : vector<1x32xf32> to vector<18x32xf32>
    %22 = arith.mulf %19, %21 : vector<18x32xf32>
    %c0_8 = arith.constant 0 : index
    %c0_9 = arith.constant 0 : index
    %23 = vector.load %arg4[%c0_8, %c0_9] : memref<1x32xf32, #tpu.memory_space<vmem>>, vector<1x32xf32>
    %24 = vector.broadcast %23 : vector<1x32xf32> to vector<18x32xf32>
    %25 = arith.addf %22, %24 : vector<18x32xf32>
    %26 = arith.truncf %25 : vector<18x32xf32> to vector<18x32xbf16>
    %27 = tpu.iota {dimensions = array<i32: 0>} : vector<18x18xi32>
    %28 = tpu.iota {dimensions = array<i32: 1>} : vector<18x18xi32>
    %c0_10 = arith.constant 0 : index
    %c0_11 = arith.constant 0 : index
    %c0_12 = arith.constant 0 : index
    %29 = vector.load %arg2[%c0_10, %c0_11, %c0_12] : memref<1x1x18xf32, #tpu.memory_space<vmem>>, vector<1x1x18xf32>
    %30 = vector.shape_cast %29 : vector<1x1x18xf32> to vector<1x18xf32>
    %cst_13 = arith.constant 5.000000e-01 : f32
    %31 = vector.broadcast %cst_13 : f32 to vector<1x18xf32>
    %32 = arith.cmpf ogt, %30, %31 : vector<1x18xf32>
    %33 = arith.cmpi sle, %28, %27 : vector<18x18xi32>
    %c10_i32 = arith.constant 10 : i32
    %34 = vector.broadcast %c10_i32 : i32 to vector<18x18xi32>
    %35 = arith.cmpi sge, %27, %34 : vector<18x18xi32>
    %36 = vector.broadcast %32 : vector<1x18xi1> to vector<18x18xi1>
    %37 = arith.ori %35, %36 : vector<18x18xi1>
    %38 = arith.andi %33, %37 : vector<18x18xi1>
    %cst_14 = arith.constant 0.000000e+00 : f32
    %cst_15 = arith.constant -1.000000e+09 : f32
    %39 = vector.broadcast %cst_14 : f32 to vector<18x18xf32>
    %40 = vector.broadcast %cst_15 : f32 to vector<18x18xf32>
    %41 = arith.select %38, %39, %40 : vector<18x18xi1>, vector<18x18xf32>
    %cst_16 = arith.constant 0.000000e+00 : f32
    %42 = vector.broadcast %cst_16 : f32 to vector<18x32xf32>
    %c0_17 = arith.constant 0 : index
    %c0_18 = arith.constant 0 : index
    %c0_19 = arith.constant 0 : index
    %43 = vector.load %arg5[%c0_17, %c0_18, %c0_19] : memref<12x32x8xbf16, #tpu.memory_space<vmem>>, vector<1x32x8xbf16>
    %44 = vector.shape_cast %43 : vector<1x32x8xbf16> to vector<32x8xbf16>
    %cst_20 = arith.constant dense<0.000000e+00> : vector<18x8xf32>
    %45 = tpu.matmul %26, %44, %cst_20 {dimension_numbers = #tpu.dot_dimension_numbers<[1], [0], [0], [1], [0, 0, 1, 1], [], []>} : vector<18x32xbf16>, vector<32x8xbf16>, vector<18x8xf32> -> vector<18x8xf32>
    %c0_21 = arith.constant 0 : index
    %c0_22 = arith.constant 0 : index
    %c0_23 = arith.constant 0 : index
    %46 = vector.load %arg6[%c0_21, %c0_22, %c0_23] : memref<12x1x8xf32, #tpu.memory_space<vmem>>, vector<1x1x8xf32>
    %47 = vector.shape_cast %46 : vector<1x1x8xf32> to vector<1x8xf32>
    %48 = vector.broadcast %47 : vector<1x8xf32> to vector<18x8xf32>
    %49 = arith.addf %45, %48 : vector<18x8xf32>
    %c4 = arith.constant 4 : index
    %c0_24 = arith.constant 0 : index
    %c0_25 = arith.constant 0 : index
    %50 = vector.load %arg5[%c4, %c0_24, %c0_25] : memref<12x32x8xbf16, #tpu.memory_space<vmem>>, vector<1x32x8xbf16>
    %51 = vector.shape_cast %50 : vector<1x32x8xbf16> to vector<32x8xbf16>
    %cst_26 = arith.constant dense<0.000000e+00> : vector<18x8xf32>
    %52 = tpu.matmul %26, %51, %cst_26 {dimension_numbers = #tpu.dot_dimension_numbers<[1], [0], [0], [1], [0, 0, 1, 1], [], []>} : vector<18x32xbf16>, vector<32x8xbf16>, vector<18x8xf32> -> vector<18x8xf32>
    %c4_27 = arith.constant 4 : index
    %c0_28 = arith.constant 0 : index
    %c0_29 = arith.constant 0 : index
    %53 = vector.load %arg6[%c4_27, %c0_28, %c0_29] : memref<12x1x8xf32, #tpu.memory_space<vmem>>, vector<1x1x8xf32>
    %54 = vector.shape_cast %53 : vector<1x1x8xf32> to vector<1x8xf32>
    %55 = vector.broadcast %54 : vector<1x8xf32> to vector<18x8xf32>
    %56 = arith.addf %52, %55 : vector<18x8xf32>
    %c8 = arith.constant 8 : index
    %c0_30 = arith.constant 0 : index
    %c0_31 = arith.constant 0 : index
    %57 = vector.load %arg5[%c8, %c0_30, %c0_31] : memref<12x32x8xbf16, #tpu.memory_space<vmem>>, vector<1x32x8xbf16>
    %58 = vector.shape_cast %57 : vector<1x32x8xbf16> to vector<32x8xbf16>
    %cst_32 = arith.constant dense<0.000000e+00> : vector<18x8xf32>
    %59 = tpu.matmul %26, %58, %cst_32 {dimension_numbers = #tpu.dot_dimension_numbers<[1], [0], [0], [1], [0, 0, 1, 1], [], []>} : vector<18x32xbf16>, vector<32x8xbf16>, vector<18x8xf32> -> vector<18x8xf32>
    %c8_33 = arith.constant 8 : index
    %c0_34 = arith.constant 0 : index
    %c0_35 = arith.constant 0 : index
    %60 = vector.load %arg6[%c8_33, %c0_34, %c0_35] : memref<12x1x8xf32, #tpu.memory_space<vmem>>, vector<1x1x8xf32>
    %61 = vector.shape_cast %60 : vector<1x1x8xf32> to vector<1x8xf32>
    %62 = vector.broadcast %61 : vector<1x8xf32> to vector<18x8xf32>
    %63 = arith.addf %59, %62 : vector<18x8xf32>
    %cst_36 = arith.constant dense<0.000000e+00> : vector<18x18xf32>
    %64 = tpu.matmul %49, %56, %cst_36 {dimension_numbers = #tpu.dot_dimension_numbers<[1], [1], [0], [0], [0, 0, 1, 0], [], []>} : vector<18x8xf32>, vector<18x8xf32>, vector<18x18xf32> -> vector<18x18xf32>
    %cst_37 = arith.constant 0.353553385 : f32
    %65 = vector.broadcast %cst_37 : f32 to vector<18x18xf32>
    %66 = arith.mulf %64, %65 : vector<18x18xf32>
    %67 = arith.addf %66, %41 : vector<18x18xf32>
    %cst_38 = arith.constant dense<0xFF800000> : vector<18xf32>
    %68 = vector.multi_reduction <maximumf>, %67, %cst_38 [1] : vector<18x18xf32> to vector<18xf32>
    %69 = vector.shape_cast %68 : vector<18xf32> to vector<18x1xf32>
    %70 = vector.broadcast %69 : vector<18x1xf32> to vector<18x18xf32>
    %71 = arith.subf %67, %70 : vector<18x18xf32>
    %72 = math.exp %71 : vector<18x18xf32>
    %cst_39 = arith.constant dense<0.000000e+00> : vector<18xf32>
    %73 = vector.multi_reduction <add>, %72, %cst_39 [1] : vector<18x18xf32> to vector<18xf32>
    %74 = vector.shape_cast %73 : vector<18xf32> to vector<18x1xf32>
    %75 = tpu.reciprocal %74 {approx = true} : vector<18x1xf32> -> vector<18x1xf32>
    %76 = vector.broadcast %75 : vector<18x1xf32> to vector<18x18xf32>
    %77 = arith.mulf %72, %76 : vector<18x18xf32>
    %cst_40 = arith.constant dense<0.000000e+00> : vector<18x8xf32>
    %78 = tpu.matmul %77, %63, %cst_40 {dimension_numbers = #tpu.dot_dimension_numbers<[1], [0], [0], [1], [0, 0, 1, 1], [], []>} : vector<18x18xf32>, vector<18x8xf32>, vector<18x8xf32> -> vector<18x8xf32>
    %79 = arith.truncf %78 : vector<18x8xf32> to vector<18x8xbf16>
    %c0_41 = arith.constant 0 : index
    %c0_42 = arith.constant 0 : index
    %c0_43 = arith.constant 0 : index
    %80 = vector.load %arg7[%c0_41, %c0_42, %c0_43] : memref<4x8x32xbf16, #tpu.memory_space<vmem>>, vector<1x8x32xbf16>
    %81 = vector.shape_cast %80 : vector<1x8x32xbf16> to vector<8x32xbf16>
    %cst_44 = arith.constant dense<0.000000e+00> : vector<18x32xf32>
    %82 = tpu.matmul %79, %81, %cst_44 {dimension_numbers = #tpu.dot_dimension_numbers<[1], [0], [0], [1], [0, 0, 1, 1], [], []>} : vector<18x8xbf16>, vector<8x32xbf16>, vector<18x32xf32> -> vector<18x32xf32>
    %83 = arith.addf %42, %82 : vector<18x32xf32>
    %c1 = arith.constant 1 : index
    %c0_45 = arith.constant 0 : index
    %c0_46 = arith.constant 0 : index
    %84 = vector.load %arg5[%c1, %c0_45, %c0_46] : memref<12x32x8xbf16, #tpu.memory_space<vmem>>, vector<1x32x8xbf16>
    %85 = vector.shape_cast %84 : vector<1x32x8xbf16> to vector<32x8xbf16>
    %cst_47 = arith.constant dense<0.000000e+00> : vector<18x8xf32>
    %86 = tpu.matmul %26, %85, %cst_47 {dimension_numbers = #tpu.dot_dimension_numbers<[1], [0], [0], [1], [0, 0, 1, 1], [], []>} : vector<18x32xbf16>, vector<32x8xbf16>, vector<18x8xf32> -> vector<18x8xf32>
    %c1_48 = arith.constant 1 : index
    %c0_49 = arith.constant 0 : index
    %c0_50 = arith.constant 0 : index
    %87 = vector.load %arg6[%c1_48, %c0_49, %c0_50] : memref<12x1x8xf32, #tpu.memory_space<vmem>>, vector<1x1x8xf32>
    %88 = vector.shape_cast %87 : vector<1x1x8xf32> to vector<1x8xf32>
    %89 = vector.broadcast %88 : vector<1x8xf32> to vector<18x8xf32>
    %90 = arith.addf %86, %89 : vector<18x8xf32>
    %c5 = arith.constant 5 : index
    %c0_51 = arith.constant 0 : index
    %c0_52 = arith.constant 0 : index
    %91 = vector.load %arg5[%c5, %c0_51, %c0_52] : memref<12x32x8xbf16, #tpu.memory_space<vmem>>, vector<1x32x8xbf16>
    %92 = vector.shape_cast %91 : vector<1x32x8xbf16> to vector<32x8xbf16>
    %cst_53 = arith.constant dense<0.000000e+00> : vector<18x8xf32>
    %93 = tpu.matmul %26, %92, %cst_53 {dimension_numbers = #tpu.dot_dimension_numbers<[1], [0], [0], [1], [0, 0, 1, 1], [], []>} : vector<18x32xbf16>, vector<32x8xbf16>, vector<18x8xf32> -> vector<18x8xf32>
    %c5_54 = arith.constant 5 : index
    %c0_55 = arith.constant 0 : index
    %c0_56 = arith.constant 0 : index
    %94 = vector.load %arg6[%c5_54, %c0_55, %c0_56] : memref<12x1x8xf32, #tpu.memory_space<vmem>>, vector<1x1x8xf32>
    %95 = vector.shape_cast %94 : vector<1x1x8xf32> to vector<1x8xf32>
    %96 = vector.broadcast %95 : vector<1x8xf32> to vector<18x8xf32>
    %97 = arith.addf %93, %96 : vector<18x8xf32>
    %c9 = arith.constant 9 : index
    %c0_57 = arith.constant 0 : index
    %c0_58 = arith.constant 0 : index
    %98 = vector.load %arg5[%c9, %c0_57, %c0_58] : memref<12x32x8xbf16, #tpu.memory_space<vmem>>, vector<1x32x8xbf16>
    %99 = vector.shape_cast %98 : vector<1x32x8xbf16> to vector<32x8xbf16>
    %cst_59 = arith.constant dense<0.000000e+00> : vector<18x8xf32>
    %100 = tpu.matmul %26, %99, %cst_59 {dimension_numbers = #tpu.dot_dimension_numbers<[1], [0], [0], [1], [0, 0, 1, 1], [], []>} : vector<18x32xbf16>, vector<32x8xbf16>, vector<18x8xf32> -> vector<18x8xf32>
    %c9_60 = arith.constant 9 : index
    %c0_61 = arith.constant 0 : index
    %c0_62 = arith.constant 0 : index
    %101 = vector.load %arg6[%c9_60, %c0_61, %c0_62] : memref<12x1x8xf32, #tpu.memory_space<vmem>>, vector<1x1x8xf32>
    %102 = vector.shape_cast %101 : vector<1x1x8xf32> to vector<1x8xf32>
    %103 = vector.broadcast %102 : vector<1x8xf32> to vector<18x8xf32>
    %104 = arith.addf %100, %103 : vector<18x8xf32>
    %cst_63 = arith.constant dense<0.000000e+00> : vector<18x18xf32>
    %105 = tpu.matmul %90, %97, %cst_63 {dimension_numbers = #tpu.dot_dimension_numbers<[1], [1], [0], [0], [0, 0, 1, 0], [], []>} : vector<18x8xf32>, vector<18x8xf32>, vector<18x18xf32> -> vector<18x18xf32>
    %cst_64 = arith.constant 0.353553385 : f32
    %106 = vector.broadcast %cst_64 : f32 to vector<18x18xf32>
    %107 = arith.mulf %105, %106 : vector<18x18xf32>
    %108 = arith.addf %107, %41 : vector<18x18xf32>
    %cst_65 = arith.constant dense<0xFF800000> : vector<18xf32>
    %109 = vector.multi_reduction <maximumf>, %108, %cst_65 [1] : vector<18x18xf32> to vector<18xf32>
    %110 = vector.shape_cast %109 : vector<18xf32> to vector<18x1xf32>
    %111 = vector.broadcast %110 : vector<18x1xf32> to vector<18x18xf32>
    %112 = arith.subf %108, %111 : vector<18x18xf32>
    %113 = math.exp %112 : vector<18x18xf32>
    %cst_66 = arith.constant dense<0.000000e+00> : vector<18xf32>
    %114 = vector.multi_reduction <add>, %113, %cst_66 [1] : vector<18x18xf32> to vector<18xf32>
    %115 = vector.shape_cast %114 : vector<18xf32> to vector<18x1xf32>
    %116 = tpu.reciprocal %115 {approx = true} : vector<18x1xf32> -> vector<18x1xf32>
    %117 = vector.broadcast %116 : vector<18x1xf32> to vector<18x18xf32>
    %118 = arith.mulf %113, %117 : vector<18x18xf32>
    %cst_67 = arith.constant dense<0.000000e+00> : vector<18x8xf32>
    %119 = tpu.matmul %118, %104, %cst_67 {dimension_numbers = #tpu.dot_dimension_numbers<[1], [0], [0], [1], [0, 0, 1, 1], [], []>} : vector<18x18xf32>, vector<18x8xf32>, vector<18x8xf32> -> vector<18x8xf32>
    %120 = arith.truncf %119 : vector<18x8xf32> to vector<18x8xbf16>
    %c1_68 = arith.constant 1 : index
    %c0_69 = arith.constant 0 : index
    %c0_70 = arith.constant 0 : index
    %121 = vector.load %arg7[%c1_68, %c0_69, %c0_70] : memref<4x8x32xbf16, #tpu.memory_space<vmem>>, vector<1x8x32xbf16>
    %122 = vector.shape_cast %121 : vector<1x8x32xbf16> to vector<8x32xbf16>
    %cst_71 = arith.constant dense<0.000000e+00> : vector<18x32xf32>
    %123 = tpu.matmul %120, %122, %cst_71 {dimension_numbers = #tpu.dot_dimension_numbers<[1], [0], [0], [1], [0, 0, 1, 1], [], []>} : vector<18x8xbf16>, vector<8x32xbf16>, vector<18x32xf32> -> vector<18x32xf32>
    %124 = arith.addf %83, %123 : vector<18x32xf32>
    %c2 = arith.constant 2 : index
    %c0_72 = arith.constant 0 : index
    %c0_73 = arith.constant 0 : index
    %125 = vector.load %arg5[%c2, %c0_72, %c0_73] : memref<12x32x8xbf16, #tpu.memory_space<vmem>>, vector<1x32x8xbf16>
    %126 = vector.shape_cast %125 : vector<1x32x8xbf16> to vector<32x8xbf16>
    %cst_74 = arith.constant dense<0.000000e+00> : vector<18x8xf32>
    %127 = tpu.matmul %26, %126, %cst_74 {dimension_numbers = #tpu.dot_dimension_numbers<[1], [0], [0], [1], [0, 0, 1, 1], [], []>} : vector<18x32xbf16>, vector<32x8xbf16>, vector<18x8xf32> -> vector<18x8xf32>
    %c2_75 = arith.constant 2 : index
    %c0_76 = arith.constant 0 : index
    %c0_77 = arith.constant 0 : index
    %128 = vector.load %arg6[%c2_75, %c0_76, %c0_77] : memref<12x1x8xf32, #tpu.memory_space<vmem>>, vector<1x1x8xf32>
    %129 = vector.shape_cast %128 : vector<1x1x8xf32> to vector<1x8xf32>
    %130 = vector.broadcast %129 : vector<1x8xf32> to vector<18x8xf32>
    %131 = arith.addf %127, %130 : vector<18x8xf32>
    %c6 = arith.constant 6 : index
    %c0_78 = arith.constant 0 : index
    %c0_79 = arith.constant 0 : index
    %132 = vector.load %arg5[%c6, %c0_78, %c0_79] : memref<12x32x8xbf16, #tpu.memory_space<vmem>>, vector<1x32x8xbf16>
    %133 = vector.shape_cast %132 : vector<1x32x8xbf16> to vector<32x8xbf16>
    %cst_80 = arith.constant dense<0.000000e+00> : vector<18x8xf32>
    %134 = tpu.matmul %26, %133, %cst_80 {dimension_numbers = #tpu.dot_dimension_numbers<[1], [0], [0], [1], [0, 0, 1, 1], [], []>} : vector<18x32xbf16>, vector<32x8xbf16>, vector<18x8xf32> -> vector<18x8xf32>
    %c6_81 = arith.constant 6 : index
    %c0_82 = arith.constant 0 : index
    %c0_83 = arith.constant 0 : index
    %135 = vector.load %arg6[%c6_81, %c0_82, %c0_83] : memref<12x1x8xf32, #tpu.memory_space<vmem>>, vector<1x1x8xf32>
    %136 = vector.shape_cast %135 : vector<1x1x8xf32> to vector<1x8xf32>
    %137 = vector.broadcast %136 : vector<1x8xf32> to vector<18x8xf32>
    %138 = arith.addf %134, %137 : vector<18x8xf32>
    %c10 = arith.constant 10 : index
    %c0_84 = arith.constant 0 : index
    %c0_85 = arith.constant 0 : index
    %139 = vector.load %arg5[%c10, %c0_84, %c0_85] : memref<12x32x8xbf16, #tpu.memory_space<vmem>>, vector<1x32x8xbf16>
    %140 = vector.shape_cast %139 : vector<1x32x8xbf16> to vector<32x8xbf16>
    %cst_86 = arith.constant dense<0.000000e+00> : vector<18x8xf32>
    %141 = tpu.matmul %26, %140, %cst_86 {dimension_numbers = #tpu.dot_dimension_numbers<[1], [0], [0], [1], [0, 0, 1, 1], [], []>} : vector<18x32xbf16>, vector<32x8xbf16>, vector<18x8xf32> -> vector<18x8xf32>
    %c10_87 = arith.constant 10 : index
    %c0_88 = arith.constant 0 : index
    %c0_89 = arith.constant 0 : index
    %142 = vector.load %arg6[%c10_87, %c0_88, %c0_89] : memref<12x1x8xf32, #tpu.memory_space<vmem>>, vector<1x1x8xf32>
    %143 = vector.shape_cast %142 : vector<1x1x8xf32> to vector<1x8xf32>
    %144 = vector.broadcast %143 : vector<1x8xf32> to vector<18x8xf32>
    %145 = arith.addf %141, %144 : vector<18x8xf32>
    %cst_90 = arith.constant dense<0.000000e+00> : vector<18x18xf32>
    %146 = tpu.matmul %131, %138, %cst_90 {dimension_numbers = #tpu.dot_dimension_numbers<[1], [1], [0], [0], [0, 0, 1, 0], [], []>} : vector<18x8xf32>, vector<18x8xf32>, vector<18x18xf32> -> vector<18x18xf32>
    %cst_91 = arith.constant 0.353553385 : f32
    %147 = vector.broadcast %cst_91 : f32 to vector<18x18xf32>
    %148 = arith.mulf %146, %147 : vector<18x18xf32>
    %149 = arith.addf %148, %41 : vector<18x18xf32>
    %cst_92 = arith.constant dense<0xFF800000> : vector<18xf32>
    %150 = vector.multi_reduction <maximumf>, %149, %cst_92 [1] : vector<18x18xf32> to vector<18xf32>
    %151 = vector.shape_cast %150 : vector<18xf32> to vector<18x1xf32>
    %152 = vector.broadcast %151 : vector<18x1xf32> to vector<18x18xf32>
    %153 = arith.subf %149, %152 : vector<18x18xf32>
    %154 = math.exp %153 : vector<18x18xf32>
    %cst_93 = arith.constant dense<0.000000e+00> : vector<18xf32>
    %155 = vector.multi_reduction <add>, %154, %cst_93 [1] : vector<18x18xf32> to vector<18xf32>
    %156 = vector.shape_cast %155 : vector<18xf32> to vector<18x1xf32>
    %157 = tpu.reciprocal %156 {approx = true} : vector<18x1xf32> -> vector<18x1xf32>
    %158 = vector.broadcast %157 : vector<18x1xf32> to vector<18x18xf32>
    %159 = arith.mulf %154, %158 : vector<18x18xf32>
    %cst_94 = arith.constant dense<0.000000e+00> : vector<18x8xf32>
    %160 = tpu.matmul %159, %145, %cst_94 {dimension_numbers = #tpu.dot_dimension_numbers<[1], [0], [0], [1], [0, 0, 1, 1], [], []>} : vector<18x18xf32>, vector<18x8xf32>, vector<18x8xf32> -> vector<18x8xf32>
    %161 = arith.truncf %160 : vector<18x8xf32> to vector<18x8xbf16>
    %c2_95 = arith.constant 2 : index
    %c0_96 = arith.constant 0 : index
    %c0_97 = arith.constant 0 : index
    %162 = vector.load %arg7[%c2_95, %c0_96, %c0_97] : memref<4x8x32xbf16, #tpu.memory_space<vmem>>, vector<1x8x32xbf16>
    %163 = vector.shape_cast %162 : vector<1x8x32xbf16> to vector<8x32xbf16>
    %cst_98 = arith.constant dense<0.000000e+00> : vector<18x32xf32>
    %164 = tpu.matmul %161, %163, %cst_98 {dimension_numbers = #tpu.dot_dimension_numbers<[1], [0], [0], [1], [0, 0, 1, 1], [], []>} : vector<18x8xbf16>, vector<8x32xbf16>, vector<18x32xf32> -> vector<18x32xf32>
    %165 = arith.addf %124, %164 : vector<18x32xf32>
    %c3 = arith.constant 3 : index
    %c0_99 = arith.constant 0 : index
    %c0_100 = arith.constant 0 : index
    %166 = vector.load %arg5[%c3, %c0_99, %c0_100] : memref<12x32x8xbf16, #tpu.memory_space<vmem>>, vector<1x32x8xbf16>
    %167 = vector.shape_cast %166 : vector<1x32x8xbf16> to vector<32x8xbf16>
    %cst_101 = arith.constant dense<0.000000e+00> : vector<18x8xf32>
    %168 = tpu.matmul %26, %167, %cst_101 {dimension_numbers = #tpu.dot_dimension_numbers<[1], [0], [0], [1], [0, 0, 1, 1], [], []>} : vector<18x32xbf16>, vector<32x8xbf16>, vector<18x8xf32> -> vector<18x8xf32>
    %c3_102 = arith.constant 3 : index
    %c0_103 = arith.constant 0 : index
    %c0_104 = arith.constant 0 : index
    %169 = vector.load %arg6[%c3_102, %c0_103, %c0_104] : memref<12x1x8xf32, #tpu.memory_space<vmem>>, vector<1x1x8xf32>
    %170 = vector.shape_cast %169 : vector<1x1x8xf32> to vector<1x8xf32>
    %171 = vector.broadcast %170 : vector<1x8xf32> to vector<18x8xf32>
    %172 = arith.addf %168, %171 : vector<18x8xf32>
    %c7 = arith.constant 7 : index
    %c0_105 = arith.constant 0 : index
    %c0_106 = arith.constant 0 : index
    %173 = vector.load %arg5[%c7, %c0_105, %c0_106] : memref<12x32x8xbf16, #tpu.memory_space<vmem>>, vector<1x32x8xbf16>
    %174 = vector.shape_cast %173 : vector<1x32x8xbf16> to vector<32x8xbf16>
    %cst_107 = arith.constant dense<0.000000e+00> : vector<18x8xf32>
    %175 = tpu.matmul %26, %174, %cst_107 {dimension_numbers = #tpu.dot_dimension_numbers<[1], [0], [0], [1], [0, 0, 1, 1], [], []>} : vector<18x32xbf16>, vector<32x8xbf16>, vector<18x8xf32> -> vector<18x8xf32>
    %c7_108 = arith.constant 7 : index
    %c0_109 = arith.constant 0 : index
    %c0_110 = arith.constant 0 : index
    %176 = vector.load %arg6[%c7_108, %c0_109, %c0_110] : memref<12x1x8xf32, #tpu.memory_space<vmem>>, vector<1x1x8xf32>
    %177 = vector.shape_cast %176 : vector<1x1x8xf32> to vector<1x8xf32>
    %178 = vector.broadcast %177 : vector<1x8xf32> to vector<18x8xf32>
    %179 = arith.addf %175, %178 : vector<18x8xf32>
    %c11 = arith.constant 11 : index
    %c0_111 = arith.constant 0 : index
    %c0_112 = arith.constant 0 : index
    %180 = vector.load %arg5[%c11, %c0_111, %c0_112] : memref<12x32x8xbf16, #tpu.memory_space<vmem>>, vector<1x32x8xbf16>
    %181 = vector.shape_cast %180 : vector<1x32x8xbf16> to vector<32x8xbf16>
    %cst_113 = arith.constant dense<0.000000e+00> : vector<18x8xf32>
    %182 = tpu.matmul %26, %181, %cst_113 {dimension_numbers = #tpu.dot_dimension_numbers<[1], [0], [0], [1], [0, 0, 1, 1], [], []>} : vector<18x32xbf16>, vector<32x8xbf16>, vector<18x8xf32> -> vector<18x8xf32>
    %c11_114 = arith.constant 11 : index
    %c0_115 = arith.constant 0 : index
    %c0_116 = arith.constant 0 : index
    %183 = vector.load %arg6[%c11_114, %c0_115, %c0_116] : memref<12x1x8xf32, #tpu.memory_space<vmem>>, vector<1x1x8xf32>
    %184 = vector.shape_cast %183 : vector<1x1x8xf32> to vector<1x8xf32>
    %185 = vector.broadcast %184 : vector<1x8xf32> to vector<18x8xf32>
    %186 = arith.addf %182, %185 : vector<18x8xf32>
    %cst_117 = arith.constant dense<0.000000e+00> : vector<18x18xf32>
    %187 = tpu.matmul %172, %179, %cst_117 {dimension_numbers = #tpu.dot_dimension_numbers<[1], [1], [0], [0], [0, 0, 1, 0], [], []>} : vector<18x8xf32>, vector<18x8xf32>, vector<18x18xf32> -> vector<18x18xf32>
    %cst_118 = arith.constant 0.353553385 : f32
    %188 = vector.broadcast %cst_118 : f32 to vector<18x18xf32>
    %189 = arith.mulf %187, %188 : vector<18x18xf32>
    %190 = arith.addf %189, %41 : vector<18x18xf32>
    %cst_119 = arith.constant dense<0xFF800000> : vector<18xf32>
    %191 = vector.multi_reduction <maximumf>, %190, %cst_119 [1] : vector<18x18xf32> to vector<18xf32>
    %192 = vector.shape_cast %191 : vector<18xf32> to vector<18x1xf32>
    %193 = vector.broadcast %192 : vector<18x1xf32> to vector<18x18xf32>
    %194 = arith.subf %190, %193 : vector<18x18xf32>
    %195 = math.exp %194 : vector<18x18xf32>
    %cst_120 = arith.constant dense<0.000000e+00> : vector<18xf32>
    %196 = vector.multi_reduction <add>, %195, %cst_120 [1] : vector<18x18xf32> to vector<18xf32>
    %197 = vector.shape_cast %196 : vector<18xf32> to vector<18x1xf32>
    %198 = tpu.reciprocal %197 {approx = true} : vector<18x1xf32> -> vector<18x1xf32>
    %199 = vector.broadcast %198 : vector<18x1xf32> to vector<18x18xf32>
    %200 = arith.mulf %195, %199 : vector<18x18xf32>
    %cst_121 = arith.constant dense<0.000000e+00> : vector<18x8xf32>
    %201 = tpu.matmul %200, %186, %cst_121 {dimension_numbers = #tpu.dot_dimension_numbers<[1], [0], [0], [1], [0, 0, 1, 1], [], []>} : vector<18x18xf32>, vector<18x8xf32>, vector<18x8xf32> -> vector<18x8xf32>
    %202 = arith.truncf %201 : vector<18x8xf32> to vector<18x8xbf16>
    %c3_122 = arith.constant 3 : index
    %c0_123 = arith.constant 0 : index
    %c0_124 = arith.constant 0 : index
    %203 = vector.load %arg7[%c3_122, %c0_123, %c0_124] : memref<4x8x32xbf16, #tpu.memory_space<vmem>>, vector<1x8x32xbf16>
    %204 = vector.shape_cast %203 : vector<1x8x32xbf16> to vector<8x32xbf16>
    %cst_125 = arith.constant dense<0.000000e+00> : vector<18x32xf32>
    %205 = tpu.matmul %202, %204, %cst_125 {dimension_numbers = #tpu.dot_dimension_numbers<[1], [0], [0], [1], [0, 0, 1, 1], [], []>} : vector<18x8xbf16>, vector<8x32xbf16>, vector<18x32xf32> -> vector<18x32xf32>
    %206 = arith.addf %165, %205 : vector<18x32xf32>
    %207 = arith.addf %1, %206 : vector<18x32xf32>
    %c0_126 = arith.constant 0 : index
    %c0_127 = arith.constant 0 : index
    %208 = vector.load %arg8[%c0_126, %c0_127] : memref<1x32xf32, #tpu.memory_space<vmem>>, vector<1x32xf32>
    %209 = vector.broadcast %208 : vector<1x32xf32> to vector<18x32xf32>
    %210 = arith.addf %207, %209 : vector<18x32xf32>
    %cst_128 = arith.constant dense<0.000000e+00> : vector<18xf32>
    %211 = vector.multi_reduction <add>, %210, %cst_128 [1] : vector<18x32xf32> to vector<18xf32>
    %212 = vector.shape_cast %211 : vector<18xf32> to vector<18x1xf32>
    %cst_129 = arith.constant 3.200000e+01 : f32
    %213 = vector.broadcast %cst_129 : f32 to vector<18x1xf32>
    %214 = arith.divf %212, %213 : vector<18x1xf32>
    %215 = vector.broadcast %214 : vector<18x1xf32> to vector<18x32xf32>
    %216 = arith.subf %210, %215 : vector<18x32xf32>
    %217 = arith.mulf %216, %216 : vector<18x32xf32>
    %cst_130 = arith.constant dense<0.000000e+00> : vector<18xf32>
    %218 = vector.multi_reduction <add>, %217, %cst_130 [1] : vector<18x32xf32> to vector<18xf32>
    %219 = vector.shape_cast %218 : vector<18xf32> to vector<18x1xf32>
    %cst_131 = arith.constant 3.200000e+01 : f32
    %220 = vector.broadcast %cst_131 : f32 to vector<18x1xf32>
    %221 = arith.divf %219, %220 : vector<18x1xf32>
    %222 = vector.broadcast %214 : vector<18x1xf32> to vector<18x32xf32>
    %223 = arith.subf %210, %222 : vector<18x32xf32>
    %cst_132 = arith.constant 9.99999974E-6 : f32
    %224 = vector.broadcast %cst_132 : f32 to vector<18x1xf32>
    %225 = arith.addf %221, %224 : vector<18x1xf32>
    %226 = math.rsqrt %225 : vector<18x1xf32>
    %227 = vector.broadcast %226 : vector<18x1xf32> to vector<18x32xf32>
    %228 = arith.mulf %223, %227 : vector<18x32xf32>
    %c0_133 = arith.constant 0 : index
    %c0_134 = arith.constant 0 : index
    %229 = vector.load %arg9[%c0_133, %c0_134] : memref<1x32xf32, #tpu.memory_space<vmem>>, vector<1x32xf32>
    %230 = vector.broadcast %229 : vector<1x32xf32> to vector<18x32xf32>
    %231 = arith.mulf %228, %230 : vector<18x32xf32>
    %c0_135 = arith.constant 0 : index
    %c0_136 = arith.constant 0 : index
    %232 = vector.load %arg10[%c0_135, %c0_136] : memref<1x32xf32, #tpu.memory_space<vmem>>, vector<1x32xf32>
    %233 = vector.broadcast %232 : vector<1x32xf32> to vector<18x32xf32>
    %234 = arith.addf %231, %233 : vector<18x32xf32>
    %235 = arith.truncf %234 : vector<18x32xf32> to vector<18x32xbf16>
    %c0_137 = arith.constant 0 : index
    %c0_138 = arith.constant 0 : index
    %236 = vector.load %arg11[%c0_137, %c0_138] : memref<32x128xbf16, #tpu.memory_space<vmem>>, vector<32x128xbf16>
    %cst_139 = arith.constant dense<0.000000e+00> : vector<18x128xf32>
    %237 = tpu.matmul %235, %236, %cst_139 {dimension_numbers = #tpu.dot_dimension_numbers<[1], [0], [0], [1], [0, 0, 1, 1], [], []>} : vector<18x32xbf16>, vector<32x128xbf16>, vector<18x128xf32> -> vector<18x128xf32>
    %c0_140 = arith.constant 0 : index
    %c0_141 = arith.constant 0 : index
    %238 = vector.load %arg12[%c0_140, %c0_141] : memref<1x128xf32, #tpu.memory_space<vmem>>, vector<1x128xf32>
    %239 = vector.broadcast %238 : vector<1x128xf32> to vector<18x128xf32>
    %240 = arith.addf %237, %239 : vector<18x128xf32>
    %cst_142 = arith.constant 5.000000e-01 : f32
    %241 = vector.broadcast %cst_142 : f32 to vector<18x128xf32>
    %242 = arith.mulf %241, %240 : vector<18x128xf32>
    %cst_143 = arith.constant 4.471500e-02 : f32
    %243 = vector.broadcast %cst_143 : f32 to vector<18x128xf32>
    %244 = arith.mulf %243, %240 : vector<18x128xf32>
    %245 = arith.mulf %244, %240 : vector<18x128xf32>
    %246 = arith.mulf %245, %240 : vector<18x128xf32>
    %247 = arith.addf %240, %246 : vector<18x128xf32>
    %cst_144 = arith.constant 0.797884583 : f32
    %248 = vector.broadcast %cst_144 : f32 to vector<18x128xf32>
    %249 = arith.mulf %248, %247 : vector<18x128xf32>
    %250 = math.tanh %249 : vector<18x128xf32>
    %cst_145 = arith.constant 1.000000e+00 : f32
    %251 = vector.broadcast %cst_145 : f32 to vector<18x128xf32>
    %252 = arith.addf %251, %250 : vector<18x128xf32>
    %253 = arith.mulf %242, %252 : vector<18x128xf32>
    %254 = arith.truncf %253 : vector<18x128xf32> to vector<18x128xbf16>
    %c0_146 = arith.constant 0 : index
    %c0_147 = arith.constant 0 : index
    %255 = vector.load %arg13[%c0_146, %c0_147] : memref<128x32xbf16, #tpu.memory_space<vmem>>, vector<128x32xbf16>
    %cst_148 = arith.constant dense<0.000000e+00> : vector<18x32xf32>
    %256 = tpu.matmul %254, %255, %cst_148 {dimension_numbers = #tpu.dot_dimension_numbers<[1], [0], [0], [1], [0, 0, 1, 1], [], []>} : vector<18x128xbf16>, vector<128x32xbf16>, vector<18x32xf32> -> vector<18x32xf32>
    %c0_149 = arith.constant 0 : index
    %c0_150 = arith.constant 0 : index
    %257 = vector.load %arg14[%c0_149, %c0_150] : memref<1x32xf32, #tpu.memory_space<vmem>>, vector<1x32xf32>
    %258 = vector.broadcast %257 : vector<1x32xf32> to vector<18x32xf32>
    %259 = arith.addf %256, %258 : vector<18x32xf32>
    %260 = arith.addf %210, %259 : vector<18x32xf32>
    %c0_151 = arith.constant 0 : index
    %c0_152 = arith.constant 0 : index
    %c0_153 = arith.constant 0 : index
    %261 = vector.load %arg15[%c0_151, %c0_152, %c0_153] : memref<1x18x32xf32, #tpu.memory_space<vmem>>, vector<1x18x32xf32>
    %262 = vector.shape_cast %261 : vector<1x18x32xf32> to vector<18x32xf32>
    %263 = vector.shape_cast %260 : vector<18x32xf32> to vector<1x18x32xf32>
    tpu.vector_store %arg15[%c0_151, %c0_152, %c0_153], %263 {strides = array<i32>} : memref<1x18x32xf32, #tpu.memory_space<vmem>>, vector<1x18x32xf32>,
    return
  }
  func.func @transform_0(%arg0: i32) -> (i32, i32, i32) {
    %c0_i32 = arith.constant 0 : i32
    %c0_i32_0 = arith.constant 0 : i32
    %c0_i32_1 = arith.constant 0 : i32
    return %arg0, %c0_i32, %c0_i32_0 : i32, i32, i32
  }
  func.func @transform_1(%arg0: i32) -> (i32, i32, i32) {
    %c0_i32 = arith.constant 0 : i32
    %c0_i32_0 = arith.constant 0 : i32
    %c0_i32_1 = arith.constant 0 : i32
    return %arg0, %c0_i32, %c0_i32_0 : i32, i32, i32
  }
  func.func @transform_2(%arg0: i32) -> (i32, i32) {
    %c0_i32 = arith.constant 0 : i32
    %c0_i32_0 = arith.constant 0 : i32
    %c0_i32_1 = arith.constant 0 : i32
    return %c0_i32, %c0_i32_0 : i32, i32
  }
  func.func @transform_3(%arg0: i32) -> (i32, i32) {
    %c0_i32 = arith.constant 0 : i32
    %c0_i32_0 = arith.constant 0 : i32
    %c0_i32_1 = arith.constant 0 : i32
    return %c0_i32, %c0_i32_0 : i32, i32
  }
  func.func @transform_4(%arg0: i32) -> (i32, i32, i32) {
    %c0_i32 = arith.constant 0 : i32
    %c0_i32_0 = arith.constant 0 : i32
    %c0_i32_1 = arith.constant 0 : i32
    %c0_i32_2 = arith.constant 0 : i32
    return %c0_i32, %c0_i32_0, %c0_i32_1 : i32, i32, i32
  }
  func.func @transform_5(%arg0: i32) -> (i32, i32, i32) {
    %c0_i32 = arith.constant 0 : i32
    %c0_i32_0 = arith.constant 0 : i32
    %c0_i32_1 = arith.constant 0 : i32
    %c0_i32_2 = arith.constant 0 : i32
    return %c0_i32, %c0_i32_0, %c0_i32_1 : i32, i32, i32
  }
  func.func @transform_6(%arg0: i32) -> (i32, i32, i32) {
    %c0_i32 = arith.constant 0 : i32
    %c0_i32_0 = arith.constant 0 : i32
    %c0_i32_1 = arith.constant 0 : i32
    %c0_i32_2 = arith.constant 0 : i32
    return %c0_i32, %c0_i32_0, %c0_i32_1 : i32, i32, i32
  }
  func.func @transform_7(%arg0: i32) -> (i32, i32) {
    %c0_i32 = arith.constant 0 : i32
    %c0_i32_0 = arith.constant 0 : i32
    %c0_i32_1 = arith.constant 0 : i32
    return %c0_i32, %c0_i32_0 : i32, i32
  }
  func.func @transform_8(%arg0: i32) -> (i32, i32) {
    %c0_i32 = arith.constant 0 : i32
    %c0_i32_0 = arith.constant 0 : i32
    %c0_i32_1 = arith.constant 0 : i32
    return %c0_i32, %c0_i32_0 : i32, i32
  }
  func.func @transform_9(%arg0: i32) -> (i32, i32) {
    %c0_i32 = arith.constant 0 : i32
    %c0_i32_0 = arith.constant 0 : i32
    %c0_i32_1 = arith.constant 0 : i32
    return %c0_i32, %c0_i32_0 : i32, i32
  }
  func.func @transform_10(%arg0: i32) -> (i32, i32) {
    %c0_i32 = arith.constant 0 : i32
    %c0_i32_0 = arith.constant 0 : i32
    %c0_i32_1 = arith.constant 0 : i32
    return %c0_i32, %c0_i32_0 : i32, i32
  }
  func.func @transform_11(%arg0: i32) -> (i32, i32) {
    %c0_i32 = arith.constant 0 : i32
    %c0_i32_0 = arith.constant 0 : i32
    %c0_i32_1 = arith.constant 0 : i32
    return %c0_i32, %c0_i32_0 : i32, i32
  }
  func.func @transform_12(%arg0: i32) -> (i32, i32) {
    %c0_i32 = arith.constant 0 : i32
    %c0_i32_0 = arith.constant 0 : i32
    %c0_i32_1 = arith.constant 0 : i32
    return %c0_i32, %c0_i32_0 : i32, i32
  }
  func.func @transform_13(%arg0: i32) -> (i32, i32) {
    %c0_i32 = arith.constant 0 : i32
    %c0_i32_0 = arith.constant 0 : i32
    %c0_i32_1 = arith.constant 0 : i32
    return %c0_i32, %c0_i32_0 : i32, i32
  }
  func.func @transform_14(%arg0: i32) -> (i32, i32, i32) {
    %c0_i32 = arith.constant 0 : i32
    %c0_i32_0 = arith.constant 0 : i32
    %c0_i32_1 = arith.constant 0 : i32
    return %arg0, %c0_i32, %c0_i32_0 : i32, i32, i32
  }
}

</mosaic_0001>

<llo_original>
// kernel: closed_call.89
$region0: #{closed_call.89}
  #allocation0 [shape = 'u32[]', space=smem, size = 0x4, offset = 0x4, fixed_abs, tag = 'smem constant byte address 0x4 - core index']
  #allocation1 [shape = 'u32[144,128]{1,0:T(1,128)}', space=vmem, size = 0x12000, scoped, tag = 'internal scratch']
  %s0 = inlined_call_operand.vmem [shape: f32[2,32], index: 0, kind: input, shape index: {}]
  %s1 = inlined_call_operand.vmem [shape: f32[1,32], index: 1, kind: input, shape index: {}]
  %s2 = inlined_call_operand.vmem [shape: f32[1,32], index: 2, kind: input, shape index: {}]
  %s3 = inlined_call_operand.vmem [shape: bf16[32,128], index: 3, kind: input, shape index: {}]
  %s4 = inlined_call_operand.vmem [shape: f32[2,128], index: 4, kind: output, shape index: {}]
  %s5 = sld [smem:[#allocation0]]
  $region26: #{closed_call.89} parent=0
    _
  %s7 = ssub.s32 1, %s5
  %s8 = scalar_select 0, %s7, %s5
  // Predicated region
  $region2: #{closed_call.89} parent=0 // pred_check
    _
  $region3: #{closed_call.89} parent=0 // pred_check_branch
    %10 = sbr.rel (0) target = $region5
  $region4: #{closed_call.89} parent=0 // pred_region
    _
  $region5: #{closed_call.89} parent=0 // pred_fallthru
    _
  // Predicated region
  $region6: #{closed_call.89} parent=0 // pred_check
    _
  $region7: #{closed_call.89} parent=0 // pred_check_branch
    %12 = sbr.rel (0) target = $region9
  $region8: #{closed_call.89} parent=0 // pred_region
    _
  $region9: #{closed_call.89} parent=0 // pred_fallthru
    _
  // Predicated region
  $region10: #{closed_call.89} parent=0 // pred_check
    _
  $region11: #{closed_call.89} parent=0 // pred_check_branch
    %14 = sbr.rel (0) target = $region13
  $region12: #{closed_call.89} parent=0 // pred_region
    _
  $region13: #{closed_call.89} parent=0 // pred_fallthru
    _
  // Predicated region
  $region14: #{closed_call.89} parent=0 // pred_check
    _
  $region15: #{closed_call.89} parent=0 // pred_check_branch
    %16 = sbr.rel (0) target = $region17
  $region16: #{closed_call.89} parent=0 // pred_region
    _
  $region17: #{closed_call.89} parent=0 // pred_fallthru
    _
  %v18 = vld [vmem:[%s0] sm:$0x3]
  %vm19 = vcmask 254976
  %v20 = vsel %vm19, %v18, 0.0
  %21 = vadd.xlane.f32.xlu0 %v20
  %v22 = vpop.xlane.xlu0 %21
  %v23 = vrcp.pop 32.0
  %v24 = vmul.f32 %v22, %v23
  %v25 = vsub.f32 %v18, %v24
  %v26 = vmul.f32 %v25, %v25
  %v27 = vsel %vm19, %v26, 0.0
  %28 = vadd.xlane.f32.xlu0 %v27
  %v29 = vpop.xlane.xlu0 %28
  %v30 = vmul.f32 %v29, %v23
  %v31 = vadd.f32 %v30, 1e-05
  %v32 = vrsqrt.pop %v31
  %v33 = vmul.f32 %v25, %v32
  %v34 = vld [vmem:[%s1] sm:$0x1]
  %v36 = vlaneseq
  %v37 = vshrl.u32 %v36, 7
  %v38 = vsub.s32 0, %v37
  %v39 = vrot.slane %v34, %v38
  %v41 = vmul.f32 %v33, %v39
  %v42 = vld [vmem:[%s2] sm:$0x1]
  %v44 = vlaneseq
  %v45 = vshrl.u32 %v44, 7
  %v46 = vsub.s32 0, %v45
  %v47 = vrot.slane %v42, %v46
  %v49 = vadd.f32 %v41, %v47
  %v50 = vpack.c.bf16 %v49, %v49
  %v51 = vld [vmem:[%s3] sm:$0xf]
  %v52 = vld [vmem:[%s3 + $0x4] sm:$0xf]
  %v53 = vld [vmem:[%s3 + $0x8] sm:$0xf]
  %v54 = vld [vmem:[%s3 + $0xc] sm:$0xf]
  %v59 = vunpack.c.l.b16 %v51
  %v60 = vunpack.c.l.b16 %v52
  %v61 = vunpack.c.l.b16 %v53
  %v62 = vunpack.c.l.b16 %v54
  %v63 = vpack.c.b16 %v60, %v59
  %v64 = vpack.c.b16 %v62, %v61
  %vm67 = vcmask 261120
  %v69 = vsel %vm67, %v50, 0
  %71 = vmatprep.subr.bf16.mxu0 0
  %72 = vmatpush1.bf16.msra.mxu0 %v63
  %73 = vmatprep.subr.bf16.mxu0 0
  %74 = vmatpush1.bf16.msra.mxu0 %v64
  %75 = vmatprep.subr.bf16.mxu0 0
  %76 = vmatpush1.bf16.msra.mxu0 0
  %77 = vmatprep.subr.bf16.mxu0 0
  %78 = vmatpush1.bf16.msra.mxu0 0
  %79 = vmatprep.subr.bf16.mxu0 0
  %80 = vmatpush1.bf16.msra.mxu0 0
  %81 = vmatprep.subr.bf16.mxu0 0
  %82 = vmatpush1.bf16.msra.mxu0 0
  %83 = vmatprep.subr.bf16.mxu0 0
  %84 = vmatpush1.bf16.msra.mxu0 0
  %85 = vmatprep.subr.bf16.mxu0 0
  %86 = vmatpush1.bf16.msra.mxu0 0
  %87 = vmatprep.subr.bf16.mxu0 0
  %88 = vmatpush1.bf16.msra.mxu0 0
  %89 = vmatprep.subr.bf16.mxu0 0
  %90 = vmatpush1.bf16.msra.mxu0 0
  %91 = vmatprep.subr.bf16.mxu0 0
  %92 = vmatpush1.bf16.msra.mxu0 0
  %93 = vmatprep.subr.bf16.mxu0 0
  %94 = vmatpush1.bf16.msra.mxu0 0
  %95 = vmatprep.subr.bf16.mxu0 0
  %96 = vmatpush1.bf16.msra.mxu0 0
  %97 = vmatprep.subr.bf16.mxu0 0
  %98 = vmatpush1.bf16.msra.mxu0 0
  %99 = vmatprep.subr.bf16.mxu0 0
  %100 = vmatpush1.bf16.msra.mxu0 0
  %101 = vmatprep.subr.bf16.mxu0 0
  %102 = vmatpush1.bf16.msra.mxu0 0
  %103 = vmatprep.mubr.bf16.mxu0 0
  %104 = vmatmul.mubr.bf16.gmra.mrb[0].mxu0 %v69
  %v105 = vpop.f32.mrb[0].mxu0
  %v106 = vadd.f32 0.0, %v105
  %v107 = vpop.f32.mrb[0].mxu0
  %v108 = vpop.f32.mrb[0].mxu0
  %v109 = vpop.f32.mrb[0].mxu0
  %110 = vdwg.mxu0
  %111 = vst [vmem:[%s4] sm:$0x3] %v106
  // Predicated region
  $region18: #{closed_call.89} parent=0 // pred_check
    _
  $region19: #{closed_call.89} parent=0 // pred_check_branch
    %113 = sbr.rel (0) target = $region21
  $region20: #{closed_call.89} parent=0 // pred_region
    _
  $region21: #{closed_call.89} parent=0 // pred_fallthru
    _
  // Predicated region
  $region22: #{closed_call.89} parent=0 // pred_check
    _
  $region23: #{closed_call.89} parent=0 // pred_check_branch
    %115 = sbr.rel (0) target = $region25
  $region24: #{closed_call.89} parent=0 // pred_region
    _
  $region25: #{closed_call.89} parent=0 // pred_fallthru
    _

// kernel: run_generation.5
$region0: #{run_generation.5}
  #allocation0 [shape = 'u32[]', space=smem, size = 0x4, offset = 0x4, fixed_abs, tag = 'smem constant byte address 0x4 - core index']
  #allocation1 [shape = 'u32[144,128]{1,0:T(1,128)}', space=vmem, size = 0x12000, scoped, tag = 'internal scratch']
  %s0 = inlined_call_operand.vmem [shape: f32[36,32], index: 0, kind: input, shape index: {}]
  %s1 = inlined_call_operand.vmem [shape: f32[1,32], index: 1, kind: input, shape index: {}]
  %s2 = inlined_call_operand.vmem [shape: f32[1,32], index: 2, kind: input, shape index: {}]
  %s3 = inlined_call_operand.vmem [shape: bf16[32,128], index: 3, kind: input, shape index: {}]
  %s4 = inlined_call_operand.vmem [shape: f32[36,128], index: 4, kind: output, shape index: {}]
  %s5 = sld [smem:[#allocation0]]
  $region26: #{run_generation.5} parent=0
    _
  %s7 = ssub.s32 1, %s5
  %s8 = scalar_select 0, %s7, %s5
  // Predicated region
  $region2: #{run_generation.5} parent=0 // pred_check
    _
  $region3: #{run_generation.5} parent=0 // pred_check_branch
    %10 = sbr.rel (0) target = $region5
  $region4: #{run_generation.5} parent=0 // pred_region
    _
  $region5: #{run_generation.5} parent=0 // pred_fallthru
    _
  // Predicated region
  $region6: #{run_generation.5} parent=0 // pred_check
    _
  $region7: #{run_generation.5} parent=0 // pred_check_branch
    %12 = sbr.rel (0) target = $region9
  $region8: #{run_generation.5} parent=0 // pred_region
    _
  $region9: #{run_generation.5} parent=0 // pred_fallthru
    _
  // Predicated region
  $region10: #{run_generation.5} parent=0 // pred_check
    _
  $region11: #{run_generation.5} parent=0 // pred_check_branch
    %14 = sbr.rel (0) target = $region13
  $region12: #{run_generation.5} parent=0 // pred_region
    _
  $region13: #{run_generation.5} parent=0 // pred_fallthru
    _
  // Predicated region
  $region14: #{run_generation.5} parent=0 // pred_check
    _
  $region15: #{run_generation.5} parent=0 // pred_check_branch
    %16 = sbr.rel (0) target = $region17
  $region16: #{run_generation.5} parent=0 // pred_region
    _
  $region17: #{run_generation.5} parent=0 // pred_fallthru
    _
  %v18 = vld [vmem:[%s0] sm:$0xff]
  %v19 = vld [vmem:[%s0 + $0x8] sm:$0xff]
  %v20 = vld [vmem:[%s0 + $0x10] sm:$0xff]
  %v21 = vld [vmem:[%s0 + $0x18] sm:$0xff]
  %v22 = vld [vmem:[%s0 + $0x20] sm:$0xf]
  %vm23 = vcmask 261120
  %v24 = vsel %vm23, %v18, 0.0
  %25 = vadd.xlane.f32.xlu0 %v24
  %v26 = vpop.xlane.xlu0 %25
  %v27 = vsel %vm23, %v19, 0.0
  %28 = vadd.xlane.f32.xlu0 %v27
  %v29 = vpop.xlane.xlu0 %28
  %v30 = vsel %vm23, %v20, 0.0
  %31 = vadd.xlane.f32.xlu0 %v30
  %v32 = vpop.xlane.xlu0 %31
  %v33 = vsel %vm23, %v21, 0.0
  %34 = vadd.xlane.f32.xlu0 %v33
  %v35 = vpop.xlane.xlu0 %34
  %vm36 = vcmask 257024
  %v37 = vsel %vm36, %v22, 0.0
  %38 = vadd.xlane.f32.xlu0 %v37
  %v39 = vpop.xlane.xlu0 %38
  %v40 = vrcp.pop 32.0
  %v41 = vmul.f32 %v26, %v40
  %v42 = vmul.f32 %v29, %v40
  %v43 = vmul.f32 %v32, %v40
  %v44 = vmul.f32 %v35, %v40
  %v45 = vmul.f32 %v39, %v40
  %v46 = vsub.f32 %v18, %v41
  %v47 = vsub.f32 %v19, %v42
  %v48 = vsub.f32 %v20, %v43
  %v49 = vsub.f32 %v21, %v44
  %v50 = vsub.f32 %v22, %v45
  %v51 = vmul.f32 %v46, %v46
  %v52 = vmul.f32 %v47, %v47
  %v53 = vmul.f32 %v48, %v48
  %v54 = vmul.f32 %v49, %v49
  %v55 = vmul.f32 %v50, %v50
  %v56 = vsel %vm23, %v51, 0.0
  %57 = vadd.xlane.f32.xlu0 %v56
  %v58 = vpop.xlane.xlu0 %57
  %v59 = vsel %vm23, %v52, 0.0
  %60 = vadd.xlane.f32.xlu0 %v59
  %v61 = vpop.xlane.xlu0 %60
  %v62 = vsel %vm23, %v53, 0.0
  %63 = vadd.xlane.f32.xlu0 %v62
  %v64 = vpop.xlane.xlu0 %63
  %v65 = vsel %vm23, %v54, 0.0
  %66 = vadd.xlane.f32.xlu0 %v65
  %v67 = vpop.xlane.xlu0 %66
  %v68 = vsel %vm36, %v55, 0.0
  %69 = vadd.xlane.f32.xlu0 %v68
  %v70 = vpop.xlane.xlu0 %69
  %v71 = vmul.f32 %v58, %v40
  %v72 = vmul.f32 %v61, %v40
  %v73 = vmul.f32 %v64, %v40
  %v74 = vmul.f32 %v67, %v40
  %v75 = vmul.f32 %v70, %v40
  %v76 = vadd.f32 %v71, 1e-05
  %v77 = vadd.f32 %v72, 1e-05
  %v78 = vadd.f32 %v73, 1e-05
  %v79 = vadd.f32 %v74, 1e-05
  %v80 = vadd.f32 %v75, 1e-05
  %v81 = vrsqrt.pop %v76
  %v82 = vrsqrt.pop %v77
  %v83 = vrsqrt.pop %v78
  %v84 = vrsqrt.pop %v79
  %v85 = vrsqrt.pop %v80
  %v86 = vmul.f32 %v46, %v81
  %v87 = vmul.f32 %v47, %v82
  %v88 = vmul.f32 %v48, %v83
  %v89 = vmul.f32 %v49, %v84
  %v90 = vmul.f32 %v50, %v85
  %v91 = vld [vmem:[%s1] sm:$0x1]
  %v93 = vlaneseq
  %v94 = vshrl.u32 %v93, 7
  %v95 = vsub.s32 0, %v94
  %v96 = vrot.slane %v91, %v95
  %v98 = vmul.f32 %v86, %v96
  %v99 = vmul.f32 %v87, %v96
  %v100 = vmul.f32 %v88, %v96
  %v101 = vmul.f32 %v89, %v96
  %v102 = vmul.f32 %v90, %v96
  %v103 = vld [vmem:[%s2] sm:$0x1]
  %v105 = vlaneseq
  %v106 = vshrl.u32 %v105, 7
  %v107 = vsub.s32 0, %v106
  %v108 = vrot.slane %v103, %v107
  %v110 = vadd.f32 %v98, %v108
  %v111 = vadd.f32 %v99, %v108
  %v112 = vadd.f32 %v100, %v108
  %v113 = vadd.f32 %v101, %v108
  %v114 = vadd.f32 %v102, %v108
  %v115 = vpack.c.bf16 %v111, %v110
  %v116 = vpack.c.bf16 %v113, %v112
  %v117 = vpack.c.bf16 %v114, %v114
  %v118 = vld [vmem:[%s3] sm:$0xf]
  %v119 = vld [vmem:[%s3 + $0x4] sm:$0xf]
  %v120 = vld [vmem:[%s3 + $0x8] sm:$0xf]
  %v121 = vld [vmem:[%s3 + $0xc] sm:$0xf]
  %v126 = vunpack.c.l.b16 %v118
  %v127 = vunpack.c.l.b16 %v119
  %v128 = vunpack.c.l.b16 %v120
  %v129 = vunpack.c.l.b16 %v121
  %v130 = vpack.c.b16 %v127, %v126
  %v131 = vpack.c.b16 %v129, %v128
  %v135 = vsel %vm23, %v115, 0
  %v138 = vsel %vm23, %v116, 0
  %v141 = vsel %vm23, %v117, 0
  %143 = vmatprep.subr.bf16.mxu0 0
  %144 = vmatpush1.bf16.msra.mxu0 %v130
  %145 = vmatprep.subr.bf16.mxu0 0
  %146 = vmatpush1.bf16.msra.mxu0 %v131
  %147 = vmatprep.subr.bf16.mxu0 0
  %148 = vmatpush1.bf16.msra.mxu0 0
  %149 = vmatprep.subr.bf16.mxu0 0
  %150 = vmatpush1.bf16.msra.mxu0 0
  %151 = vmatprep.subr.bf16.mxu0 0
  %152 = vmatpush1.bf16.msra.mxu0 0
  %153 = vmatprep.subr.bf16.mxu0 0
  %154 = vmatpush1.bf16.msra.mxu0 0
  %155 = vmatprep.subr.bf16.mxu0 0
  %156 = vmatpush1.bf16.msra.mxu0 0
  %157 = vmatprep.subr.bf16.mxu0 0
  %158 = vmatpush1.bf16.msra.mxu0 0
  %159 = vmatprep.subr.bf16.mxu0 0
  %160 = vmatpush1.bf16.msra.mxu0 0
  %161 = vmatprep.subr.bf16.mxu0 0
  %162 = vmatpush1.bf16.msra.mxu0 0
  %163 = vmatprep.subr.bf16.mxu0 0
  %164 = vmatpush1.bf16.msra.mxu0 0
  %165 = vmatprep.subr.bf16.mxu0 0
  %166 = vmatpush1.bf16.msra.mxu0 0
  %167 = vmatprep.subr.bf16.mxu0 0
  %168 = vmatpush1.bf16.msra.mxu0 0
  %169 = vmatprep.subr.bf16.mxu0 0
  %170 = vmatpush1.bf16.msra.mxu0 0
  %171 = vmatprep.subr.bf16.mxu0 0
  %172 = vmatpush1.bf16.msra.mxu0 0
  %173 = vmatprep.subr.bf16.mxu0 0
  %174 = vmatpush1.bf16.msra.mxu0 0
  %175 = vmatprep.mubr.bf16.mxu0 0
  %176 = vmatmul.mubr.bf16.gmra.mrb[0].mxu0 %v135
  %v177 = vpop.f32.mrb[0].mxu0
  %v178 = vadd.f32 0.0, %v177
  %v179 = vpop.f32.mrb[0].mxu0
  %v180 = vpop.f32.mrb[0].mxu0
  %v181 = vadd.f32 0.0, %v180
  %v182 = vpop.f32.mrb[0].mxu0
  %183 = vmatprep.mubr.bf16.mxu0 0
  %184 = vmatmul.mubr.bf16.gmra.mrb[0].mxu0 %v138
  %v185 = vpop.f32.mrb[0].mxu0
  %v186 = vadd.f32 0.0, %v185
  %v187 = vpop.f32.mrb[0].mxu0
  %v188 = vpop.f32.mrb[0].mxu0
  %v189 = vadd.f32 0.0, %v188
  %v190 = vpop.f32.mrb[0].mxu0
  %191 = vmatprep.mubr.bf16.mxu0 0
  %192 = vmatmul.mubr.bf16.gmra.mrb[0].mxu0 %v141
  %v193 = vpop.f32.mrb[0].mxu0
  %v194 = vadd.f32 0.0, %v193
  %v195 = vpop.f32.mrb[0].mxu0
  %v196 = vpop.f32.mrb[0].mxu0
  %v197 = vpop.f32.mrb[0].mxu0
  %198 = vdwg.mxu0
  %199 = vst [vmem:[%s4] sm:$0xff] %v178
  %200 = vst [vmem:[%s4 + $0x8] sm:$0xff] %v181
  %201 = vst [vmem:[%s4 + $0x10] sm:$0xff] %v186
  %202 = vst [vmem:[%s4 + $0x18] sm:$0xff] %v189
  %203 = vst [vmem:[%s4 + $0x20] sm:$0xf] %v194
  // Predicated region
  $region18: #{run_generation.5} parent=0 // pred_check
    _
  $region19: #{run_generation.5} parent=0 // pred_check_branch
    %205 = sbr.rel (0) target = $region21
  $region20: #{run_generation.5} parent=0 // pred_region
    _
  $region21: #{run_generation.5} parent=0 // pred_fallthru
    _
  // Predicated region
  $region22: #{run_generation.5} parent=0 // pred_check
    _
  $region23: #{run_generation.5} parent=0 // pred_check_branch
    %207 = sbr.rel (0) target = $region25
  $region24: #{run_generation.5} parent=0 // pred_region
    _
  $region25: #{run_generation.5} parent=0 // pred_fallthru
    _

// kernel: run_generation.3
$region0: #{run_generation.3}
  #allocation0 [shape = 'u32[]', space=smem, size = 0x4, offset = 0x4, fixed_abs, tag = 'smem constant byte address 0x4 - core index']
  #allocation1 [shape = 'u32[144,128]{1,0:T(1,128)}', space=vmem, size = 0x12000, scoped, tag = 'internal scratch']
  %s0 = inlined_call_operand.vmem [shape: f32[2,18,32], index: 0, kind: input, shape index: {}]
  %s1 = inlined_call_operand.vmem [shape: f32[2,1,18], index: 1, kind: input, shape index: {}]
  %s2 = inlined_call_operand.vmem [shape: f32[1,32], index: 2, kind: input, shape index: {}]
  %s3 = inlined_call_operand.vmem [shape: f32[1,32], index: 3, kind: input, shape index: {}]
  %s4 = inlined_call_operand.vmem [shape: bf16[12,32,8], index: 4, kind: input, shape index: {}]
  %s5 = inlined_call_operand.vmem [shape: f32[12,1,8], index: 5, kind: input, shape index: {}]
  %s6 = inlined_call_operand.vmem [shape: bf16[4,8,32], index: 6, kind: input, shape index: {}]
  %s7 = inlined_call_operand.vmem [shape: f32[1,32], index: 7, kind: input, shape index: {}]
  %s8 = inlined_call_operand.vmem [shape: f32[1,32], index: 8, kind: input, shape index: {}]
  %s9 = inlined_call_operand.vmem [shape: f32[1,32], index: 9, kind: input, shape index: {}]
  %s10 = inlined_call_operand.vmem [shape: bf16[32,128], index: 10, kind: input, shape index: {}]
  %s11 = inlined_call_operand.vmem [shape: f32[1,128], index: 11, kind: input, shape index: {}]
  %s12 = inlined_call_operand.vmem [shape: bf16[128,32], index: 12, kind: input, shape index: {}]
  %s13 = inlined_call_operand.vmem [shape: f32[1,32], index: 13, kind: input, shape index: {}]
  %s14 = inlined_call_operand.vmem [shape: f32[2,18,32], index: 14, kind: output, shape index: {}]
  %s15 = sld [smem:[#allocation0]]
  $region89: #{run_generation.3} parent=0
    _
  %s17 = ssub.s32 1, %s15
  %s18 = scalar_select 0, %s17, %s15
  loop: start=0, step=1, limit=4
  $region2: #{run_generation.3} parent=0 // loop_pre_header
    _
  $region3: #{run_generation.3} parent=0 // loop_header
    %s20 = sphi 0, %s24
    %p21 = scmp.ge.s32.totalorder %s20, 4
    %s30 = sphi 0, %s32
    %s33 = sphi 0, %s30
    %s34 = sphi 0, %s33
    %s50 = sphi 0, %s34
    %s56 = sphi 0, %s58
    %s59 = sphi 0, %s56
    %s60 = sphi 0, %s59
    %s76 = sphi 0, %s60
    %s80 = sphi 0, %s80
    %s82 = sphi 0, %s80
    %s83 = sphi 0, %s82
    %s97 = sphi 0, %s83
    %s101 = sphi 0, %s101
    %s103 = sphi 0, %s101
    %s104 = sphi 0, %s103
    %s118 = sphi 0, %s104
    %s122 = sphi 0, %s122
    %s124 = sphi 0, %s122
    %s125 = sphi 0, %s124
    %s139 = sphi 0, %s125
    %s143 = sphi 0, %s143
    %s145 = sphi 0, %s143
    %s146 = sphi 0, %s145
    %s160 = sphi 0, %s146
    %s164 = sphi 0, %s164
    %s166 = sphi 0, %s164
    %s167 = sphi 0, %s166
    %s181 = sphi 0, %s167
    %s185 = sphi 0, %s185
    %s187 = sphi 0, %s185
    %s188 = sphi 0, %s187
    %s202 = sphi 0, %s188
    %s206 = sphi 0, %s206
    %s208 = sphi 0, %s206
    %s209 = sphi 0, %s208
    %s223 = sphi 0, %s209
    %s227 = sphi 0, %s227
    %s229 = sphi 0, %s227
    %s230 = sphi 0, %s229
    %s244 = sphi 0, %s230
    %s248 = sphi 0, %s248
    %s250 = sphi 0, %s248
    %s251 = sphi 0, %s250
    %s265 = sphi 0, %s251
    %s269 = sphi 0, %s269
    %s271 = sphi 0, %s269
    %s272 = sphi 0, %s271
    %s286 = sphi 0, %s272
    %s290 = sphi 0, %s290
    %s292 = sphi 0, %s290
    %s293 = sphi 0, %s292
    %s307 = sphi 0, %s293
    %s311 = sphi 0, %s311
    %s313 = sphi 0, %s311
    %s314 = sphi 0, %s313
    %s328 = sphi 0, %s314
    %s334 = sphi 0, %s336
    %s337 = sphi 0, %s334
    %s338 = sphi 0, %s337
    %s354 = sphi 0, %s338
  $region4: #{run_generation.3} parent=0 // loop_header_branch
    %23 = sbr.rel (%p21) target = $region8
  $region5: #{run_generation.3} parent=0 // loop_body
    %s25 = ssub.s32 %s20, 1
    %s26 = ssub.s32 %s20, 2
    %s27 = sadd.s32 %s20, 1
    %s28 = ssub.s32 %s20, %s27
    %p29 = scmp.eq.s32.totalorder %s28, 0
    %s31 = sadd.s32 %s30, 1
    %s32 = scalar_select %p29, %s30, %s31
    %p35 = pneg %p29
    %p36 = scmp.eq.s32.totalorder %s20, 1
    %p37 = por %p35, %p36
    %p38 = scmp.ne.s32.totalorder %s30, %s33
    %p39 = scmp.eq.s32.totalorder %s20, 0
    %p40 = por %p38, %p39
    %p41 = scmp.ne.s32.totalorder %s30, %s33
    %p42 = scmp.eq.s32.totalorder %s25, 1
    %p43 = por %p41, %p42
    %p44 = scmp.ne.s32.totalorder %s33, %s34
    %p45 = scmp.eq.s32.totalorder %s25, 0
    %p46 = por %p44, %p45
    %p47 = scmp.ne.s32.totalorder %s33, %s34
    %p48 = scmp.eq.s32.totalorder %s26, 1
    %p49 = por %p47, %p48
    %p51 = scmp.ne.s32.totalorder %s34, %s50
    %p52 = scmp.eq.s32.totalorder %s26, 0
    %p53 = por %p51, %p52
    %s54 = ssub.s32 %s20, %s27
    %p55 = scmp.eq.s32.totalorder %s54, 0
    %s57 = sadd.s32 %s56, 1
    %s58 = scalar_select %p55, %s56, %s57
    %p61 = pneg %p55
    %p62 = scmp.eq.s32.totalorder %s20, 1
    %p63 = por %p61, %p62
    %p64 = scmp.ne.s32.totalorder %s56, %s59
    %p65 = scmp.eq.s32.totalorder %s20, 0
    %p66 = por %p64, %p65
    %p67 = scmp.ne.s32.totalorder %s56, %s59
    %p68 = scmp.eq.s32.totalorder %s25, 1
    %p69 = por %p67, %p68
    %p70 = scmp.ne.s32.totalorder %s59, %s60
    %p71 = scmp.eq.s32.totalorder %s25, 0
    %p72 = por %p70, %p71
    %p73 = scmp.ne.s32.totalorder %s59, %s60
    %p74 = scmp.eq.s32.totalorder %s26, 1
    %p75 = por %p73, %p74
    %p77 = scmp.ne.s32.totalorder %s60, %s76
    %p78 = scmp.eq.s32.totalorder %s26, 0
    %p79 = por %p77, %p78
    %s81 = sadd.s32 %s80, 1
    %p84 = scmp.eq.s32.totalorder %s20, 1
    %p85 = scmp.ne.s32.totalorder %s80, %s82
    %p86 = scmp.eq.s32.totalorder %s20, 0
    %p87 = por %p85, %p86
    %p88 = scmp.ne.s32.totalorder %s80, %s82
    %p89 = scmp.eq.s32.totalorder %s25, 1
    %p90 = por %p88, %p89
    %p91 = scmp.ne.s32.totalorder %s82, %s83
    %p92 = scmp.eq.s32.totalorder %s25, 0
    %p93 = por %p91, %p92
    %p94 = scmp.ne.s32.totalorder %s82, %s83
    %p95 = scmp.eq.s32.totalorder %s26, 1
    %p96 = por %p94, %p95
    %p98 = scmp.ne.s32.totalorder %s83, %s97
    %p99 = scmp.eq.s32.totalorder %s26, 0
    %p100 = por %p98, %p99
    %s102 = sadd.s32 %s101, 1
    %p105 = scmp.eq.s32.totalorder %s20, 1
    %p106 = scmp.ne.s32.totalorder %s101, %s103
    %p107 = scmp.eq.s32.totalorder %s20, 0
    %p108 = por %p106, %p107
    %p109 = scmp.ne.s32.totalorder %s101, %s103
    %p110 = scmp.eq.s32.totalorder %s25, 1
    %p111 = por %p109, %p110
    %p112 = scmp.ne.s32.totalorder %s103, %s104
    %p113 = scmp.eq.s32.totalorder %s25, 0
    %p114 = por %p112, %p113
    %p115 = scmp.ne.s32.totalorder %s103, %s104
    %p116 = scmp.eq.s32.totalorder %s26, 1
    %p117 = por %p115, %p116
    %p119 = scmp.ne.s32.totalorder %s104, %s118
    %p120 = scmp.eq.s32.totalorder %s26, 0
    %p121 = por %p119, %p120
    %s123 = sadd.s32 %s122, 1
    %p126 = scmp.eq.s32.totalorder %s20, 1
    %p127 = scmp.ne.s32.totalorder %s122, %s124
    %p128 = scmp.eq.s32.totalorder %s20, 0
    %p129 = por %p127, %p128
    %p130 = scmp.ne.s32.totalorder %s122, %s124
    %p131 = scmp.eq.s32.totalorder %s25, 1
    %p132 = por %p130, %p131
    %p133 = scmp.ne.s32.totalorder %s124, %s125
    %p134 = scmp.eq.s32.totalorder %s25, 0
    %p135 = por %p133, %p134
    %p136 = scmp.ne.s32.totalorder %s124, %s125
    %p137 = scmp.eq.s32.totalorder %s26, 1
    %p138 = por %p136, %p137
    %p140 = scmp.ne.s32.totalorder %s125, %s139
    %p141 = scmp.eq.s32.totalorder %s26, 0
    %p142 = por %p140, %p141
    %s144 = sadd.s32 %s143, 1
    %p147 = scmp.eq.s32.totalorder %s20, 1
    %p148 = scmp.ne.s32.totalorder %s143, %s145
    %p149 = scmp.eq.s32.totalorder %s20, 0
    %p150 = por %p148, %p149
    %p151 = scmp.ne.s32.totalorder %s143, %s145
    %p152 = scmp.eq.s32.totalorder %s25, 1
    %p153 = por %p151, %p152
    %p154 = scmp.ne.s32.totalorder %s145, %s146
    %p155 = scmp.eq.s32.totalorder %s25, 0
    %p156 = por %p154, %p155
    %p157 = scmp.ne.s32.totalorder %s145, %s146
    %p158 = scmp.eq.s32.totalorder %s26, 1
    %p159 = por %p157, %p158
    %p161 = scmp.ne.s32.totalorder %s146, %s160
    %p162 = scmp.eq.s32.totalorder %s26, 0
    %p163 = por %p161, %p162
    %s165 = sadd.s32 %s164, 1
    %p168 = scmp.eq.s32.totalorder %s20, 1
    %p169 = scmp.ne.s32.totalorder %s164, %s166
    %p170 = scmp.eq.s32.totalorder %s20, 0
    %p171 = por %p169, %p170
    %p172 = scmp.ne.s32.totalorder %s164, %s166
    %p173 = scmp.eq.s32.totalorder %s25, 1
    %p174 = por %p172, %p173
    %p175 = scmp.ne.s32.totalorder %s166, %s167
    %p176 = scmp.eq.s32.totalorder %s25, 0
    %p177 = por %p175, %p176
    %p178 = scmp.ne.s32.totalorder %s166, %s167
    %p179 = scmp.eq.s32.totalorder %s26, 1
    %p180 = por %p178, %p179
    %p182 = scmp.ne.s32.totalorder %s167, %s181
    %p183 = scmp.eq.s32.totalorder %s26, 0
    %p184 = por %p182, %p183
    %s186 = sadd.s32 %s185, 1
    %p189 = scmp.eq.s32.totalorder %s20, 1
    %p190 = scmp.ne.s32.totalorder %s185, %s187
    %p191 = scmp.eq.s32.totalorder %s20, 0
    %p192 = por %p190, %p191
    %p193 = scmp.ne.s32.totalorder %s185, %s187
    %p194 = scmp.eq.s32.totalorder %s25, 1
    %p195 = por %p193, %p194
    %p196 = scmp.ne.s32.totalorder %s187, %s188
    %p197 = scmp.eq.s32.totalorder %s25, 0
    %p198 = por %p196, %p197
    %p199 = scmp.ne.s32.totalorder %s187, %s188
    %p200 = scmp.eq.s32.totalorder %s26, 1
    %p201 = por %p199, %p200
    %p203 = scmp.ne.s32.totalorder %s188, %s202
    %p204 = scmp.eq.s32.totalorder %s26, 0
    %p205 = por %p203, %p204
    %s207 = sadd.s32 %s206, 1
    %p210 = scmp.eq.s32.totalorder %s20, 1
    %p211 = scmp.ne.s32.totalorder %s206, %s208
    %p212 = scmp.eq.s32.totalorder %s20, 0
    %p213 = por %p211, %p212
    %p214 = scmp.ne.s32.totalorder %s206, %s208
    %p215 = scmp.eq.s32.totalorder %s25, 1
    %p216 = por %p214, %p215
    %p217 = scmp.ne.s32.totalorder %s208, %s209
    %p218 = scmp.eq.s32.totalorder %s25, 0
    %p219 = por %p217, %p218
    %p220 = scmp.ne.s32.totalorder %s208, %s209
    %p221 = scmp.eq.s32.totalorder %s26, 1
    %p222 = por %p220, %p221
    %p224 = scmp.ne.s32.totalorder %s209, %s223
    %p225 = scmp.eq.s32.totalorder %s26, 0
    %p226 = por %p224, %p225
    %s228 = sadd.s32 %s227, 1
    %p231 = scmp.eq.s32.totalorder %s20, 1
    %p232 = scmp.ne.s32.totalorder %s227, %s229
    %p233 = scmp.eq.s32.totalorder %s20, 0
    %p234 = por %p232, %p233
    %p235 = scmp.ne.s32.totalorder %s227, %s229
    %p236 = scmp.eq.s32.totalorder %s25, 1
    %p237 = por %p235, %p236
    %p238 = scmp.ne.s32.totalorder %s229, %s230
    %p239 = scmp.eq.s32.totalorder %s25, 0
    %p240 = por %p238, %p239
    %p241 = scmp.ne.s32.totalorder %s229, %s230
    %p242 = scmp.eq.s32.totalorder %s26, 1
    %p243 = por %p241, %p242
    %p245 = scmp.ne.s32.totalorder %s230, %s244
    %p246 = scmp.eq.s32.totalorder %s26, 0
    %p247 = por %p245, %p246
    %s249 = sadd.s32 %s248, 1
    %p252 = scmp.eq.s32.totalorder %s20, 1
    %p253 = scmp.ne.s32.totalorder %s248, %s250
    %p254 = scmp.eq.s32.totalorder %s20, 0
    %p255 = por %p253, %p254
    %p256 = scmp.ne.s32.totalorder %s248, %s250
    %p257 = scmp.eq.s32.totalorder %s25, 1
    %p258 = por %p256, %p257
    %p259 = scmp.ne.s32.totalorder %s250, %s251
    %p260 = scmp.eq.s32.totalorder %s25, 0
    %p261 = por %p259, %p260
    %p262 = scmp.ne.s32.totalorder %s250, %s251
    %p263 = scmp.eq.s32.totalorder %s26, 1
    %p264 = por %p262, %p263
    %p266 = scmp.ne.s32.totalorder %s251, %s265
    %p267 = scmp.eq.s32.totalorder %s26, 0
    %p268 = por %p266, %p267
    %s270 = sadd.s32 %s269, 1
    %p273 = scmp.eq.s32.totalorder %s20, 1
    %p274 = scmp.ne.s32.totalorder %s269, %s271
    %p275 = scmp.eq.s32.totalorder %s20, 0
    %p276 = por %p274, %p275
    %p277 = scmp.ne.s32.totalorder %s269, %s271
    %p278 = scmp.eq.s32.totalorder %s25, 1
    %p279 = por %p277, %p278
    %p280 = scmp.ne.s32.totalorder %s271, %s272
    %p281 = scmp.eq.s32.totalorder %s25, 0
    %p282 = por %p280, %p281
    %p283 = scmp.ne.s32.totalorder %s271, %s272
    %p284 = scmp.eq.s32.totalorder %s26, 1
    %p285 = por %p283, %p284
    %p287 = scmp.ne.s32.totalorder %s272, %s286
    %p288 = scmp.eq.s32.totalorder %s26, 0
    %p289 = por %p287, %p288
    %s291 = sadd.s32 %s290, 1
    %p294 = scmp.eq.s32.totalorder %s20, 1
    %p295 = scmp.ne.s32.totalorder %s290, %s292
    %p296 = scmp.eq.s32.totalorder %s20, 0
    %p297 = por %p295, %p296
    %p298 = scmp.ne.s32.totalorder %s290, %s292
    %p299 = scmp.eq.s32.totalorder %s25, 1
    %p300 = por %p298, %p299
    %p301 = scmp.ne.s32.totalorder %s292, %s293
    %p302 = scmp.eq.s32.totalorder %s25, 0
    %p303 = por %p301, %p302
    %p304 = scmp.ne.s32.totalorder %s292, %s293
    %p305 = scmp.eq.s32.totalorder %s26, 1
    %p306 = por %p304, %p305
    %p308 = scmp.ne.s32.totalorder %s293, %s307
    %p309 = scmp.eq.s32.totalorder %s26, 0
    %p310 = por %p308, %p309
    %s312 = sadd.s32 %s311, 1
    %p315 = scmp.eq.s32.totalorder %s20, 1
    %p316 = scmp.ne.s32.totalorder %s311, %s313
    %p317 = scmp.eq.s32.totalorder %s20, 0
    %p318 = por %p316, %p317
    %p319 = scmp.ne.s32.totalorder %s311, %s313
    %p320 = scmp.eq.s32.totalorder %s25, 1
    %p321 = por %p319, %p320
    %p322 = scmp.ne.s32.totalorder %s313, %s314
    %p323 = scmp.eq.s32.totalorder %s25, 0
    %p324 = por %p322, %p323
    %p325 = scmp.ne.s32.totalorder %s313, %s314
    %p326 = scmp.eq.s32.totalorder %s26, 1
    %p327 = por %p325, %p326
    %p329 = scmp.ne.s32.totalorder %s314, %s328
    %p330 = scmp.eq.s32.totalorder %s26, 0
    %p331 = por %p329, %p330
    %s332 = ssub.s32 %s20, %s27
    %p333 = scmp.eq.s32.totalorder %s332, 0
    %s335 = sadd.s32 %s334, 1
    %s336 = scalar_select %p333, %s334, %s335
    %p339 = pneg %p333
    %p340 = scmp.eq.s32.totalorder %s20, 1
    %p341 = por %p339, %p340
    %p342 = scmp.ne.s32.totalorder %s334, %s337
    %p343 = scmp.eq.s32.totalorder %s20, 0
    %p344 = por %p342, %p343
    %p345 = scmp.ne.s32.totalorder %s334, %s337
    %p346 = scmp.eq.s32.totalorder %s25, 1
    %p347 = por %p345, %p346
    %p348 = scmp.ne.s32.totalorder %s337, %s338
    %p349 = scmp.eq.s32.totalorder %s25, 0
    %p350 = por %p348, %p349
    %p351 = scmp.ne.s32.totalorder %s337, %s338
    %p352 = scmp.eq.s32.totalorder %s26, 1
    %p353 = por %p351, %p352
    %p355 = scmp.ne.s32.totalorder %s338, %s354
    %p356 = scmp.eq.s32.totalorder %s26, 0
    %p357 = por %p355, %p356
    %p358 = scmp.le.s32.totalorder 1, %s20
    %p359 = scmp.lt.s32.totalorder %s20, 3
    %p360 = pnand %p358, %p359
    %p361 = pneg %p360
    // Predicated region
    $region9: #{run_generation.3} parent=5 // pred_check
      _
    $region10: #{run_generation.3} parent=5 // pred_check_branch
      %363 = sbr.rel (%p360) target = $region12
    $region11: #{run_generation.3} parent=5 // pred_region
      %s364 = ssub.s32 %s20, 1
      // Predicated region
      $region13: #{run_generation.3} parent=11 // pred_check
        %p365 = pneg %p93
      $region14: #{run_generation.3} parent=11 // pred_check_branch
        %367 = sbr.rel (%p365) target = $region16
      $region15: #{run_generation.3} parent=11 // pred_region
        _
      $region16: #{run_generation.3} parent=11 // pred_fallthru
        _
      // Predicated region
      $region17: #{run_generation.3} parent=11 // pred_check
        %p368 = pneg %p114
      $region18: #{run_generation.3} parent=11 // pred_check_branch
        %370 = sbr.rel (%p368) target = $region20
      $region19: #{run_generation.3} parent=11 // pred_region
        _
      $region20: #{run_generation.3} parent=11 // pred_fallthru
        _
      // Predicated region
      $region21: #{run_generation.3} parent=11 // pred_check
        %p371 = pneg %p135
      $region22: #{run_generation.3} parent=11 // pred_check_branch
        %373 = sbr.rel (%p371) target = $region24
      $region23: #{run_generation.3} parent=11 // pred_region
        _
      $region24: #{run_generation.3} parent=11 // pred_fallthru
        _
      // Predicated region
      $region25: #{run_generation.3} parent=11 // pred_check
        %p374 = pneg %p156
      $region26: #{run_generation.3} parent=11 // pred_check_branch
        %376 = sbr.rel (%p374) target = $region28
      $region27: #{run_generation.3} parent=11 // pred_region
        _
      $region28: #{run_generation.3} parent=11 // pred_fallthru
        _
      // Predicated region
      $region29: #{run_generation.3} parent=11 // pred_check
        %p377 = pneg %p177
      $region30: #{run_generation.3} parent=11 // pred_check_branch
        %379 = sbr.rel (%p377) target = $region32
      $region31: #{run_generation.3} parent=11 // pred_region
        _
      $region32: #{run_generation.3} parent=11 // pred_fallthru
        _
      // Predicated region
      $region33: #{run_generation.3} parent=11 // pred_check
        %p380 = pneg %p198
      $region34: #{run_generation.3} parent=11 // pred_check_branch
        %382 = sbr.rel (%p380) target = $region36
      $region35: #{run_generation.3} parent=11 // pred_region
        _
      $region36: #{run_generation.3} parent=11 // pred_fallthru
        _
      // Predicated region
      $region37: #{run_generation.3} parent=11 // pred_check
        %p383 = pneg %p219
      $region38: #{run_generation.3} parent=11 // pred_check_branch
        %385 = sbr.rel (%p383) target = $region40
      $region39: #{run_generation.3} parent=11 // pred_region
        _
      $region40: #{run_generation.3} parent=11 // pred_fallthru
        _
      // Predicated region
      $region41: #{run_generation.3} parent=11 // pred_check
        %p386 = pneg %p240
      $region42: #{run_generation.3} parent=11 // pred_check_branch
        %388 = sbr.rel (%p386) target = $region44
      $region43: #{run_generation.3} parent=11 // pred_region
        _
      $region44: #{run_generation.3} parent=11 // pred_fallthru
        _
      // Predicated region
      $region45: #{run_generation.3} parent=11 // pred_check
        %p389 = pneg %p261
      $region46: #{run_generation.3} parent=11 // pred_check_branch
        %391 = sbr.rel (%p389) target = $region48
      $region47: #{run_generation.3} parent=11 // pred_region
        _
      $region48: #{run_generation.3} parent=11 // pred_fallthru
        _
      // Predicated region
      $region49: #{run_generation.3} parent=11 // pred_check
        %p392 = pneg %p282
      $region50: #{run_generation.3} parent=11 // pred_check_branch
        %394 = sbr.rel (%p392) target = $region52
      $region51: #{run_generation.3} parent=11 // pred_region
        _
      $region52: #{run_generation.3} parent=11 // pred_fallthru
        _
      // Predicated region
      $region53: #{run_generation.3} parent=11 // pred_check
        %p395 = pneg %p303
      $region54: #{run_generation.3} parent=11 // pred_check_branch
        %397 = sbr.rel (%p395) target = $region56
      $region55: #{run_generation.3} parent=11 // pred_region
        _
      $region56: #{run_generation.3} parent=11 // pred_fallthru
        _
      // Predicated region
      $region57: #{run_generation.3} parent=11 // pred_check
        %p398 = pneg %p324
      $region58: #{run_generation.3} parent=11 // pred_check_branch
        %400 = sbr.rel (%p398) target = $region60
      $region59: #{run_generation.3} parent=11 // pred_region
        _
      $region60: #{run_generation.3} parent=11 // pred_fallthru
        _
    $region12: #{run_generation.3} parent=5 // pred_fallthru
      _
    %p401 = scmp.lt.s32.totalorder %s20, 2
    // Predicated region
    $region61: #{run_generation.3} parent=5 // pred_check
      %p402 = pneg %p401
    $region62: #{run_generation.3} parent=5 // pred_check_branch
      %404 = sbr.rel (%p402) target = $region64
    $region63: #{run_generation.3} parent=5 // pred_region
      // Predicated region
      $region65: #{run_generation.3} parent=63 // pred_check
        %p405 = pneg %p40
      $region66: #{run_generation.3} parent=63 // pred_check_branch
        %407 = sbr.rel (%p405) target = $region68
      $region67: #{run_generation.3} parent=63 // pred_region
        %p408 = scmp.lt.s32.totalorder %s20, 1
        %s409 = scalar_select %p408, %s20, 1
        %s410 = smul.addr %s409, 3
        %s411 = smul.addr %s410, 8
        %s412 = scalar_lea.vmem %s0, %s411
      $region68: #{run_generation.3} parent=63 // pred_fallthru
        _
      // Predicated region
      $region69: #{run_generation.3} parent=63 // pred_check
        %p413 = pneg %p66
      $region70: #{run_generation.3} parent=63 // pred_check_branch
        %415 = sbr.rel (%p413) target = $region72
      $region71: #{run_generation.3} parent=63 // pred_region
        %p416 = scmp.lt.s32.totalorder %s20, 1
        %s417 = scalar_select %p416, %s20, 1
        %s418 = scalar_lea.vmem %s1, %s417
      $region72: #{run_generation.3} parent=63 // pred_fallthru
        _
    $region64: #{run_generation.3} parent=5 // pred_fallthru
      _
    %p419 = scmp.le.s32.totalorder 1, %s20
    %p420 = scmp.lt.s32.totalorder %s20, 3
    %p421 = pnand %p419, %p420
    %p422 = pneg %p421
    // Predicated region
    $region73: #{run_generation.3} parent=5 // pred_check
      _
    $region74: #{run_generation.3} parent=5 // pred_check_branch
      %424 = sbr.rel (%p421) target = $region76
    $region75: #{run_generation.3} parent=5 // pred_region
      %s425 = ssub.s32 %s20, 1
      %p426 = scmp.lt.s32.totalorder %s25, 1
      %s427 = scalar_select %p426, %s25, 1
      %s428 = smul.addr %s427, 3
      %s429 = smul.addr %s428, 8
      %s430 = scalar_lea.vmem %s0, %s429
      %p431 = pneg %p46
      %p432 = pneg %p43
      %p433 = scmp.lt.s32.totalorder %s25, 1
      %s434 = scalar_select %p433, %s25, 1
      %s435 = scalar_lea.vmem %s1, %s434
      %p436 = pneg %p72
      %p437 = pneg %p69
      %p438 = pneg %p93
      %p439 = pneg %p90
      %p440 = pneg %p114
      %p441 = pneg %p111
      %p442 = pneg %p135
      %p443 = pneg %p132
      %p444 = pneg %p156
      %p445 = pneg %p153
      %p446 = pneg %p177
      %p447 = pneg %p174
      %p448 = pneg %p198
      %p449 = pneg %p195
      %p450 = pneg %p219
      %p451 = pneg %p216
      %p452 = pneg %p240
      %p453 = pneg %p237
      %p454 = pneg %p261
      %p455 = pneg %p258
      %p456 = pneg %p282
      %p457 = pneg %p279
      %p458 = pneg %p303
      %p459 = pneg %p300
      %p460 = pneg %p324
      %p461 = pneg %p321
      %p462 = pneg %p350
      %p463 = pneg %p347
      %p464 = scmp.lt.s32.totalorder %s25, 1
      %s465 = scalar_select %p464, %s25, 1
      %s466 = smul.addr %s465, 3
      %s467 = smul.addr %s466, 8
      %s468 = scalar_lea.vmem %s14, %s467
      %p469 = scmp.lt.s32.totalorder %s25, 1
      %s470 = scalar_select %p469, %s25, 1
      %s471 = smul.addr %s470, 3
      %s472 = smul.addr %s471, 8
      %s473 = scalar_lea.vmem %s0, %s472
      %p474 = scmp.lt.s32.totalorder %s25, 1
      %s475 = scalar_select %p474, %s25, 1
      %s476 = scalar_lea.vmem %s1, %s475
      %p477 = scmp.lt.s32.totalorder %s25, 1
      %s478 = scalar_select %p477, %s25, 1
      %s479 = smul.addr %s478, 3
      %s480 = smul.addr %s479, 8
      %s481 = scalar_lea.vmem %s14, %s480
      %v483 = vld [vmem:[%s473] sm:$0xff]
      %v484 = vld [vmem:[%s473 + $0x8] sm:$0xff]
      %v485 = vld [vmem:[%s473 + $0x10] sm:$0x3]
      %vm486 = vcmask 261120
      %v487 = vsel %vm486, %v483, 0.0
      %488 = vadd.xlane.f32.xlu0 %v487
      %v489 = vpop.xlane.xlu0 %488
      %v490 = vsel %vm486, %v484, 0.0
      %491 = vadd.xlane.f32.xlu0 %v490
      %v492 = vpop.xlane.xlu0 %491
      %vm493 = vcmask 254976
      %v494 = vsel %vm493, %v485, 0.0
      %495 = vadd.xlane.f32.xlu0 %v494
      %v496 = vpop.xlane.xlu0 %495
      %v497 = vrcp.pop 32.0
      %v498 = vmul.f32 %v489, %v497
      %v499 = vmul.f32 %v492, %v497
      %v500 = vmul.f32 %v496, %v497
      %v501 = vsub.f32 %v483, %v498
      %v502 = vsub.f32 %v484, %v499
      %v503 = vsub.f32 %v485, %v500
      %v504 = vmul.f32 %v501, %v501
      %v505 = vmul.f32 %v502, %v502
      %v506 = vmul.f32 %v503, %v503
      %v507 = vsel %vm486, %v504, 0.0
      %508 = vadd.xlane.f32.xlu0 %v507
      %v509 = vpop.xlane.xlu0 %508
      %v510 = vsel %vm486, %v505, 0.0
      %511 = vadd.xlane.f32.xlu0 %v510
      %v512 = vpop.xlane.xlu0 %511
      %v513 = vsel %vm493, %v506, 0.0
      %514 = vadd.xlane.f32.xlu0 %v513
      %v515 = vpop.xlane.xlu0 %514
      %v516 = vmul.f32 %v509, %v497
      %v517 = vmul.f32 %v512, %v497
      %v518 = vmul.f32 %v515, %v497
      %v519 = vadd.f32 %v516, 1e-05
      %v520 = vadd.f32 %v517, 1e-05
      %v521 = vadd.f32 %v518, 1e-05
      %v522 = vrsqrt.pop %v519
      %v523 = vrsqrt.pop %v520
      %v524 = vrsqrt.pop %v521
      %v525 = vmul.f32 %v501, %v522
      %v526 = vmul.f32 %v502, %v523
      %v527 = vmul.f32 %v503, %v524
      %v528 = vld [vmem:[%s2] sm:$0x1]
      %v530 = vlaneseq
      %v531 = vshrl.u32 %v530, 7
      %v532 = vsub.s32 0, %v531
      %v533 = vrot.slane %v528, %v532
      %v535 = vmul.f32 %v525, %v533
      %v536 = vmul.f32 %v526, %v533
      %v537 = vmul.f32 %v527, %v533
      %v538 = vld [vmem:[%s3] sm:$0x1]
      %v540 = vlaneseq
      %v541 = vshrl.u32 %v540, 7
      %v542 = vsub.s32 0, %v541
      %v543 = vrot.slane %v538, %v542
      %v545 = vadd.f32 %v535, %v543
      %v546 = vadd.f32 %v536, %v543
      %v547 = vadd.f32 %v537, %v543
      %v548 = vpack.c.bf16 %v546, %v545
      %v549 = vpack.c.bf16 %v547, %v547
      %v550 = vlaneseq
      %v551 = vshrl.u32 %v550, 7
      %v552 = vadd.s32 %v551, 8
      %v553 = vadd.s32 %v551, 16
      %v554 = vlaneseq
      %v555 = vand.u32 %v554, 127
      %v556 = vld [vmem:[%s476] sm:$0x1]
      %vm557 = vcmp.gt.f32.partialorder %v556, 0.5
      %vm558 = vcmp.le.s32.totalorder %v555, %v551
      %vm559 = vcmp.le.s32.totalorder %v555, %v552
      %vm560 = vcmp.le.s32.totalorder %v555, %v553
      %vm561 = vcmp.ge.s32.totalorder %v551, 10
      %vm562 = vcmp.ge.s32.totalorder %v552, 10
      %vm563 = vcmp.ge.s32.totalorder %v553, 10
      %v564 = vsel %vm557, 1, 0
      %v565 = vlaneseq
      %v566 = vshrl.u32 %v565, 7
      %v567 = vsub.s32 0, %v566
      %v568 = vrot.slane %v564, %v567
      %vm569 = vcmp.eq.s32.totalorder %v568, 1
      %vm570 = vmor %vm561, %vm569
      %vm571 = vmor %vm562, %vm569
      %vm572 = vmor %vm563, %vm569
      %vm573 = vmand %vm558, %vm570
      %vm574 = vmand %vm559, %vm571
      %vm575 = vmand %vm560, %vm572
      %v576 = vsel %vm573, 0.0, -1e+09
      %v577 = vsel %vm574, 0.0, -1e+09
      %v578 = vsel %vm575, 0.0, -1e+09
      %v579 = vld [vmem:[%s4] sm:$0xf]
      %v580 = vld [vmem:[%s4 + $0x4] sm:$0xf]
      %v581 = vld [vmem:[%s4 + $0x8] sm:$0xf]
      %v582 = vld [vmem:[%s4 + $0xc] sm:$0xf]
      %v583 = vld [vmem:[%s5] sm:$0x1]
      %v585 = vlaneseq
      %v586 = vshrl.u32 %v585, 7
      %v587 = vsub.s32 0, %v586
      %v588 = vrot.slane %v583, %v587
      %v594 = vunpack.c.l.b16 %v579
      %v595 = vunpack.c.l.b16 %v580
      %v596 = vunpack.c.l.b16 %v581
      %v597 = vunpack.c.l.b16 %v582
      %v598 = vpack.c.b16 %v595, %v594
      %v599 = vpack.c.b16 %v597, %v596
      %v603 = vsel %vm486, %v548, 0
      %v606 = vsel %vm486, %v549, 0
      %608 = vmatprep.subr.bf16.mxu0 0
      %609 = vmatpush1.bf16.msra.mxu0 %v598
      %610 = vmatprep.subr.bf16.mxu0 0
      %611 = vmatpush1.bf16.msra.mxu0 %v599
      %612 = vmatprep.subr.bf16.mxu0 0
      %613 = vmatpush1.bf16.msra.mxu0 0
      %614 = vmatprep.subr.bf16.mxu0 0
      %615 = vmatpush1.bf16.msra.mxu0 0
      %616 = vmatprep.subr.bf16.mxu0 0
      %617 = vmatpush1.bf16.msra.mxu0 0
      %618 = vmatprep.subr.bf16.mxu0 0
      %619 = vmatpush1.bf16.msra.mxu0 0
      %620 = vmatprep.subr.bf16.mxu0 0
      %621 = vmatpush1.bf16.msra.mxu0 0
      %622 = vmatprep.subr.bf16.mxu0 0
      %623 = vmatpush1.bf16.msra.mxu0 0
      %624 = vmatprep.subr.bf16.mxu0 0
      %625 = vmatpush1.bf16.msra.mxu0 0
      %626 = vmatprep.subr.bf16.mxu0 0
      %627 = vmatpush1.bf16.msra.mxu0 0
      %628 = vmatprep.subr.bf16.mxu0 0
      %629 = vmatpush1.bf16.msra.mxu0 0
      %630 = vmatprep.subr.bf16.mxu0 0
      %631 = vmatpush1.bf16.msra.mxu0 0
      %632 = vmatprep.subr.bf16.mxu0 0
      %633 = vmatpush1.bf16.msra.mxu0 0
      %634 = vmatprep.subr.bf16.mxu0 0
      %635 = vmatpush1.bf16.msra.mxu0 0
      %636 = vmatprep.subr.bf16.mxu0 0
      %637 = vmatpush1.bf16.msra.mxu0 0
      %638 = vmatprep.subr.bf16.mxu0 0
      %639 = vmatpush1.bf16.msra.mxu0 0
      %640 = vmatprep.mubr.bf16.mxu0 0
      %641 = vmatmul.mubr.bf16.gmra.mrb[0].mxu0 %v603
      %v642 = vpop.f32.mrb[0].mxu0
      %v643 = vadd.f32 %v588, %v642
      %v644 = vpop.f32.mrb[0].mxu0
      %v645 = vpop.f32.mrb[0].mxu0
      %v646 = vadd.f32 %v588, %v645
      %v647 = vpop.f32.mrb[0].mxu0
      %648 = vmatprep.mubr.bf16.mxu0 0
      %649 = vmatmul.mubr.bf16.gmra.mrb[0].mxu0 %v606
      %v650 = vpop.f32.mrb[0].mxu0
      %v651 = vadd.f32 %v588, %v650
      %v652 = vpop.f32.mrb[0].mxu0
      %v653 = vpop.f32.mrb[0].mxu0
      %v654 = vpop.f32.mrb[0].mxu0
      %655 = vdwg.mxu0
      %s656 = scalar_lea.vmem %s4, 64
      %v657 = vld [vmem:[%s656] sm:$0xf]
      %v658 = vld [vmem:[%s656 + $0x4] sm:$0xf]
      %v659 = vld [vmem:[%s656 + $0x8] sm:$0xf]
      %v660 = vld [vmem:[%s656 + $0xc] sm:$0xf]
      %s661 = scalar_lea.vmem %s5, 4
      %v662 = vld [vmem:[%s661] sm:$0x1]
      %v664 = vlaneseq
      %v665 = vshrl.u32 %v664, 7
      %v666 = vsub.s32 0, %v665
      %v667 = vrot.slane %v662, %v666
      %v673 = vunpack.c.l.b16 %v657
      %v674 = vunpack.c.l.b16 %v658
      %v675 = vunpack.c.l.b16 %v659
      %v676 = vunpack.c.l.b16 %v660
      %v677 = vpack.c.b16 %v674, %v673
      %v678 = vpack.c.b16 %v676, %v675
      %681 = vmatprep.subr.bf16.mxu0 0
      %682 = vmatpush1.bf16.msra.mxu0 %v677
      %683 = vmatprep.subr.bf16.mxu0 0
      %684 = vmatpush1.bf16.msra.mxu0 %v678
      %685 = vmatprep.subr.bf16.mxu0 0
      %686 = vmatpush1.bf16.msra.mxu0 0
      %687 = vmatprep.subr.bf16.mxu0 0
      %688 = vmatpush1.bf16.msra.mxu0 0
      %689 = vmatprep.subr.bf16.mxu0 0
      %690 = vmatpush1.bf16.msra.mxu0 0
      %691 = vmatprep.subr.bf16.mxu0 0
      %692 = vmatpush1.bf16.msra.mxu0 0
      %693 = vmatprep.subr.bf16.mxu0 0
      %694 = vmatpush1.bf16.msra.mxu0 0
      %695 = vmatprep.subr.bf16.mxu0 0
      %696 = vmatpush1.bf16.msra.mxu0 0
      %697 = vmatprep.subr.bf16.mxu0 0
      %698 = vmatpush1.bf16.msra.mxu0 0
      %699 = vmatprep.subr.bf16.mxu0 0
      %700 = vmatpush1.bf16.msra.mxu0 0
      %701 = vmatprep.subr.bf16.mxu0 0
      %702 = vmatpush1.bf16.msra.mxu0 0
      %703 = vmatprep.subr.bf16.mxu0 0
      %704 = vmatpush1.bf16.msra.mxu0 0
      %705 = vmatprep.subr.bf16.mxu0 0
      %706 = vmatpush1.bf16.msra.mxu0 0
      %707 = vmatprep.subr.bf16.mxu0 0
      %708 = vmatpush1.bf16.msra.mxu0 0
      %709 = vmatprep.subr.bf16.mxu0 0
      %710 = vmatpush1.bf16.msra.mxu0 0
      %711 = vmatprep.subr.bf16.mxu0 0
      %712 = vmatpush1.bf16.msra.mxu0 0
      %713 = vmatprep.mubr.bf16.mxu0 0
      %714 = vmatmul.mubr.bf16.gmra.mrb[0].mxu0 %v603
      %v715 = vpop.f32.mrb[0].mxu0
      %v716 = vadd.f32 %v667, %v715
      %v717 = vpop.f32.mrb[0].mxu0
      %v718 = vpop.f32.mrb[0].mxu0
      %v719 = vadd.f32 %v667, %v718
      %v720 = vpop.f32.mrb[0].mxu0
      %721 = vmatprep.mubr.bf16.mxu0 0
      %722 = vmatmul.mubr.bf16.gmra.mrb[0].mxu0 %v606
      %v723 = vpop.f32.mrb[0].mxu0
      %v724 = vadd.f32 %v667, %v723
      %v725 = vpop.f32.mrb[0].mxu0
      %v726 = vpop.f32.mrb[0].mxu0
      %v727 = vpop.f32.mrb[0].mxu0
      %728 = vdwg.mxu0
      %s729 = scalar_lea.vmem %s4, 128
      %v730 = vld [vmem:[%s729] sm:$0xf]
      %v731 = vld [vmem:[%s729 + $0x4] sm:$0xf]
      %v732 = vld [vmem:[%s729 + $0x8] sm:$0xf]
      %v733 = vld [vmem:[%s729 + $0xc] sm:$0xf]
      %s734 = scalar_lea.vmem %s5, 8
      %v735 = vld [vmem:[%s734] sm:$0x1]
      %v737 = vlaneseq
      %v738 = vshrl.u32 %v737, 7
      %v739 = vsub.s32 0, %v738
      %v740 = vrot.slane %v735, %v739
      %v746 = vunpack.c.l.b16 %v730
      %v747 = vunpack.c.l.b16 %v731
      %v748 = vunpack.c.l.b16 %v732
      %v749 = vunpack.c.l.b16 %v733
      %v750 = vpack.c.b16 %v747, %v746
      %v751 = vpack.c.b16 %v749, %v748
      %754 = vmatprep.subr.bf16.mxu0 0
      %755 = vmatpush1.bf16.msra.mxu0 %v750
      %756 = vmatprep.subr.bf16.mxu0 0
      %757 = vmatpush1.bf16.msra.mxu0 %v751
      %758 = vmatprep.subr.bf16.mxu0 0
      %759 = vmatpush1.bf16.msra.mxu0 0
      %760 = vmatprep.subr.bf16.mxu0 0
      %761 = vmatpush1.bf16.msra.mxu0 0
      %762 = vmatprep.subr.bf16.mxu0 0
      %763 = vmatpush1.bf16.msra.mxu0 0
      %764 = vmatprep.subr.bf16.mxu0 0
      %765 = vmatpush1.bf16.msra.mxu0 0
      %766 = vmatprep.subr.bf16.mxu0 0
      %767 = vmatpush1.bf16.msra.mxu0 0
      %768 = vmatprep.subr.bf16.mxu0 0
      %769 = vmatpush1.bf16.msra.mxu0 0
      %770 = vmatprep.subr.bf16.mxu0 0
      %771 = vmatpush1.bf16.msra.mxu0 0
      %772 = vmatprep.subr.bf16.mxu0 0
      %773 = vmatpush1.bf16.msra.mxu0 0
      %774 = vmatprep.subr.bf16.mxu0 0
      %775 = vmatpush1.bf16.msra.mxu0 0
      %776 = vmatprep.subr.bf16.mxu0 0
      %777 = vmatpush1.bf16.msra.mxu0 0
      %778 = vmatprep.subr.bf16.mxu0 0
      %779 = vmatpush1.bf16.msra.mxu0 0
      %780 = vmatprep.subr.bf16.mxu0 0
      %781 = vmatpush1.bf16.msra.mxu0 0
      %782 = vmatprep.subr.bf16.mxu0 0
      %783 = vmatpush1.bf16.msra.mxu0 0
      %784 = vmatprep.subr.bf16.mxu0 0
      %785 = vmatpush1.bf16.msra.mxu0 0
      %786 = vmatprep.mubr.bf16.mxu0 0
      %787 = vmatmul.mubr.bf16.gmra.mrb[0].mxu0 %v603
      %v788 = vpop.f32.mrb[0].mxu0
      %v789 = vadd.f32 %v740, %v788
      %v790 = vpop.f32.mrb[0].mxu0
      %v791 = vpop.f32.mrb[0].mxu0
      %v792 = vadd.f32 %v740, %v791
      %v793 = vpop.f32.mrb[0].mxu0
      %794 = vmatprep.mubr.bf16.mxu0 0
      %795 = vmatmul.mubr.bf16.gmra.mrb[0].mxu0 %v606
      %v796 = vpop.f32.mrb[0].mxu0
      %v797 = vadd.f32 %v740, %v796
      %v798 = vpop.f32.mrb[0].mxu0
      %v799 = vpop.f32.mrb[0].mxu0
      %v800 = vpop.f32.mrb[0].mxu0
      %801 = vdwg.mxu0
      %vm802 = vcmask 64512
      %v804 = vsel %vm802, %v643, 0
      %v807 = vsel %vm802, %v646, 0
      %v810 = vsel %vm802, %v651, 0
      %v813 = vsel %vm802, %v716, 0
      %v816 = vsel %vm802, %v719, 0
      %v819 = vsel %vm802, %v724, 0
      %821 = vmatprep.subr.mxu0 0.0
      %822 = vmatpush1.xpose.msra.mxu0 %v813
      %823 = vmatprep.subr.mxu0 0.0
      %824 = vmatpush1.xpose.msra.mxu0 %v816
      %825 = vmatprep.subr.mxu0 0.0
      %826 = vmatpush1.xpose.msra.mxu0 %v819
      %827 = vmatprep.subr.mxu0 0.0
      %828 = vmatpush1.xpose.msra.mxu0 0.0
      %829 = vmatprep.subr.mxu0 0.0
      %830 = vmatpush1.xpose.msra.mxu0 0.0
      %831 = vmatprep.subr.mxu0 0.0
      %832 = vmatpush1.xpose.msra.mxu0 0.0
      %833 = vmatprep.subr.mxu0 0.0
      %834 = vmatpush1.xpose.msra.mxu0 0.0
      %835 = vmatprep.subr.mxu0 0.0
      %836 = vmatpush1.xpose.msra.mxu0 0.0
      %837 = vmatprep.subr.mxu0 0.0
      %838 = vmatpush1.xpose.msra.mxu0 0.0
      %839 = vmatprep.subr.mxu0 0.0
      %840 = vmatpush1.xpose.msra.mxu0 0.0
      %841 = vmatprep.subr.mxu0 0.0
      %842 = vmatpush1.xpose.msra.mxu0 0.0
      %843 = vmatprep.subr.mxu0 0.0
      %844 = vmatpush1.xpose.msra.mxu0 0.0
      %845 = vmatprep.subr.mxu0 0.0
      %846 = vmatpush1.xpose.msra.mxu0 0.0
      %847 = vmatprep.subr.mxu0 0.0
      %848 = vmatpush1.xpose.msra.mxu0 0.0
      %849 = vmatprep.subr.mxu0 0.0
      %850 = vmatpush1.xpose.msra.mxu0 0.0
      %851 = vmatprep.subr.mxu0 0.0
      %852 = vmatpush1.xpose.msra.mxu0 0.0
      %853 = vmatprep.subr.mxu0 0.0
      %854 = vmatpush1.xpose.msra.mxu0 0.0
      %855 = vmatprep.subr.mxu0 0.0
      %856 = vmatpush1.xpose.msra.mxu0 0.0
      %857 = vmatprep.subr.mxu0 0.0
      %858 = vmatpush1.xpose.msra.mxu0 0.0
      %859 = vmatprep.subr.mxu0 0.0
      %860 = vmatpush1.xpose.msra.mxu0 0.0
      %861 = vmatprep.subr.mxu0 0.0
      %862 = vmatpush1.xpose.msra.mxu0 0.0
      %863 = vmatprep.subr.mxu0 0.0
      %864 = vmatpush1.xpose.msra.mxu0 0.0
      %865 = vmatprep.subr.mxu0 0.0
      %866 = vmatpush1.xpose.msra.mxu0 0.0
      %867 = vmatprep.subr.mxu0 0.0
      %868 = vmatpush1.xpose.msra.mxu0 0.0
      %869 = vmatprep.subr.mxu0 0.0
      %870 = vmatpush1.xpose.msra.mxu0 0.0
      %871 = vmatprep.subr.mxu0 0.0
      %872 = vmatpush1.xpose.msra.mxu0 0.0
      %873 = vmatprep.subr.mxu0 0.0
      %874 = vmatpush1.xpose.msra.mxu0 0.0
      %875 = vmatprep.subr.mxu0 0.0
      %876 = vmatpush1.xpose.msra.mxu0 0.0
      %877 = vmatprep.subr.mxu0 0.0
      %878 = vmatpush1.xpose.msra.mxu0 0.0
      %879 = vmatprep.subr.mxu0 0.0
      %880 = vmatpush1.xpose.msra.mxu0 0.0
      %881 = vmatprep.subr.mxu0 0.0
      %882 = vmatpush1.xpose.msra.mxu0 0.0
      %883 = vmatprep.subr.mxu0 0.0
      %884 = vmatpush1.xpose.msra.mxu0 0.0
      %885 = vmatprep.mubr.f32.mxu0 0.0
      %886 = vmatmul.mubr.f32.gmra.mrb[0].mxu0 %v804
      %v887 = vpop.f32.mrb[0].mxu0
      %v888 = vadd.f32 0.0, %v887
      %v889 = vpop.f32.mrb[0].mxu0
      %890 = vmatprep.mubr.f32.mxu0 0.0
      %891 = vmatmul.mubr.f32.gmra.mrb[0].mxu0 %v807
      %v892 = vpop.f32.mrb[0].mxu0
      %v893 = vadd.f32 0.0, %v892
      %v894 = vpop.f32.mrb[0].mxu0
      %895 = vmatprep.mubr.f32.mxu0 0.0
      %896 = vmatmul.mubr.f32.gmra.mrb[0].mxu0 %v810
      %v897 = vpop.f32.mrb[0].mxu0
      %v898 = vadd.f32 0.0, %v897
      %v899 = vpop.f32.mrb[0].mxu0
      %900 = vdwg.mxu0
      %v901 = vmul.f32 %v888, 0.35355338
      %v902 = vmul.f32 %v893, 0.35355338
      %v903 = vmul.f32 %v898, 0.35355338
      %v904 = vadd.f32 %v901, %v576
      %v905 = vadd.f32 %v902, %v577
      %v906 = vadd.f32 %v903, %v578
      %vm907 = vcmask 146432
      %v908 = vsel %vm907, %v904, -inf
      %909 = vmax.xlane.f32.xlu0 %v908
      %v910 = vpop.xlane.xlu0 %909
      %v911 = vsel %vm907, %v905, -inf
      %912 = vmax.xlane.f32.xlu0 %v911
      %v913 = vpop.xlane.xlu0 %912
      %vm914 = vcmask 140288
      %v915 = vsel %vm914, %v906, -inf
      %916 = vmax.xlane.f32.xlu0 %v915
      %v917 = vpop.xlane.xlu0 %916
      %v918 = vsub.f32 %v904, %v910
      %v919 = vsub.f32 %v905, %v913
      %v920 = vsub.f32 %v906, %v917
      %v921 = vmul.f32 %v918, 1.442695
      %v922 = vpow.pop %v921
      %v923 = vmul.f32 %v919, 1.442695
      %v924 = vpow.pop %v923
      %v925 = vmul.f32 %v920, 1.442695
      %v926 = vpow.pop %v925
      %v927 = vsel %vm907, %v922, 0.0
      %928 = vadd.xlane.f32.xlu0 %v927
      %v929 = vpop.xlane.xlu0 %928
      %v930 = vsel %vm907, %v924, 0.0
      %931 = vadd.xlane.f32.xlu0 %v930
      %v932 = vpop.xlane.xlu0 %931
      %v933 = vsel %vm914, %v926, 0.0
      %934 = vadd.xlane.f32.xlu0 %v933
      %v935 = vpop.xlane.xlu0 %934
      %v936 = vrcp.pop %v929
      %v937 = vrcp.pop %v932
      %v938 = vrcp.pop %v935
      %v939 = vmul.f32 %v922, %v936
      %v940 = vmul.f32 %v924, %v937
      %v941 = vmul.f32 %v926, %v938
      %v943 = vsel %vm907, %v939, 0
      %v946 = vsel %vm907, %v940, 0
      %v949 = vsel %vm907, %v941, 0
      %vm951 = vcmask 1041408
      %v953 = vsel %vm951, %v797, 0
      %955 = vmatprep.subr.mxu0 0.0
      %956 = vmatpush1.msra.mxu0 %v789
      %957 = vmatprep.subr.mxu0 0.0
      %958 = vmatpush1.msra.mxu0 %v792
      %959 = vmatprep.subr.mxu0 0.0
      %960 = vmatpush1.msra.mxu0 %v953
      %961 = vmatprep.subr.mxu0 0.0
      %962 = vmatpush1.msra.mxu0 0.0
      %963 = vmatprep.subr.mxu0 0.0
      %964 = vmatpush1.msra.mxu0 0.0
      %965 = vmatprep.subr.mxu0 0.0
      %966 = vmatpush1.msra.mxu0 0.0
      %967 = vmatprep.subr.mxu0 0.0
      %968 = vmatpush1.msra.mxu0 0.0
      %969 = vmatprep.subr.mxu0 0.0
      %970 = vmatpush1.msra.mxu0 0.0
      %971 = vmatprep.subr.mxu0 0.0
      %972 = vmatpush1.msra.mxu0 0.0
      %973 = vmatprep.subr.mxu0 0.0
      %974 = vmatpush1.msra.mxu0 0.0
      %975 = vmatprep.subr.mxu0 0.0
      %976 = vmatpush1.msra.mxu0 0.0
      %977 = vmatprep.subr.mxu0 0.0
      %978 = vmatpush1.msra.mxu0 0.0
      %979 = vmatprep.subr.mxu0 0.0
      %980 = vmatpush1.msra.mxu0 0.0
      %981 = vmatprep.subr.mxu0 0.0
      %982 = vmatpush1.msra.mxu0 0.0
      %983 = vmatprep.subr.mxu0 0.0
      %984 = vmatpush1.msra.mxu0 0.0
      %985 = vmatprep.subr.mxu0 0.0
      %986 = vmatpush1.msra.mxu0 0.0
      %987 = vmatprep.subr.mxu0 0.0
      %988 = vmatpush1.msra.mxu0 0.0
      %989 = vmatprep.subr.mxu0 0.0
      %990 = vmatpush1.msra.mxu0 0.0
      %991 = vmatprep.subr.mxu0 0.0
      %992 = vmatpush1.msra.mxu0 0.0
      %993 = vmatprep.subr.mxu0 0.0
      %994 = vmatpush1.msra.mxu0 0.0
      %995 = vmatprep.subr.mxu0 0.0
      %996 = vmatpush1.msra.mxu0 0.0
      %997 = vmatprep.subr.mxu0 0.0
      %998 = vmatpush1.msra.mxu0 0.0
      %999 = vmatprep.subr.mxu0 0.0
      %1000 = vmatpush1.msra.mxu0 0.0
      %1001 = vmatprep.subr.mxu0 0.0
      %1002 = vmatpush1.msra.mxu0 0.0
      %1003 = vmatprep.subr.mxu0 0.0
      %1004 = vmatpush1.msra.mxu0 0.0
      %1005 = vmatprep.subr.mxu0 0.0
      %1006 = vmatpush1.msra.mxu0 0.0
      %1007 = vmatprep.subr.mxu0 0.0
      %1008 = vmatpush1.msra.mxu0 0.0
      %1009 = vmatprep.subr.mxu0 0.0
      %1010 = vmatpush1.msra.mxu0 0.0
      %1011 = vmatprep.subr.mxu0 0.0
      %1012 = vmatpush1.msra.mxu0 0.0
      %1013 = vmatprep.subr.mxu0 0.0
      %1014 = vmatpush1.msra.mxu0 0.0
      %1015 = vmatprep.subr.mxu0 0.0
      %1016 = vmatpush1.msra.mxu0 0.0
      %1017 = vmatprep.subr.mxu0 0.0
      %1018 = vmatpush1.msra.mxu0 0.0
      %1019 = vmatprep.mubr.f32.mxu0 0.0
      %1020 = vmatmul.mubr.f32.gmra.mrb[0].mxu0 %v943
      %v1021 = vpop.f32.mrb[0].mxu0
      %v1022 = vadd.f32 0.0, %v1021
      %v1023 = vpop.f32.mrb[0].mxu0
      %1024 = vmatprep.mubr.f32.mxu0 0.0
      %1025 = vmatmul.mubr.f32.gmra.mrb[0].mxu0 %v946
      %v1026 = vpop.f32.mrb[0].mxu0
      %v1027 = vadd.f32 0.0, %v1026
      %v1028 = vpop.f32.mrb[0].mxu0
      %1029 = vmatprep.mubr.f32.mxu0 0.0
      %1030 = vmatmul.mubr.f32.gmra.mrb[0].mxu0 %v949
      %v1031 = vpop.f32.mrb[0].mxu0
      %v1032 = vadd.f32 0.0, %v1031
      %v1033 = vpop.f32.mrb[0].mxu0
      %1034 = vdwg.mxu0
      %v1035 = vpack.c.bf16 %v1027, %v1022
      %v1036 = vpack.c.bf16 %v1032, %v1032
      %v1037 = vld [vmem:[%s6] sm:$0xf]
      %s1038 = scalar_lea.vmem %s4, 16
      %v1039 = vld [vmem:[%s1038] sm:$0xf]
      %v1040 = vld [vmem:[%s1038 + $0x4] sm:$0xf]
      %v1041 = vld [vmem:[%s1038 + $0x8] sm:$0xf]
      %v1042 = vld [vmem:[%s1038 + $0xc] sm:$0xf]
      %s1043 = scalar_lea.vmem %s5, 1
      %v1044 = vld [vmem:[%s1043] sm:$0x1]
      %v1046 = vlaneseq
      %v1047 = vshrl.u32 %v1046, 7
      %v1048 = vsub.s32 0, %v1047
      %v1049 = vrot.slane %v1044, %v1048
      %v1055 = vunpack.c.l.b16 %v1039
      %v1056 = vunpack.c.l.b16 %v1040
      %v1057 = vunpack.c.l.b16 %v1041
      %v1058 = vunpack.c.l.b16 %v1042
      %v1059 = vpack.c.b16 %v1056, %v1055
      %v1060 = vpack.c.b16 %v1058, %v1057
      %1063 = vmatprep.subr.bf16.mxu0 0
      %1064 = vmatpush1.bf16.msra.mxu0 %v1059
      %1065 = vmatprep.subr.bf16.mxu0 0
      %1066 = vmatpush1.bf16.msra.mxu0 %v1060
      %1067 = vmatprep.subr.bf16.mxu0 0
      %1068 = vmatpush1.bf16.msra.mxu0 0
      %1069 = vmatprep.subr.bf16.mxu0 0
      %1070 = vmatpush1.bf16.msra.mxu0 0
      %1071 = vmatprep.subr.bf16.mxu0 0
      %1072 = vmatpush1.bf16.msra.mxu0 0
      %1073 = vmatprep.subr.bf16.mxu0 0
      %1074 = vmatpush1.bf16.msra.mxu0 0
      %1075 = vmatprep.subr.bf16.mxu0 0
      %1076 = vmatpush1.bf16.msra.mxu0 0
      %1077 = vmatprep.subr.bf16.mxu0 0
      %1078 = vmatpush1.bf16.msra.mxu0 0
      %1079 = vmatprep.subr.bf16.mxu0 0
      %1080 = vmatpush1.bf16.msra.mxu0 0
      %1081 = vmatprep.subr.bf16.mxu0 0
      %1082 = vmatpush1.bf16.msra.mxu0 0
      %1083 = vmatprep.subr.bf16.mxu0 0
      %1084 = vmatpush1.bf16.msra.mxu0 0
      %1085 = vmatprep.subr.bf16.mxu0 0
      %1086 = vmatpush1.bf16.msra.mxu0 0
      %1087 = vmatprep.subr.bf16.mxu0 0
      %1088 = vmatpush1.bf16.msra.mxu0 0
      %1089 = vmatprep.subr.bf16.mxu0 0
      %1090 = vmatpush1.bf16.msra.mxu0 0
      %1091 = vmatprep.subr.bf16.mxu0 0
      %1092 = vmatpush1.bf16.msra.mxu0 0
      %1093 = vmatprep.subr.bf16.mxu0 0
      %1094 = vmatpush1.bf16.msra.mxu0 0
      %1095 = vmatprep.mubr.bf16.mxu0 0
      %1096 = vmatmul.mubr.bf16.gmra.mrb[0].mxu0 %v603
      %v1097 = vpop.f32.mrb[0].mxu0
      %v1098 = vadd.f32 %v1049, %v1097
      %v1099 = vpop.f32.mrb[0].mxu0
      %v1100 = vpop.f32.mrb[0].mxu0
      %v1101 = vadd.f32 %v1049, %v1100
      %v1102 = vpop.f32.mrb[0].mxu0
      %1103 = vmatprep.mubr.bf16.mxu0 0
      %1104 = vmatmul.mubr.bf16.gmra.mrb[0].mxu0 %v606
      %v1105 = vpop.f32.mrb[0].mxu0
      %v1106 = vadd.f32 %v1049, %v1105
      %v1107 = vpop.f32.mrb[0].mxu0
      %v1108 = vpop.f32.mrb[0].mxu0
      %v1109 = vpop.f32.mrb[0].mxu0
      %1110 = vdwg.mxu0
      %s1111 = scalar_lea.vmem %s4, 80
      %v1112 = vld [vmem:[%s1111] sm:$0xf]
      %v1113 = vld [vmem:[%s1111 + $0x4] sm:$0xf]
      %v1114 = vld [vmem:[%s1111 + $0x8] sm:$0xf]
      %v1115 = vld [vmem:[%s1111 + $0xc] sm:$0xf]
      %s1116 = scalar_lea.vmem %s5, 5
      %v1117 = vld [vmem:[%s1116] sm:$0x1]
      %v1119 = vlaneseq
      %v1120 = vshrl.u32 %v1119, 7
      %v1121 = vsub.s32 0, %v1120
      %v1122 = vrot.slane %v1117, %v1121
      %v1128 = vunpack.c.l.b16 %v1112
      %v1129 = vunpack.c.l.b16 %v1113
      %v1130 = vunpack.c.l.b16 %v1114
      %v1131 = vunpack.c.l.b16 %v1115
      %v1132 = vpack.c.b16 %v1129, %v1128
      %v1133 = vpack.c.b16 %v1131, %v1130
      %1136 = vmatprep.subr.bf16.mxu0 0
      %1137 = vmatpush1.bf16.msra.mxu0 %v1132
      %1138 = vmatprep.subr.bf16.mxu0 0
      %1139 = vmatpush1.bf16.msra.mxu0 %v1133
      %1140 = vmatprep.subr.bf16.mxu0 0
      %1141 = vmatpush1.bf16.msra.mxu0 0
      %1142 = vmatprep.subr.bf16.mxu0 0
      %1143 = vmatpush1.bf16.msra.mxu0 0
      %1144 = vmatprep.subr.bf16.mxu0 0
      %1145 = vmatpush1.bf16.msra.mxu0 0
      %1146 = vmatprep.subr.bf16.mxu0 0
      %1147 = vmatpush1.bf16.msra.mxu0 0
      %1148 = vmatprep.subr.bf16.mxu0 0
      %1149 = vmatpush1.bf16.msra.mxu0 0
      %1150 = vmatprep.subr.bf16.mxu0 0
      %1151 = vmatpush1.bf16.msra.mxu0 0
      %1152 = vmatprep.subr.bf16.mxu0 0
      %1153 = vmatpush1.bf16.msra.mxu0 0
      %1154 = vmatprep.subr.bf16.mxu0 0
      %1155 = vmatpush1.bf16.msra.mxu0 0
      %1156 = vmatprep.subr.bf16.mxu0 0
      %1157 = vmatpush1.bf16.msra.mxu0 0
      %1158 = vmatprep.subr.bf16.mxu0 0
      %1159 = vmatpush1.bf16.msra.mxu0 0
      %1160 = vmatprep.subr.bf16.mxu0 0
      %1161 = vmatpush1.bf16.msra.mxu0 0
      %1162 = vmatprep.subr.bf16.mxu0 0
      %1163 = vmatpush1.bf16.msra.mxu0 0
      %1164 = vmatprep.subr.bf16.mxu0 0
      %1165 = vmatpush1.bf16.msra.mxu0 0
      %1166 = vmatprep.subr.bf16.mxu0 0
      %1167 = vmatpush1.bf16.msra.mxu0 0
      %1168 = vmatprep.mubr.bf16.mxu0 0
      %1169 = vmatmul.mubr.bf16.gmra.mrb[0].mxu0 %v603
      %v1170 = vpop.f32.mrb[0].mxu0
      %v1171 = vadd.f32 %v1122, %v1170
      %v1172 = vpop.f32.mrb[0].mxu0
      %v1173 = vpop.f32.mrb[0].mxu0
      %v1174 = vadd.f32 %v1122, %v1173
      %v1175 = vpop.f32.mrb[0].mxu0
      %1176 = vmatprep.mubr.bf16.mxu0 0
      %1177 = vmatmul.mubr.bf16.gmra.mrb[0].mxu0 %v606
      %v1178 = vpop.f32.mrb[0].mxu0
      %v1179 = vadd.f32 %v1122, %v1178
      %v1180 = vpop.f32.mrb[0].mxu0
      %v1181 = vpop.f32.mrb[0].mxu0
      %v1182 = vpop.f32.mrb[0].mxu0
      %1183 = vdwg.mxu0
      %s1184 = scalar_lea.vmem %s4, 144
      %v1185 = vld [vmem:[%s1184] sm:$0xf]
      %v1186 = vld [vmem:[%s1184 + $0x4] sm:$0xf]
      %v1187 = vld [vmem:[%s1184 + $0x8] sm:$0xf]
      %v1188 = vld [vmem:[%s1184 + $0xc] sm:$0xf]
      %s1189 = scalar_lea.vmem %s5, 9
      %v1190 = vld [vmem:[%s1189] sm:$0x1]
      %v1192 = vlaneseq
      %v1193 = vshrl.u32 %v1192, 7
      %v1194 = vsub.s32 0, %v1193
      %v1195 = vrot.slane %v1190, %v1194
      %v1201 = vunpack.c.l.b16 %v1185
      %v1202 = vunpack.c.l.b16 %v1186
      %v1203 = vunpack.c.l.b16 %v1187
      %v1204 = vunpack.c.l.b16 %v1188
      %v1205 = vpack.c.b16 %v1202, %v1201
      %v1206 = vpack.c.b16 %v1204, %v1203
      %1209 = vmatprep.subr.bf16.mxu0 0
      %1210 = vmatpush1.bf16.msra.mxu0 %v1205
      %1211 = vmatprep.subr.bf16.mxu0 0
      %1212 = vmatpush1.bf16.msra.mxu0 %v1206
      %1213 = vmatprep.subr.bf16.mxu0 0
      %1214 = vmatpush1.bf16.msra.mxu0 0
      %1215 = vmatprep.subr.bf16.mxu0 0
      %1216 = vmatpush1.bf16.msra.mxu0 0
      %1217 = vmatprep.subr.bf16.mxu0 0
      %1218 = vmatpush1.bf16.msra.mxu0 0
      %1219 = vmatprep.subr.bf16.mxu0 0
      %1220 = vmatpush1.bf16.msra.mxu0 0
      %1221 = vmatprep.subr.bf16.mxu0 0
      %1222 = vmatpush1.bf16.msra.mxu0 0
      %1223 = vmatprep.subr.bf16.mxu0 0
      %1224 = vmatpush1.bf16.msra.mxu0 0
      %1225 = vmatprep.subr.bf16.mxu0 0
      %1226 = vmatpush1.bf16.msra.mxu0 0
      %1227 = vmatprep.subr.bf16.mxu0 0
      %1228 = vmatpush1.bf16.msra.mxu0 0
      %1229 = vmatprep.subr.bf16.mxu0 0
      %1230 = vmatpush1.bf16.msra.mxu0 0
      %1231 = vmatprep.subr.bf16.mxu0 0
      %1232 = vmatpush1.bf16.msra.mxu0 0
      %1233 = vmatprep.subr.bf16.mxu0 0
      %1234 = vmatpush1.bf16.msra.mxu0 0
      %1235 = vmatprep.subr.bf16.mxu0 0
      %1236 = vmatpush1.bf16.msra.mxu0 0
      %1237 = vmatprep.subr.bf16.mxu0 0
      %1238 = vmatpush1.bf16.msra.mxu0 0
      %1239 = vmatprep.subr.bf16.mxu0 0
      %1240 = vmatpush1.bf16.msra.mxu0 0
      %1241 = vmatprep.mubr.bf16.mxu0 0
      %1242 = vmatmul.mubr.bf16.gmra.mrb[0].mxu0 %v603
      %v1243 = vpop.f32.mrb[0].mxu0
      %v1244 = vadd.f32 %v1195, %v1243
      %v1245 = vpop.f32.mrb[0].mxu0
      %v1246 = vpop.f32.mrb[0].mxu0
      %v1247 = vadd.f32 %v1195, %v1246
      %v1248 = vpop.f32.mrb[0].mxu0
      %1249 = vmatprep.mubr.bf16.mxu0 0
      %1250 = vmatmul.mubr.bf16.gmra.mrb[0].mxu0 %v606
      %v1251 = vpop.f32.mrb[0].mxu0
      %v1252 = vadd.f32 %v1195, %v1251
      %v1253 = vpop.f32.mrb[0].mxu0
      %v1254 = vpop.f32.mrb[0].mxu0
      %v1255 = vpop.f32.mrb[0].mxu0
      %1256 = vdwg.mxu0
      %v1258 = vsel %vm802, %v1098, 0
      %v1261 = vsel %vm802, %v1101, 0
      %v1264 = vsel %vm802, %v1106, 0
      %v1267 = vsel %vm802, %v1171, 0
      %v1270 = vsel %vm802, %v1174, 0
      %v1273 = vsel %vm802, %v1179, 0
      %1275 = vmatprep.subr.mxu0 0.0
      %1276 = vmatpush1.xpose.msra.mxu0 %v1267
      %1277 = vmatprep.subr.mxu0 0.0
      %1278 = vmatpush1.xpose.msra.mxu0 %v1270
      %1279 = vmatprep.subr.mxu0 0.0
      %1280 = vmatpush1.xpose.msra.mxu0 %v1273
      %1281 = vmatprep.subr.mxu0 0.0
      %1282 = vmatpush1.xpose.msra.mxu0 0.0
      %1283 = vmatprep.subr.mxu0 0.0
      %1284 = vmatpush1.xpose.msra.mxu0 0.0
      %1285 = vmatprep.subr.mxu0 0.0
      %1286 = vmatpush1.xpose.msra.mxu0 0.0
      %1287 = vmatprep.subr.mxu0 0.0
      %1288 = vmatpush1.xpose.msra.mxu0 0.0
      %1289 = vmatprep.subr.mxu0 0.0
      %1290 = vmatpush1.xpose.msra.mxu0 0.0
      %1291 = vmatprep.subr.mxu0 0.0
      %1292 = vmatpush1.xpose.msra.mxu0 0.0
      %1293 = vmatprep.subr.mxu0 0.0
      %1294 = vmatpush1.xpose.msra.mxu0 0.0
      %1295 = vmatprep.subr.mxu0 0.0
      %1296 = vmatpush1.xpose.msra.mxu0 0.0
      %1297 = vmatprep.subr.mxu0 0.0
      %1298 = vmatpush1.xpose.msra.mxu0 0.0
      %1299 = vmatprep.subr.mxu0 0.0
      %1300 = vmatpush1.xpose.msra.mxu0 0.0
      %1301 = vmatprep.subr.mxu0 0.0
      %1302 = vmatpush1.xpose.msra.mxu0 0.0
      %1303 = vmatprep.subr.mxu0 0.0
      %1304 = vmatpush1.xpose.msra.mxu0 0.0
      %1305 = vmatprep.subr.mxu0 0.0
      %1306 = vmatpush1.xpose.msra.mxu0 0.0
      %1307 = vmatprep.subr.mxu0 0.0
      %1308 = vmatpush1.xpose.msra.mxu0 0.0
      %1309 = vmatprep.subr.mxu0 0.0
      %1310 = vmatpush1.xpose.msra.mxu0 0.0
      %1311 = vmatprep.subr.mxu0 0.0
      %1312 = vmatpush1.xpose.msra.mxu0 0.0
      %1313 = vmatprep.subr.mxu0 0.0
      %1314 = vmatpush1.xpose.msra.mxu0 0.0
      %1315 = vmatprep.subr.mxu0 0.0
      %1316 = vmatpush1.xpose.msra.mxu0 0.0
      %1317 = vmatprep.subr.mxu0 0.0
      %1318 = vmatpush1.xpose.msra.mxu0 0.0
      %1319 = vmatprep.subr.mxu0 0.0
      %1320 = vmatpush1.xpose.msra.mxu0 0.0
      %1321 = vmatprep.subr.mxu0 0.0
      %1322 = vmatpush1.xpose.msra.mxu0 0.0
      %1323 = vmatprep.subr.mxu0 0.0
      %1324 = vmatpush1.xpose.msra.mxu0 0.0
      %1325 = vmatprep.subr.mxu0 0.0
      %1326 = vmatpush1.xpose.msra.mxu0 0.0
      %1327 = vmatprep.subr.mxu0 0.0
      %1328 = vmatpush1.xpose.msra.mxu0 0.0
      %1329 = vmatprep.subr.mxu0 0.0
      %1330 = vmatpush1.xpose.msra.mxu0 0.0
      %1331 = vmatprep.subr.mxu0 0.0
      %1332 = vmatpush1.xpose.msra.mxu0 0.0
      %1333 = vmatprep.subr.mxu0 0.0
      %1334 = vmatpush1.xpose.msra.mxu0 0.0
      %1335 = vmatprep.subr.mxu0 0.0
      %1336 = vmatpush1.xpose.msra.mxu0 0.0
      %1337 = vmatprep.subr.mxu0 0.0
      %1338 = vmatpush1.xpose.msra.mxu0 0.0
      %1339 = vmatprep.mubr.f32.mxu0 0.0
      %1340 = vmatmul.mubr.f32.gmra.mrb[0].mxu0 %v1258
      %v1341 = vpop.f32.mrb[0].mxu0
      %v1342 = vadd.f32 0.0, %v1341
      %v1343 = vpop.f32.mrb[0].mxu0
      %1344 = vmatprep.mubr.f32.mxu0 0.0
      %1345 = vmatmul.mubr.f32.gmra.mrb[0].mxu0 %v1261
      %v1346 = vpop.f32.mrb[0].mxu0
      %v1347 = vadd.f32 0.0, %v1346
      %v1348 = vpop.f32.mrb[0].mxu0
      %1349 = vmatprep.mubr.f32.mxu0 0.0
      %1350 = vmatmul.mubr.f32.gmra.mrb[0].mxu0 %v1264
      %v1351 = vpop.f32.mrb[0].mxu0
      %v1352 = vadd.f32 0.0, %v1351
      %v1353 = vpop.f32.mrb[0].mxu0
      %1354 = vdwg.mxu0
      %v1355 = vmul.f32 %v1342, 0.35355338
      %v1356 = vmul.f32 %v1347, 0.35355338
      %v1357 = vmul.f32 %v1352, 0.35355338
      %v1358 = vadd.f32 %v1355, %v576
      %v1359 = vadd.f32 %v1356, %v577
      %v1360 = vadd.f32 %v1357, %v578
      %v1361 = vsel %vm907, %v1358, -inf
      %1362 = vmax.xlane.f32.xlu0 %v1361
      %v1363 = vpop.xlane.xlu0 %1362
      %v1364 = vsel %vm907, %v1359, -inf
      %1365 = vmax.xlane.f32.xlu0 %v1364
      %v1366 = vpop.xlane.xlu0 %1365
      %v1367 = vsel %vm914, %v1360, -inf
      %1368 = vmax.xlane.f32.xlu0 %v1367
      %v1369 = vpop.xlane.xlu0 %1368
      %v1370 = vsub.f32 %v1358, %v1363
      %v1371 = vsub.f32 %v1359, %v1366
      %v1372 = vsub.f32 %v1360, %v1369
      %v1373 = vmul.f32 %v1370, 1.442695
      %v1374 = vpow.pop %v1373
      %v1375 = vmul.f32 %v1371, 1.442695
      %v1376 = vpow.pop %v1375
      %v1377 = vmul.f32 %v1372, 1.442695
      %v1378 = vpow.pop %v1377
      %v1379 = vsel %vm907, %v1374, 0.0
      %1380 = vadd.xlane.f32.xlu0 %v1379
      %v1381 = vpop.xlane.xlu0 %1380
      %v1382 = vsel %vm907, %v1376, 0.0
      %1383 = vadd.xlane.f32.xlu0 %v1382
      %v1384 = vpop.xlane.xlu0 %1383
      %v1385 = vsel %vm914, %v1378, 0.0
      %1386 = vadd.xlane.f32.xlu0 %v1385
      %v1387 = vpop.xlane.xlu0 %1386
      %v1388 = vrcp.pop %v1381
      %v1389 = vrcp.pop %v1384
      %v1390 = vrcp.pop %v1387
      %v1391 = vmul.f32 %v1374, %v1388
      %v1392 = vmul.f32 %v1376, %v1389
      %v1393 = vmul.f32 %v1378, %v1390
      %v1395 = vsel %vm907, %v1391, 0
      %v1398 = vsel %vm907, %v1392, 0
      %v1401 = vsel %vm907, %v1393, 0
      %v1404 = vsel %vm951, %v1252, 0
      %1406 = vmatprep.subr.mxu0 0.0
      %1407 = vmatpush1.msra.mxu0 %v1244
      %1408 = vmatprep.subr.mxu0 0.0
      %1409 = vmatpush1.msra.mxu0 %v1247
      %1410 = vmatprep.subr.mxu0 0.0
      %1411 = vmatpush1.msra.mxu0 %v1404
      %1412 = vmatprep.subr.mxu0 0.0
      %1413 = vmatpush1.msra.mxu0 0.0
      %1414 = vmatprep.subr.mxu0 0.0
      %1415 = vmatpush1.msra.mxu0 0.0
      %1416 = vmatprep.subr.mxu0 0.0
      %1417 = vmatpush1.msra.mxu0 0.0
      %1418 = vmatprep.subr.mxu0 0.0
      %1419 = vmatpush1.msra.mxu0 0.0
      %1420 = vmatprep.subr.mxu0 0.0
      %1421 = vmatpush1.msra.mxu0 0.0
      %1422 = vmatprep.subr.mxu0 0.0
      %1423 = vmatpush1.msra.mxu0 0.0
      %1424 = vmatprep.subr.mxu0 0.0
      %1425 = vmatpush1.msra.mxu0 0.0
      %1426 = vmatprep.subr.mxu0 0.0
      %1427 = vmatpush1.msra.mxu0 0.0
      %1428 = vmatprep.subr.mxu0 0.0
      %1429 = vmatpush1.msra.mxu0 0.0
      %1430 = vmatprep.subr.mxu0 0.0
      %1431 = vmatpush1.msra.mxu0 0.0
      %1432 = vmatprep.subr.mxu0 0.0
      %1433 = vmatpush1.msra.mxu0 0.0
      %1434 = vmatprep.subr.mxu0 0.0
      %1435 = vmatpush1.msra.mxu0 0.0
      %1436 = vmatprep.subr.mxu0 0.0
      %1437 = vmatpush1.msra.mxu0 0.0
      %1438 = vmatprep.subr.mxu0 0.0
      %1439 = vmatpush1.msra.mxu0 0.0
      %1440 = vmatprep.subr.mxu0 0.0
      %1441 = vmatpush1.msra.mxu0 0.0
      %1442 = vmatprep.subr.mxu0 0.0
      %1443 = vmatpush1.msra.mxu0 0.0
      %1444 = vmatprep.subr.mxu0 0.0
      %1445 = vmatpush1.msra.mxu0 0.0
      %1446 = vmatprep.subr.mxu0 0.0
      %1447 = vmatpush1.msra.mxu0 0.0
      %1448 = vmatprep.subr.mxu0 0.0
      %1449 = vmatpush1.msra.mxu0 0.0
      %1450 = vmatprep.subr.mxu0 0.0
      %1451 = vmatpush1.msra.mxu0 0.0
      %1452 = vmatprep.subr.mxu0 0.0
      %1453 = vmatpush1.msra.mxu0 0.0
      %1454 = vmatprep.subr.mxu0 0.0
      %1455 = vmatpush1.msra.mxu0 0.0
      %1456 = vmatprep.subr.mxu0 0.0
      %1457 = vmatpush1.msra.mxu0 0.0
      %1458 = vmatprep.subr.mxu0 0.0
      %1459 = vmatpush1.msra.mxu0 0.0
      %1460 = vmatprep.subr.mxu0 0.0
      %1461 = vmatpush1.msra.mxu0 0.0
      %1462 = vmatprep.subr.mxu0 0.0
      %1463 = vmatpush1.msra.mxu0 0.0
      %1464 = vmatprep.subr.mxu0 0.0
      %1465 = vmatpush1.msra.mxu0 0.0
      %1466 = vmatprep.subr.mxu0 0.0
      %1467 = vmatpush1.msra.mxu0 0.0
      %1468 = vmatprep.subr.mxu0 0.0
      %1469 = vmatpush1.msra.mxu0 0.0
      %1470 = vmatprep.mubr.f32.mxu0 0.0
      %1471 = vmatmul.mubr.f32.gmra.mrb[0].mxu0 %v1395
      %v1472 = vpop.f32.mrb[0].mxu0
      %v1473 = vadd.f32 0.0, %v1472
      %v1474 = vpop.f32.mrb[0].mxu0
      %1475 = vmatprep.mubr.f32.mxu0 0.0
      %1476 = vmatmul.mubr.f32.gmra.mrb[0].mxu0 %v1398
      %v1477 = vpop.f32.mrb[0].mxu0
      %v1478 = vadd.f32 0.0, %v1477
      %v1479 = vpop.f32.mrb[0].mxu0
      %1480 = vmatprep.mubr.f32.mxu0 0.0
      %1481 = vmatmul.mubr.f32.gmra.mrb[0].mxu0 %v1401
      %v1482 = vpop.f32.mrb[0].mxu0
      %v1483 = vadd.f32 0.0, %v1482
      %v1484 = vpop.f32.mrb[0].mxu0
      %1485 = vdwg.mxu0
      %v1486 = vpack.c.bf16 %v1478, %v1473
      %v1487 = vpack.c.bf16 %v1483, %v1483
      %s1488 = scalar_lea.vmem %s6, 4
      %v1489 = vld [vmem:[%s1488] sm:$0xf]
      %v1491 = vsel %vm802, %v1486, 0
      %v1494 = vsel %vm802, %v1487, 0
      %vm1496 = vcmask 1043456
      %v1498 = vsel %vm1496, %v1489, 0
      %1500 = vmatprep.subr.bf16.mxu0 0
      %1501 = vmatpush1.bf16.msra.mxu0 %v1498
      %1502 = vmatprep.subr.bf16.mxu0 0
      %1503 = vmatpush1.bf16.msra.mxu0 0
      %1504 = vmatprep.subr.bf16.mxu0 0
      %1505 = vmatpush1.bf16.msra.mxu0 0
      %1506 = vmatprep.subr.bf16.mxu0 0
      %1507 = vmatpush1.bf16.msra.mxu0 0
      %1508 = vmatprep.subr.bf16.mxu0 0
      %1509 = vmatpush1.bf16.msra.mxu0 0
      %1510 = vmatprep.subr.bf16.mxu0 0
      %1511 = vmatpush1.bf16.msra.mxu0 0
      %1512 = vmatprep.subr.bf16.mxu0 0
      %1513 = vmatpush1.bf16.msra.mxu0 0
      %1514 = vmatprep.subr.bf16.mxu0 0
      %1515 = vmatpush1.bf16.msra.mxu0 0
      %1516 = vmatprep.subr.bf16.mxu0 0
      %1517 = vmatpush1.bf16.msra.mxu0 0
      %1518 = vmatprep.subr.bf16.mxu0 0
      %1519 = vmatpush1.bf16.msra.mxu0 0
      %1520 = vmatprep.subr.bf16.mxu0 0
      %1521 = vmatpush1.bf16.msra.mxu0 0
      %1522 = vmatprep.subr.bf16.mxu0 0
      %1523 = vmatpush1.bf16.msra.mxu0 0
      %1524 = vmatprep.subr.bf16.mxu0 0
      %1525 = vmatpush1.bf16.msra.mxu0 0
      %1526 = vmatprep.subr.bf16.mxu0 0
      %1527 = vmatpush1.bf16.msra.mxu0 0
      %1528 = vmatprep.subr.bf16.mxu0 0
      %1529 = vmatpush1.bf16.msra.mxu0 0
      %1530 = vmatprep.subr.bf16.mxu0 0
      %1531 = vmatpush1.bf16.msra.mxu0 0
      %1532 = vmatprep.mubr.bf16.mxu0 0
      %1533 = vmatmul.mubr.bf16.gmra.mrb[0].mxu0 %v1491
      %v1534 = vpop.f32.mrb[0].mxu0
      %v1535 = vadd.f32 0.0, %v1534
      %v1536 = vpop.f32.mrb[0].mxu0
      %v1537 = vpop.f32.mrb[0].mxu0
      %v1538 = vadd.f32 0.0, %v1537
      %v1539 = vpop.f32.mrb[0].mxu0
      %1540 = vmatprep.mubr.bf16.mxu0 0
      %1541 = vmatmul.mubr.bf16.gmra.mrb[0].mxu0 %v1494
      %v1542 = vpop.f32.mrb[0].mxu0
      %v1543 = vadd.f32 0.0, %v1542
      %v1544 = vpop.f32.mrb[0].mxu0
      %v1545 = vpop.f32.mrb[0].mxu0
      %v1546 = vpop.f32.mrb[0].mxu0
      %1547 = vdwg.mxu0
      %v1549 = vsel %vm802, %v1035, 0
      %v1552 = vsel %vm802, %v1036, 0
      %v1555 = vsel %vm1496, %v1037, 0
      %1557 = vmatprep.subr.bf16.mxu0 0
      %1558 = vmatpush1.bf16.msra.mxu0 %v1555
      %1559 = vmatprep.subr.bf16.mxu0 0
      %1560 = vmatpush1.bf16.msra.mxu0 0
      %1561 = vmatprep.subr.bf16.mxu0 0
      %1562 = vmatpush1.bf16.msra.mxu0 0
      %1563 = vmatprep.subr.bf16.mxu0 0
      %1564 = vmatpush1.bf16.msra.mxu0 0
      %1565 = vmatprep.subr.bf16.mxu0 0
      %1566 = vmatpush1.bf16.msra.mxu0 0
      %1567 = vmatprep.subr.bf16.mxu0 0
      %1568 = vmatpush1.bf16.msra.mxu0 0
      %1569 = vmatprep.subr.bf16.mxu0 0
      %1570 = vmatpush1.bf16.msra.mxu0 0
      %1571 = vmatprep.subr.bf16.mxu0 0
      %1572 = vmatpush1.bf16.msra.mxu0 0
      %1573 = vmatprep.subr.bf16.mxu0 0
      %1574 = vmatpush1.bf16.msra.mxu0 0
      %1575 = vmatprep.subr.bf16.mxu0 0
      %1576 = vmatpush1.bf16.msra.mxu0 0
      %1577 = vmatprep.subr.bf16.mxu0 0
      %1578 = vmatpush1.bf16.msra.mxu0 0
      %1579 = vmatprep.subr.bf16.mxu0 0
      %1580 = vmatpush1.bf16.msra.mxu0 0
      %1581 = vmatprep.subr.bf16.mxu0 0
      %1582 = vmatpush1.bf16.msra.mxu0 0
      %1583 = vmatprep.subr.bf16.mxu0 0
      %1584 = vmatpush1.bf16.msra.mxu0 0
      %1585 = vmatprep.subr.bf16.mxu0 0
      %1586 = vmatpush1.bf16.msra.mxu0 0
      %1587 = vmatprep.subr.bf16.mxu0 0
      %1588 = vmatpush1.bf16.msra.mxu0 0
      %1589 = vmatprep.mubr.bf16.mxu0 0
      %1590 = vmatmul.mubr.bf16.gmra.mrb[0].mxu0 %v1549
      %v1591 = vpop.f32.mrb[0].mxu0
      %v1592 = vadd.f32 %v1535, %v1591
      %v1593 = vpop.f32.mrb[0].mxu0
      %v1594 = vpop.f32.mrb[0].mxu0
      %v1595 = vadd.f32 %v1538, %v1594
      %v1596 = vpop.f32.mrb[0].mxu0
      %1597 = vmatprep.mubr.bf16.mxu0 0
      %1598 = vmatmul.mubr.bf16.gmra.mrb[0].mxu0 %v1552
      %v1599 = vpop.f32.mrb[0].mxu0
      %v1600 = vadd.f32 %v1543, %v1599
      %v1601 = vpop.f32.mrb[0].mxu0
      %v1602 = vpop.f32.mrb[0].mxu0
      %v1603 = vpop.f32.mrb[0].mxu0
      %1604 = vdwg.mxu0
      %s1605 = scalar_lea.vmem %s4, 32
      %v1606 = vld [vmem:[%s1605] sm:$0xf]
      %v1607 = vld [vmem:[%s1605 + $0x4] sm:$0xf]
      %v1608 = vld [vmem:[%s1605 + $0x8] sm:$0xf]
      %v1609 = vld [vmem:[%s1605 + $0xc] sm:$0xf]
      %s1610 = scalar_lea.vmem %s5, 2
      %v1611 = vld [vmem:[%s1610] sm:$0x1]
      %v1613 = vlaneseq
      %v1614 = vshrl.u32 %v1613, 7
      %v1615 = vsub.s32 0, %v1614
      %v1616 = vrot.slane %v1611, %v1615
      %v1622 = vunpack.c.l.b16 %v1606
      %v1623 = vunpack.c.l.b16 %v1607
      %v1624 = vunpack.c.l.b16 %v1608
      %v1625 = vunpack.c.l.b16 %v1609
      %v1626 = vpack.c.b16 %v1623, %v1622
      %v1627 = vpack.c.b16 %v1625, %v1624
      %1630 = vmatprep.subr.bf16.mxu0 0
      %1631 = vmatpush1.bf16.msra.mxu0 %v1626
      %1632 = vmatprep.subr.bf16.mxu0 0
      %1633 = vmatpush1.bf16.msra.mxu0 %v1627
      %1634 = vmatprep.subr.bf16.mxu0 0
      %1635 = vmatpush1.bf16.msra.mxu0 0
      %1636 = vmatprep.subr.bf16.mxu0 0
      %1637 = vmatpush1.bf16.msra.mxu0 0
      %1638 = vmatprep.subr.bf16.mxu0 0
      %1639 = vmatpush1.bf16.msra.mxu0 0
      %1640 = vmatprep.subr.bf16.mxu0 0
      %1641 = vmatpush1.bf16.msra.mxu0 0
      %1642 = vmatprep.subr.bf16.mxu0 0
      %1643 = vmatpush1.bf16.msra.mxu0 0
      %1644 = vmatprep.subr.bf16.mxu0 0
      %1645 = vmatpush1.bf16.msra.mxu0 0
      %1646 = vmatprep.subr.bf16.mxu0 0
      %1647 = vmatpush1.bf16.msra.mxu0 0
      %1648 = vmatprep.subr.bf16.mxu0 0
      %1649 = vmatpush1.bf16.msra.mxu0 0
      %1650 = vmatprep.subr.bf16.mxu0 0
      %1651 = vmatpush1.bf16.msra.mxu0 0
      %1652 = vmatprep.subr.bf16.mxu0 0
      %1653 = vmatpush1.bf16.msra.mxu0 0
      %1654 = vmatprep.subr.bf16.mxu0 0
      %1655 = vmatpush1.bf16.msra.mxu0 0
      %1656 = vmatprep.subr.bf16.mxu0 0
      %1657 = vmatpush1.bf16.msra.mxu0 0
      %1658 = vmatprep.subr.bf16.mxu0 0
      %1659 = vmatpush1.bf16.msra.mxu0 0
      %1660 = vmatprep.subr.bf16.mxu0 0
      %1661 = vmatpush1.bf16.msra.mxu0 0
      %1662 = vmatprep.mubr.bf16.mxu0 0
      %1663 = vmatmul.mubr.bf16.gmra.mrb[0].mxu0 %v603
      %v1664 = vpop.f32.mrb[0].mxu0
      %v1665 = vadd.f32 %v1616, %v1664
      %v1666 = vpop.f32.mrb[0].mxu0
      %v1667 = vpop.f32.mrb[0].mxu0
      %v1668 = vadd.f32 %v1616, %v1667
      %v1669 = vpop.f32.mrb[0].mxu0
      %1670 = vmatprep.mubr.bf16.mxu0 0
      %1671 = vmatmul.mubr.bf16.gmra.mrb[0].mxu0 %v606
      %v1672 = vpop.f32.mrb[0].mxu0
      %v1673 = vadd.f32 %v1616, %v1672
      %v1674 = vpop.f32.mrb[0].mxu0
      %v1675 = vpop.f32.mrb[0].mxu0
      %v1676 = vpop.f32.mrb[0].mxu0
      %1677 = vdwg.mxu0
      %s1678 = scalar_lea.vmem %s4, 96
      %v1679 = vld [vmem:[%s1678] sm:$0xf]
      %v1680 = vld [vmem:[%s1678 + $0x4] sm:$0xf]
      %v1681 = vld [vmem:[%s1678 + $0x8] sm:$0xf]
      %v1682 = vld [vmem:[%s1678 + $0xc] sm:$0xf]
      %s1683 = scalar_lea.vmem %s5, 6
      %v1684 = vld [vmem:[%s1683] sm:$0x1]
      %v1686 = vlaneseq
      %v1687 = vshrl.u32 %v1686, 7
      %v1688 = vsub.s32 0, %v1687
      %v1689 = vrot.slane %v1684, %v1688
      %v1695 = vunpack.c.l.b16 %v1679
      %v1696 = vunpack.c.l.b16 %v1680
      %v1697 = vunpack.c.l.b16 %v1681
      %v1698 = vunpack.c.l.b16 %v1682
      %v1699 = vpack.c.b16 %v1696, %v1695
      %v1700 = vpack.c.b16 %v1698, %v1697
      %1703 = vmatprep.subr.bf16.mxu0 0
      %1704 = vmatpush1.bf16.msra.mxu0 %v1699
      %1705 = vmatprep.subr.bf16.mxu0 0
      %1706 = vmatpush1.bf16.msra.mxu0 %v1700
      %1707 = vmatprep.subr.bf16.mxu0 0
      %1708 = vmatpush1.bf16.msra.mxu0 0
      %1709 = vmatprep.subr.bf16.mxu0 0
      %1710 = vmatpush1.bf16.msra.mxu0 0
      %1711 = vmatprep.subr.bf16.mxu0 0
      %1712 = vmatpush1.bf16.msra.mxu0 0
      %1713 = vmatprep.subr.bf16.mxu0 0
      %1714 = vmatpush1.bf16.msra.mxu0 0
      %1715 = vmatprep.subr.bf16.mxu0 0
      %1716 = vmatpush1.bf16.msra.mxu0 0
      %1717 = vmatprep.subr.bf16.mxu0 0
      %1718 = vmatpush1.bf16.msra.mxu0 0
      %1719 = vmatprep.subr.bf16.mxu0 0
      %1720 = vmatpush1.bf16.msra.mxu0 0
      %1721 = vmatprep.subr.bf16.mxu0 0
      %1722 = vmatpush1.bf16.msra.mxu0 0
      %1723 = vmatprep.subr.bf16.mxu0 0
      %1724 = vmatpush1.bf16.msra.mxu0 0
      %1725 = vmatprep.subr.bf16.mxu0 0
      %1726 = vmatpush1.bf16.msra.mxu0 0
      %1727 = vmatprep.subr.bf16.mxu0 0
      %1728 = vmatpush1.bf16.msra.mxu0 0
      %1729 = vmatprep.subr.bf16.mxu0 0
      %1730 = vmatpush1.bf16.msra.mxu0 0
      %1731 = vmatprep.subr.bf16.mxu0 0
      %1732 = vmatpush1.bf16.msra.mxu0 0
      %1733 = vmatprep.subr.bf16.mxu0 0
      %1734 = vmatpush1.bf16.msra.mxu0 0
      %1735 = vmatprep.mubr.bf16.mxu0 0
      %1736 = vmatmul.mubr.bf16.gmra.mrb[0].mxu0 %v603
      %v1737 = vpop.f32.mrb[0].mxu0
      %v1738 = vadd.f32 %v1689, %v1737
      %v1739 = vpop.f32.mrb[0].mxu0
      %v1740 = vpop.f32.mrb[0].mxu0
      %v1741 = vadd.f32 %v1689, %v1740
      %v1742 = vpop.f32.mrb[0].mxu0
      %1743 = vmatprep.mubr.bf16.mxu0 0
      %1744 = vmatmul.mubr.bf16.gmra.mrb[0].mxu0 %v606
      %v1745 = vpop.f32.mrb[0].mxu0
      %v1746 = vadd.f32 %v1689, %v1745
      %v1747 = vpop.f32.mrb[0].mxu0
      %v1748 = vpop.f32.mrb[0].mxu0
      %v1749 = vpop.f32.mrb[0].mxu0
      %1750 = vdwg.mxu0
      %s1751 = scalar_lea.vmem %s4, 160
      %v1752 = vld [vmem:[%s1751] sm:$0xf]
      %v1753 = vld [vmem:[%s1751 + $0x4] sm:$0xf]
      %v1754 = vld [vmem:[%s1751 + $0x8] sm:$0xf]
      %v1755 = vld [vmem:[%s1751 + $0xc] sm:$0xf]
      %s1756 = scalar_lea.vmem %s5, 10
      %v1757 = vld [vmem:[%s1756] sm:$0x1]
      %v1759 = vlaneseq
      %v1760 = vshrl.u32 %v1759, 7
      %v1761 = vsub.s32 0, %v1760
      %v1762 = vrot.slane %v1757, %v1761
      %v1768 = vunpack.c.l.b16 %v1752
      %v1769 = vunpack.c.l.b16 %v1753
      %v1770 = vunpack.c.l.b16 %v1754
      %v1771 = vunpack.c.l.b16 %v1755
      %v1772 = vpack.c.b16 %v1769, %v1768
      %v1773 = vpack.c.b16 %v1771, %v1770
      %1776 = vmatprep.subr.bf16.mxu0 0
      %1777 = vmatpush1.bf16.msra.mxu0 %v1772
      %1778 = vmatprep.subr.bf16.mxu0 0
      %1779 = vmatpush1.bf16.msra.mxu0 %v1773
      %1780 = vmatprep.subr.bf16.mxu0 0
      %1781 = vmatpush1.bf16.msra.mxu0 0
      %1782 = vmatprep.subr.bf16.mxu0 0
      %1783 = vmatpush1.bf16.msra.mxu0 0
      %1784 = vmatprep.subr.bf16.mxu0 0
      %1785 = vmatpush1.bf16.msra.mxu0 0
      %1786 = vmatprep.subr.bf16.mxu0 0
      %1787 = vmatpush1.bf16.msra.mxu0 0
      %1788 = vmatprep.subr.bf16.mxu0 0
      %1789 = vmatpush1.bf16.msra.mxu0 0
      %1790 = vmatprep.subr.bf16.mxu0 0
      %1791 = vmatpush1.bf16.msra.mxu0 0
      %1792 = vmatprep.subr.bf16.mxu0 0
      %1793 = vmatpush1.bf16.msra.mxu0 0
      %1794 = vmatprep.subr.bf16.mxu0 0
      %1795 = vmatpush1.bf16.msra.mxu0 0
      %1796 = vmatprep.subr.bf16.mxu0 0
      %1797 = vmatpush1.bf16.msra.mxu0 0
      %1798 = vmatprep.subr.bf16.mxu0 0
      %1799 = vmatpush1.bf16.msra.mxu0 0
      %1800 = vmatprep.subr.bf16.mxu0 0
      %1801 = vmatpush1.bf16.msra.mxu0 0
      %1802 = vmatprep.subr.bf16.mxu0 0
      %1803 = vmatpush1.bf16.msra.mxu0 0
      %1804 = vmatprep.subr.bf16.mxu0 0
      %1805 = vmatpush1.bf16.msra.mxu0 0
      %1806 = vmatprep.subr.bf16.mxu0 0
      %1807 = vmatpush1.bf16.msra.mxu0 0
      %1808 = vmatprep.mubr.bf16.mxu0 0
      %1809 = vmatmul.mubr.bf16.gmra.mrb[0].mxu0 %v603
      %v1810 = vpop.f32.mrb[0].mxu0
      %v1811 = vadd.f32 %v1762, %v1810
      %v1812 = vpop.f32.mrb[0].mxu0
      %v1813 = vpop.f32.mrb[0].mxu0
      %v1814 = vadd.f32 %v1762, %v1813
      %v1815 = vpop.f32.mrb[0].mxu0
      %1816 = vmatprep.mubr.bf16.mxu0 0
      %1817 = vmatmul.mubr.bf16.gmra.mrb[0].mxu0 %v606
      %v1818 = vpop.f32.mrb[0].mxu0
      %v1819 = vadd.f32 %v1762, %v1818
      %v1820 = vpop.f32.mrb[0].mxu0
      %v1821 = vpop.f32.mrb[0].mxu0
      %v1822 = vpop.f32.mrb[0].mxu0
      %1823 = vdwg.mxu0
      %v1825 = vsel %vm802, %v1665, 0
      %v1828 = vsel %vm802, %v1668, 0
      %v1831 = vsel %vm802, %v1673, 0
      %v1834 = vsel %vm802, %v1738, 0
      %v1837 = vsel %vm802, %v1741, 0
      %v1840 = vsel %vm802, %v1746, 0
      %1842 = vmatprep.subr.mxu0 0.0
      %1843 = vmatpush1.xpose.msra.mxu0 %v1834
      %1844 = vmatprep.subr.mxu0 0.0
      %1845 = vmatpush1.xpose.msra.mxu0 %v1837
      %1846 = vmatprep.subr.mxu0 0.0
      %1847 = vmatpush1.xpose.msra.mxu0 %v1840
      %1848 = vmatprep.subr.mxu0 0.0
      %1849 = vmatpush1.xpose.msra.mxu0 0.0
      %1850 = vmatprep.subr.mxu0 0.0
      %1851 = vmatpush1.xpose.msra.mxu0 0.0
      %1852 = vmatprep.subr.mxu0 0.0
      %1853 = vmatpush1.xpose.msra.mxu0 0.0
      %1854 = vmatprep.subr.mxu0 0.0
      %1855 = vmatpush1.xpose.msra.mxu0 0.0
      %1856 = vmatprep.subr.mxu0 0.0
      %1857 = vmatpush1.xpose.msra.mxu0 0.0
      %1858 = vmatprep.subr.mxu0 0.0
      %1859 = vmatpush1.xpose.msra.mxu0 0.0
      %1860 = vmatprep.subr.mxu0 0.0
      %1861 = vmatpush1.xpose.msra.mxu0 0.0
      %1862 = vmatprep.subr.mxu0 0.0
      %1863 = vmatpush1.xpose.msra.mxu0 0.0
      %1864 = vmatprep.subr.mxu0 0.0
      %1865 = vmatpush1.xpose.msra.mxu0 0.0
      %1866 = vmatprep.subr.mxu0 0.0
      %1867 = vmatpush1.xpose.msra.mxu0 0.0
      %1868 = vmatprep.subr.mxu0 0.0
      %1869 = vmatpush1.xpose.msra.mxu0 0.0
      %1870 = vmatprep.subr.mxu0 0.0
      %1871 = vmatpush1.xpose.msra.mxu0 0.0
      %1872 = vmatprep.subr.mxu0 0.0
      %1873 = vmatpush1.xpose.msra.mxu0 0.0
      %1874 = vmatprep.subr.mxu0 0.0
      %1875 = vmatpush1.xpose.msra.mxu0 0.0
      %1876 = vmatprep.subr.mxu0 0.0
      %1877 = vmatpush1.xpose.msra.mxu0 0.0
      %1878 = vmatprep.subr.mxu0 0.0
      %1879 = vmatpush1.xpose.msra.mxu0 0.0
      %1880 = vmatprep.subr.mxu0 0.0
      %1881 = vmatpush1.xpose.msra.mxu0 0.0
      %1882 = vmatprep.subr.mxu0 0.0
      %1883 = vmatpush1.xpose.msra.mxu0 0.0
      %1884 = vmatprep.subr.mxu0 0.0
      %1885 = vmatpush1.xpose.msra.mxu0 0.0
      %1886 = vmatprep.subr.mxu0 0.0
      %1887 = vmatpush1.xpose.msra.mxu0 0.0
      %1888 = vmatprep.subr.mxu0 0.0
      %1889 = vmatpush1.xpose.msra.mxu0 0.0
      %1890 = vmatprep.subr.mxu0 0.0
      %1891 = vmatpush1.xpose.msra.mxu0 0.0
      %1892 = vmatprep.subr.mxu0 0.0
      %1893 = vmatpush1.xpose.msra.mxu0 0.0
      %1894 = vmatprep.subr.mxu0 0.0
      %1895 = vmatpush1.xpose.msra.mxu0 0.0
      %1896 = vmatprep.subr.mxu0 0.0
      %1897 = vmatpush1.xpose.msra.mxu0 0.0
      %1898 = vmatprep.subr.mxu0 0.0
      %1899 = vmatpush1.xpose.msra.mxu0 0.0
      %1900 = vmatprep.subr.mxu0 0.0
      %1901 = vmatpush1.xpose.msra.mxu0 0.0
      %1902 = vmatprep.subr.mxu0 0.0
      %1903 = vmatpush1.xpose.msra.mxu0 0.0
      %1904 = vmatprep.subr.mxu0 0.0
      %1905 = vmatpush1.xpose.msra.mxu0 0.0
      %1906 = vmatprep.mubr.f32.mxu0 0.0
      %1907 = vmatmul.mubr.f32.gmra.mrb[0].mxu0 %v1825
      %v1908 = vpop.f32.mrb[0].mxu0
      %v1909 = vadd.f32 0.0, %v1908
      %v1910 = vpop.f32.mrb[0].mxu0
      %1911 = vmatprep.mubr.f32.mxu0 0.0
      %1912 = vmatmul.mubr.f32.gmra.mrb[0].mxu0 %v1828
      %v1913 = vpop.f32.mrb[0].mxu0
      %v1914 = vadd.f32 0.0, %v1913
      %v1915 = vpop.f32.mrb[0].mxu0
      %1916 = vmatprep.mubr.f32.mxu0 0.0
      %1917 = vmatmul.mubr.f32.gmra.mrb[0].mxu0 %v1831
      %v1918 = vpop.f32.mrb[0].mxu0
      %v1919 = vadd.f32 0.0, %v1918
      %v1920 = vpop.f32.mrb[0].mxu0
      %1921 = vdwg.mxu0
      %v1922 = vmul.f32 %v1909, 0.35355338
      %v1923 = vmul.f32 %v1914, 0.35355338
      %v1924 = vmul.f32 %v1919, 0.35355338
      %v1925 = vadd.f32 %v1922, %v576
      %v1926 = vadd.f32 %v1923, %v577
      %v1927 = vadd.f32 %v1924, %v578
      %v1928 = vsel %vm907, %v1925, -inf
      %1929 = vmax.xlane.f32.xlu0 %v1928
      %v1930 = vpop.xlane.xlu0 %1929
      %v1931 = vsel %vm907, %v1926, -inf
      %1932 = vmax.xlane.f32.xlu0 %v1931
      %v1933 = vpop.xlane.xlu0 %1932
      %v1934 = vsel %vm914, %v1927, -inf
      %1935 = vmax.xlane.f32.xlu0 %v1934
      %v1936 = vpop.xlane.xlu0 %1935
      %v1937 = vsub.f32 %v1925, %v1930
      %v1938 = vsub.f32 %v1926, %v1933
      %v1939 = vsub.f32 %v1927, %v1936
      %v1940 = vmul.f32 %v1937, 1.442695
      %v1941 = vpow.pop %v1940
      %v1942 = vmul.f32 %v1938, 1.442695
      %v1943 = vpow.pop %v1942
      %v1944 = vmul.f32 %v1939, 1.442695
      %v1945 = vpow.pop %v1944
      %v1946 = vsel %vm907, %v1941, 0.0
      %1947 = vadd.xlane.f32.xlu0 %v1946
      %v1948 = vpop.xlane.xlu0 %1947
      %v1949 = vsel %vm907, %v1943, 0.0
      %1950 = vadd.xlane.f32.xlu0 %v1949
      %v1951 = vpop.xlane.xlu0 %1950
      %v1952 = vsel %vm914, %v1945, 0.0
      %1953 = vadd.xlane.f32.xlu0 %v1952
      %v1954 = vpop.xlane.xlu0 %1953
      %v1955 = vrcp.pop %v1948
      %v1956 = vrcp.pop %v1951
      %v1957 = vrcp.pop %v1954
      %v1958 = vmul.f32 %v1941, %v1955
      %v1959 = vmul.f32 %v1943, %v1956
      %v1960 = vmul.f32 %v1945, %v1957
      %v1962 = vsel %vm907, %v1958, 0
      %v1965 = vsel %vm907, %v1959, 0
      %v1968 = vsel %vm907, %v1960, 0
      %v1971 = vsel %vm951, %v1819, 0
      %1973 = vmatprep.subr.mxu0 0.0
      %1974 = vmatpush1.msra.mxu0 %v1811
      %1975 = vmatprep.subr.mxu0 0.0
      %1976 = vmatpush1.msra.mxu0 %v1814
      %1977 = vmatprep.subr.mxu0 0.0
      %1978 = vmatpush1.msra.mxu0 %v1971
      %1979 = vmatprep.subr.mxu0 0.0
      %1980 = vmatpush1.msra.mxu0 0.0
      %1981 = vmatprep.subr.mxu0 0.0
      %1982 = vmatpush1.msra.mxu0 0.0
      %1983 = vmatprep.subr.mxu0 0.0
      %1984 = vmatpush1.msra.mxu0 0.0
      %1985 = vmatprep.subr.mxu0 0.0
      %1986 = vmatpush1.msra.mxu0 0.0
      %1987 = vmatprep.subr.mxu0 0.0
      %1988 = vmatpush1.msra.mxu0 0.0
      %1989 = vmatprep.subr.mxu0 0.0
      %1990 = vmatpush1.msra.mxu0 0.0
      %1991 = vmatprep.subr.mxu0 0.0
      %1992 = vmatpush1.msra.mxu0 0.0
      %1993 = vmatprep.subr.mxu0 0.0
      %1994 = vmatpush1.msra.mxu0 0.0
      %1995 = vmatprep.subr.mxu0 0.0
      %1996 = vmatpush1.msra.mxu0 0.0
      %1997 = vmatprep.subr.mxu0 0.0
      %1998 = vmatpush1.msra.mxu0 0.0
      %1999 = vmatprep.subr.mxu0 0.0
      %2000 = vmatpush1.msra.mxu0 0.0
      %2001 = vmatprep.subr.mxu0 0.0
      %2002 = vmatpush1.msra.mxu0 0.0
      %2003 = vmatprep.subr.mxu0 0.0
      %2004 = vmatpush1.msra.mxu0 0.0
      %2005 = vmatprep.subr.mxu0 0.0
      %2006 = vmatpush1.msra.mxu0 0.0
      %2007 = vmatprep.subr.mxu0 0.0
      %2008 = vmatpush1.msra.mxu0 0.0
      %2009 = vmatprep.subr.mxu0 0.0
      %2010 = vmatpush1.msra.mxu0 0.0
      %2011 = vmatprep.subr.mxu0 0.0
      %2012 = vmatpush1.msra.mxu0 0.0
      %2013 = vmatprep.subr.mxu0 0.0
      %2014 = vmatpush1.msra.mxu0 0.0
      %2015 = vmatprep.subr.mxu0 0.0
      %2016 = vmatpush1.msra.mxu0 0.0
      %2017 = vmatprep.subr.mxu0 0.0
      %2018 = vmatpush1.msra.mxu0 0.0
      %2019 = vmatprep.subr.mxu0 0.0
      %2020 = vmatpush1.msra.mxu0 0.0
      %2021 = vmatprep.subr.mxu0 0.0
      %2022 = vmatpush1.msra.mxu0 0.0
      %2023 = vmatprep.subr.mxu0 0.0
      %2024 = vmatpush1.msra.mxu0 0.0
      %2025 = vmatprep.subr.mxu0 0.0
      %2026 = vmatpush1.msra.mxu0 0.0
      %2027 = vmatprep.subr.mxu0 0.0
      %2028 = vmatpush1.msra.mxu0 0.0
      %2029 = vmatprep.subr.mxu0 0.0
      %2030 = vmatpush1.msra.mxu0 0.0
      %2031 = vmatprep.subr.mxu0 0.0
      %2032 = vmatpush1.msra.mxu0 0.0
      %2033 = vmatprep.subr.mxu0 0.0
      %2034 = vmatpush1.msra.mxu0 0.0
      %2035 = vmatprep.subr.mxu0 0.0
      %2036 = vmatpush1.msra.mxu0 0.0
      %2037 = vmatprep.mubr.f32.mxu0 0.0
      %2038 = vmatmul.mubr.f32.gmra.mrb[0].mxu0 %v1962
      %v2039 = vpop.f32.mrb[0].mxu0
      %v2040 = vadd.f32 0.0, %v2039
      %v2041 = vpop.f32.mrb[0].mxu0
      %2042 = vmatprep.mubr.f32.mxu0 0.0
      %2043 = vmatmul.mubr.f32.gmra.mrb[0].mxu0 %v1965
      %v2044 = vpop.f32.mrb[0].mxu0
      %v2045 = vadd.f32 0.0, %v2044
      %v2046 = vpop.f32.mrb[0].mxu0
      %2047 = vmatprep.mubr.f32.mxu0 0.0
      %2048 = vmatmul.mubr.f32.gmra.mrb[0].mxu0 %v1968
      %v2049 = vpop.f32.mrb[0].mxu0
      %v2050 = vadd.f32 0.0, %v2049
      %v2051 = vpop.f32.mrb[0].mxu0
      %2052 = vdwg.mxu0
      %v2053 = vpack.c.bf16 %v2045, %v2040
      %v2054 = vpack.c.bf16 %v2050, %v2050
      %s2055 = scalar_lea.vmem %s6, 8
      %v2056 = vld [vmem:[%s2055] sm:$0xf]
      %v2058 = vsel %vm802, %v2053, 0
      %v2061 = vsel %vm802, %v2054, 0
      %v2064 = vsel %vm1496, %v2056, 0
      %2066 = vmatprep.subr.bf16.mxu0 0
      %2067 = vmatpush1.bf16.msra.mxu0 %v2064
      %2068 = vmatprep.subr.bf16.mxu0 0
      %2069 = vmatpush1.bf16.msra.mxu0 0
      %2070 = vmatprep.subr.bf16.mxu0 0
      %2071 = vmatpush1.bf16.msra.mxu0 0
      %2072 = vmatprep.subr.bf16.mxu0 0
      %2073 = vmatpush1.bf16.msra.mxu0 0
      %2074 = vmatprep.subr.bf16.mxu0 0
      %2075 = vmatpush1.bf16.msra.mxu0 0
      %2076 = vmatprep.subr.bf16.mxu0 0
      %2077 = vmatpush1.bf16.msra.mxu0 0
      %2078 = vmatprep.subr.bf16.mxu0 0
      %2079 = vmatpush1.bf16.msra.mxu0 0
      %2080 = vmatprep.subr.bf16.mxu0 0
      %2081 = vmatpush1.bf16.msra.mxu0 0
      %2082 = vmatprep.subr.bf16.mxu0 0
      %2083 = vmatpush1.bf16.msra.mxu0 0
      %2084 = vmatprep.subr.bf16.mxu0 0
      %2085 = vmatpush1.bf16.msra.mxu0 0
      %2086 = vmatprep.subr.bf16.mxu0 0
      %2087 = vmatpush1.bf16.msra.mxu0 0
      %2088 = vmatprep.subr.bf16.mxu0 0
      %2089 = vmatpush1.bf16.msra.mxu0 0
      %2090 = vmatprep.subr.bf16.mxu0 0
      %2091 = vmatpush1.bf16.msra.mxu0 0
      %2092 = vmatprep.subr.bf16.mxu0 0
      %2093 = vmatpush1.bf16.msra.mxu0 0
      %2094 = vmatprep.subr.bf16.mxu0 0
      %2095 = vmatpush1.bf16.msra.mxu0 0
      %2096 = vmatprep.subr.bf16.mxu0 0
      %2097 = vmatpush1.bf16.msra.mxu0 0
      %2098 = vmatprep.mubr.bf16.mxu0 0
      %2099 = vmatmul.mubr.bf16.gmra.mrb[0].mxu0 %v2058
      %v2100 = vpop.f32.mrb[0].mxu0
      %v2101 = vadd.f32 0.0, %v2100
      %v2102 = vpop.f32.mrb[0].mxu0
      %v2103 = vpop.f32.mrb[0].mxu0
      %v2104 = vadd.f32 0.0, %v2103
      %v2105 = vpop.f32.mrb[0].mxu0
      %2106 = vmatprep.mubr.bf16.mxu0 0
      %2107 = vmatmul.mubr.bf16.gmra.mrb[0].mxu0 %v2061
      %v2108 = vpop.f32.mrb[0].mxu0
      %v2109 = vadd.f32 0.0, %v2108
      %v2110 = vpop.f32.mrb[0].mxu0
      %v2111 = vpop.f32.mrb[0].mxu0
      %v2112 = vpop.f32.mrb[0].mxu0
      %2113 = vdwg.mxu0
      %v2114 = vadd.f32 %v1592, %v2101
      %v2115 = vadd.f32 %v1595, %v2104
      %v2116 = vadd.f32 %v1600, %v2109
      %s2117 = scalar_lea.vmem %s4, 48
      %v2118 = vld [vmem:[%s2117] sm:$0xf]
      %v2119 = vld [vmem:[%s2117 + $0x4] sm:$0xf]
      %v2120 = vld [vmem:[%s2117 + $0x8] sm:$0xf]
      %v2121 = vld [vmem:[%s2117 + $0xc] sm:$0xf]
      %s2122 = scalar_lea.vmem %s5, 3
      %v2123 = vld [vmem:[%s2122] sm:$0x1]
      %v2125 = vlaneseq
      %v2126 = vshrl.u32 %v2125, 7
      %v2127 = vsub.s32 0, %v2126
      %v2128 = vrot.slane %v2123, %v2127
      %v2134 = vunpack.c.l.b16 %v2118
      %v2135 = vunpack.c.l.b16 %v2119
      %v2136 = vunpack.c.l.b16 %v2120
      %v2137 = vunpack.c.l.b16 %v2121
      %v2138 = vpack.c.b16 %v2135, %v2134
      %v2139 = vpack.c.b16 %v2137, %v2136
      %2142 = vmatprep.subr.bf16.mxu0 0
      %2143 = vmatpush1.bf16.msra.mxu0 %v2138
      %2144 = vmatprep.subr.bf16.mxu0 0
      %2145 = vmatpush1.bf16.msra.mxu0 %v2139
      %2146 = vmatprep.subr.bf16.mxu0 0
      %2147 = vmatpush1.bf16.msra.mxu0 0
      %2148 = vmatprep.subr.bf16.mxu0 0
      %2149 = vmatpush1.bf16.msra.mxu0 0
      %2150 = vmatprep.subr.bf16.mxu0 0
      %2151 = vmatpush1.bf16.msra.mxu0 0
      %2152 = vmatprep.subr.bf16.mxu0 0
      %2153 = vmatpush1.bf16.msra.mxu0 0
      %2154 = vmatprep.subr.bf16.mxu0 0
      %2155 = vmatpush1.bf16.msra.mxu0 0
      %2156 = vmatprep.subr.bf16.mxu0 0
      %2157 = vmatpush1.bf16.msra.mxu0 0
      %2158 = vmatprep.subr.bf16.mxu0 0
      %2159 = vmatpush1.bf16.msra.mxu0 0
      %2160 = vmatprep.subr.bf16.mxu0 0
      %2161 = vmatpush1.bf16.msra.mxu0 0
      %2162 = vmatprep.subr.bf16.mxu0 0
      %2163 = vmatpush1.bf16.msra.mxu0 0
      %2164 = vmatprep.subr.bf16.mxu0 0
      %2165 = vmatpush1.bf16.msra.mxu0 0
      %2166 = vmatprep.subr.bf16.mxu0 0
      %2167 = vmatpush1.bf16.msra.mxu0 0
      %2168 = vmatprep.subr.bf16.mxu0 0
      %2169 = vmatpush1.bf16.msra.mxu0 0
      %2170 = vmatprep.subr.bf16.mxu0 0
      %2171 = vmatpush1.bf16.msra.mxu0 0
      %2172 = vmatprep.subr.bf16.mxu0 0
      %2173 = vmatpush1.bf16.msra.mxu0 0
      %2174 = vmatprep.mubr.bf16.mxu0 0
      %2175 = vmatmul.mubr.bf16.gmra.mrb[0].mxu0 %v603
      %v2176 = vpop.f32.mrb[0].mxu0
      %v2177 = vadd.f32 %v2128, %v2176
      %v2178 = vpop.f32.mrb[0].mxu0
      %v2179 = vpop.f32.mrb[0].mxu0
      %v2180 = vadd.f32 %v2128, %v2179
      %v2181 = vpop.f32.mrb[0].mxu0
      %2182 = vmatprep.mubr.bf16.mxu0 0
      %2183 = vmatmul.mubr.bf16.gmra.mrb[0].mxu0 %v606
      %v2184 = vpop.f32.mrb[0].mxu0
      %v2185 = vadd.f32 %v2128, %v2184
      %v2186 = vpop.f32.mrb[0].mxu0
      %v2187 = vpop.f32.mrb[0].mxu0
      %v2188 = vpop.f32.mrb[0].mxu0
      %2189 = vdwg.mxu0
      %s2190 = scalar_lea.vmem %s4, 112
      %v2191 = vld [vmem:[%s2190] sm:$0xf]
      %v2192 = vld [vmem:[%s2190 + $0x4] sm:$0xf]
      %v2193 = vld [vmem:[%s2190 + $0x8] sm:$0xf]
      %v2194 = vld [vmem:[%s2190 + $0xc] sm:$0xf]
      %s2195 = scalar_lea.vmem %s5, 7
      %v2196 = vld [vmem:[%s2195] sm:$0x1]
      %v2198 = vlaneseq
      %v2199 = vshrl.u32 %v2198, 7
      %v2200 = vsub.s32 0, %v2199
      %v2201 = vrot.slane %v2196, %v2200
      %v2207 = vunpack.c.l.b16 %v2191
      %v2208 = vunpack.c.l.b16 %v2192
      %v2209 = vunpack.c.l.b16 %v2193
      %v2210 = vunpack.c.l.b16 %v2194
      %v2211 = vpack.c.b16 %v2208, %v2207
      %v2212 = vpack.c.b16 %v2210, %v2209
      %2215 = vmatprep.subr.bf16.mxu0 0
      %2216 = vmatpush1.bf16.msra.mxu0 %v2211
      %2217 = vmatprep.subr.bf16.mxu0 0
      %2218 = vmatpush1.bf16.msra.mxu0 %v2212
      %2219 = vmatprep.subr.bf16.mxu0 0
      %2220 = vmatpush1.bf16.msra.mxu0 0
      %2221 = vmatprep.subr.bf16.mxu0 0
      %2222 = vmatpush1.bf16.msra.mxu0 0
      %2223 = vmatprep.subr.bf16.mxu0 0
      %2224 = vmatpush1.bf16.msra.mxu0 0
      %2225 = vmatprep.subr.bf16.mxu0 0
      %2226 = vmatpush1.bf16.msra.mxu0 0
      %2227 = vmatprep.subr.bf16.mxu0 0
      %2228 = vmatpush1.bf16.msra.mxu0 0
      %2229 = vmatprep.subr.bf16.mxu0 0
      %2230 = vmatpush1.bf16.msra.mxu0 0
      %2231 = vmatprep.subr.bf16.mxu0 0
      %2232 = vmatpush1.bf16.msra.mxu0 0
      %2233 = vmatprep.subr.bf16.mxu0 0
      %2234 = vmatpush1.bf16.msra.mxu0 0
      %2235 = vmatprep.subr.bf16.mxu0 0
      %2236 = vmatpush1.bf16.msra.mxu0 0
      %2237 = vmatprep.subr.bf16.mxu0 0
      %2238 = vmatpush1.bf16.msra.mxu0 0
      %2239 = vmatprep.subr.bf16.mxu0 0
      %2240 = vmatpush1.bf16.msra.mxu0 0
      %2241 = vmatprep.subr.bf16.mxu0 0
      %2242 = vmatpush1.bf16.msra.mxu0 0
      %2243 = vmatprep.subr.bf16.mxu0 0
      %2244 = vmatpush1.bf16.msra.mxu0 0
      %2245 = vmatprep.subr.bf16.mxu0 0
      %2246 = vmatpush1.bf16.msra.mxu0 0
      %2247 = vmatprep.mubr.bf16.mxu0 0
      %2248 = vmatmul.mubr.bf16.gmra.mrb[0].mxu0 %v603
      %v2249 = vpop.f32.mrb[0].mxu0
      %v2250 = vadd.f32 %v2201, %v2249
      %v2251 = vpop.f32.mrb[0].mxu0
      %v2252 = vpop.f32.mrb[0].mxu0
      %v2253 = vadd.f32 %v2201, %v2252
      %v2254 = vpop.f32.mrb[0].mxu0
      %2255 = vmatprep.mubr.bf16.mxu0 0
      %2256 = vmatmul.mubr.bf16.gmra.mrb[0].mxu0 %v606
      %v2257 = vpop.f32.mrb[0].mxu0
      %v2258 = vadd.f32 %v2201, %v2257
      %v2259 = vpop.f32.mrb[0].mxu0
      %v2260 = vpop.f32.mrb[0].mxu0
      %v2261 = vpop.f32.mrb[0].mxu0
      %2262 = vdwg.mxu0
      %s2263 = scalar_lea.vmem %s4, 176
      %v2264 = vld [vmem:[%s2263] sm:$0xf]
      %v2265 = vld [vmem:[%s2263 + $0x4] sm:$0xf]
      %v2266 = vld [vmem:[%s2263 + $0x8] sm:$0xf]
      %v2267 = vld [vmem:[%s2263 + $0xc] sm:$0xf]
      %s2268 = scalar_lea.vmem %s5, 11
      %v2269 = vld [vmem:[%s2268] sm:$0x1]
      %v2271 = vlaneseq
      %v2272 = vshrl.u32 %v2271, 7
      %v2273 = vsub.s32 0, %v2272
      %v2274 = vrot.slane %v2269, %v2273
      %v2280 = vunpack.c.l.b16 %v2264
      %v2281 = vunpack.c.l.b16 %v2265
      %v2282 = vunpack.c.l.b16 %v2266
      %v2283 = vunpack.c.l.b16 %v2267
      %v2284 = vpack.c.b16 %v2281, %v2280
      %v2285 = vpack.c.b16 %v2283, %v2282
      %2288 = vmatprep.subr.bf16.mxu0 0
      %2289 = vmatpush1.bf16.msra.mxu0 %v2284
      %2290 = vmatprep.subr.bf16.mxu0 0
      %2291 = vmatpush1.bf16.msra.mxu0 %v2285
      %2292 = vmatprep.subr.bf16.mxu0 0
      %2293 = vmatpush1.bf16.msra.mxu0 0
      %2294 = vmatprep.subr.bf16.mxu0 0
      %2295 = vmatpush1.bf16.msra.mxu0 0
      %2296 = vmatprep.subr.bf16.mxu0 0
      %2297 = vmatpush1.bf16.msra.mxu0 0
      %2298 = vmatprep.subr.bf16.mxu0 0
      %2299 = vmatpush1.bf16.msra.mxu0 0
      %2300 = vmatprep.subr.bf16.mxu0 0
      %2301 = vmatpush1.bf16.msra.mxu0 0
      %2302 = vmatprep.subr.bf16.mxu0 0
      %2303 = vmatpush1.bf16.msra.mxu0 0
      %2304 = vmatprep.subr.bf16.mxu0 0
      %2305 = vmatpush1.bf16.msra.mxu0 0
      %2306 = vmatprep.subr.bf16.mxu0 0
      %2307 = vmatpush1.bf16.msra.mxu0 0
      %2308 = vmatprep.subr.bf16.mxu0 0
      %2309 = vmatpush1.bf16.msra.mxu0 0
      %2310 = vmatprep.subr.bf16.mxu0 0
      %2311 = vmatpush1.bf16.msra.mxu0 0
      %2312 = vmatprep.subr.bf16.mxu0 0
      %2313 = vmatpush1.bf16.msra.mxu0 0
      %2314 = vmatprep.subr.bf16.mxu0 0
      %2315 = vmatpush1.bf16.msra.mxu0 0
      %2316 = vmatprep.subr.bf16.mxu0 0
      %2317 = vmatpush1.bf16.msra.mxu0 0
      %2318 = vmatprep.subr.bf16.mxu0 0
      %2319 = vmatpush1.bf16.msra.mxu0 0
      %2320 = vmatprep.mubr.bf16.mxu0 0
      %2321 = vmatmul.mubr.bf16.gmra.mrb[0].mxu0 %v603
      %v2322 = vpop.f32.mrb[0].mxu0
      %v2323 = vadd.f32 %v2274, %v2322
      %v2324 = vpop.f32.mrb[0].mxu0
      %v2325 = vpop.f32.mrb[0].mxu0
      %v2326 = vadd.f32 %v2274, %v2325
      %v2327 = vpop.f32.mrb[0].mxu0
      %2328 = vmatprep.mubr.bf16.mxu0 0
      %2329 = vmatmul.mubr.bf16.gmra.mrb[0].mxu0 %v606
      %v2330 = vpop.f32.mrb[0].mxu0
      %v2331 = vadd.f32 %v2274, %v2330
      %v2332 = vpop.f32.mrb[0].mxu0
      %v2333 = vpop.f32.mrb[0].mxu0
      %v2334 = vpop.f32.mrb[0].mxu0
      %2335 = vdwg.mxu0
      %v2337 = vsel %vm802, %v2177, 0
      %v2340 = vsel %vm802, %v2180, 0
      %v2343 = vsel %vm802, %v2185, 0
      %v2346 = vsel %vm802, %v2250, 0
      %v2349 = vsel %vm802, %v2253, 0
      %v2352 = vsel %vm802, %v2258, 0
      %2354 = vmatprep.subr.mxu0 0.0
      %2355 = vmatpush1.xpose.msra.mxu0 %v2346
      %2356 = vmatprep.subr.mxu0 0.0
      %2357 = vmatpush1.xpose.msra.mxu0 %v2349
      %2358 = vmatprep.subr.mxu0 0.0
      %2359 = vmatpush1.xpose.msra.mxu0 %v2352
      %2360 = vmatprep.subr.mxu0 0.0
      %2361 = vmatpush1.xpose.msra.mxu0 0.0
      %2362 = vmatprep.subr.mxu0 0.0
      %2363 = vmatpush1.xpose.msra.mxu0 0.0
      %2364 = vmatprep.subr.mxu0 0.0
      %2365 = vmatpush1.xpose.msra.mxu0 0.0
      %2366 = vmatprep.subr.mxu0 0.0
      %2367 = vmatpush1.xpose.msra.mxu0 0.0
      %2368 = vmatprep.subr.mxu0 0.0
      %2369 = vmatpush1.xpose.msra.mxu0 0.0
      %2370 = vmatprep.subr.mxu0 0.0
      %2371 = vmatpush1.xpose.msra.mxu0 0.0
      %2372 = vmatprep.subr.mxu0 0.0
      %2373 = vmatpush1.xpose.msra.mxu0 0.0
      %2374 = vmatprep.subr.mxu0 0.0
      %2375 = vmatpush1.xpose.msra.mxu0 0.0
      %2376 = vmatprep.subr.mxu0 0.0
      %2377 = vmatpush1.xpose.msra.mxu0 0.0
      %2378 = vmatprep.subr.mxu0 0.0
      %2379 = vmatpush1.xpose.msra.mxu0 0.0
      %2380 = vmatprep.subr.mxu0 0.0
      %2381 = vmatpush1.xpose.msra.mxu0 0.0
      %2382 = vmatprep.subr.mxu0 0.0
      %2383 = vmatpush1.xpose.msra.mxu0 0.0
      %2384 = vmatprep.subr.mxu0 0.0
      %2385 = vmatpush1.xpose.msra.mxu0 0.0
      %2386 = vmatprep.subr.mxu0 0.0
      %2387 = vmatpush1.xpose.msra.mxu0 0.0
      %2388 = vmatprep.subr.mxu0 0.0
      %2389 = vmatpush1.xpose.msra.mxu0 0.0
      %2390 = vmatprep.subr.mxu0 0.0
      %2391 = vmatpush1.xpose.msra.mxu0 0.0
      %2392 = vmatprep.subr.mxu0 0.0
      %2393 = vmatpush1.xpose.msra.mxu0 0.0
      %2394 = vmatprep.subr.mxu0 0.0
      %2395 = vmatpush1.xpose.msra.mxu0 0.0
      %2396 = vmatprep.subr.mxu0 0.0
      %2397 = vmatpush1.xpose.msra.mxu0 0.0
      %2398 = vmatprep.subr.mxu0 0.0
      %2399 = vmatpush1.xpose.msra.mxu0 0.0
      %2400 = vmatprep.subr.mxu0 0.0
      %2401 = vmatpush1.xpose.msra.mxu0 0.0
      %2402 = vmatprep.subr.mxu0 0.0
      %2403 = vmatpush1.xpose.msra.mxu0 0.0
      %2404 = vmatprep.subr.mxu0 0.0
      %2405 = vmatpush1.xpose.msra.mxu0 0.0
      %2406 = vmatprep.subr.mxu0 0.0
      %2407 = vmatpush1.xpose.msra.mxu0 0.0
      %2408 = vmatprep.subr.mxu0 0.0
      %2409 = vmatpush1.xpose.msra.mxu0 0.0
      %2410 = vmatprep.subr.mxu0 0.0
      %2411 = vmatpush1.xpose.msra.mxu0 0.0
      %2412 = vmatprep.subr.mxu0 0.0
      %2413 = vmatpush1.xpose.msra.mxu0 0.0
      %2414 = vmatprep.subr.mxu0 0.0
      %2415 = vmatpush1.xpose.msra.mxu0 0.0
      %2416 = vmatprep.subr.mxu0 0.0
      %2417 = vmatpush1.xpose.msra.mxu0 0.0
      %2418 = vmatprep.mubr.f32.mxu0 0.0
      %2419 = vmatmul.mubr.f32.gmra.mrb[0].mxu0 %v2337
      %v2420 = vpop.f32.mrb[0].mxu0
      %v2421 = vadd.f32 0.0, %v2420
      %v2422 = vpop.f32.mrb[0].mxu0
      %2423 = vmatprep.mubr.f32.mxu0 0.0
      %2424 = vmatmul.mubr.f32.gmra.mrb[0].mxu0 %v2340
      %v2425 = vpop.f32.mrb[0].mxu0
      %v2426 = vadd.f32 0.0, %v2425
      %v2427 = vpop.f32.mrb[0].mxu0
      %2428 = vmatprep.mubr.f32.mxu0 0.0
      %2429 = vmatmul.mubr.f32.gmra.mrb[0].mxu0 %v2343
      %v2430 = vpop.f32.mrb[0].mxu0
      %v2431 = vadd.f32 0.0, %v2430
      %v2432 = vpop.f32.mrb[0].mxu0
      %2433 = vdwg.mxu0
      %v2434 = vmul.f32 %v2421, 0.35355338
      %v2435 = vmul.f32 %v2426, 0.35355338
      %v2436 = vmul.f32 %v2431, 0.35355338
      %v2437 = vadd.f32 %v2434, %v576
      %v2438 = vadd.f32 %v2435, %v577
      %v2439 = vadd.f32 %v2436, %v578
      %v2440 = vsel %vm907, %v2437, -inf
      %2441 = vmax.xlane.f32.xlu0 %v2440
      %v2442 = vpop.xlane.xlu0 %2441
      %v2443 = vsel %vm907, %v2438, -inf
      %2444 = vmax.xlane.f32.xlu0 %v2443
      %v2445 = vpop.xlane.xlu0 %2444
      %v2446 = vsel %vm914, %v2439, -inf
      %2447 = vmax.xlane.f32.xlu0 %v2446
      %v2448 = vpop.xlane.xlu0 %2447
      %v2449 = vsub.f32 %v2437, %v2442
      %v2450 = vsub.f32 %v2438, %v2445
      %v2451 = vsub.f32 %v2439, %v2448
      %v2452 = vmul.f32 %v2449, 1.442695
      %v2453 = vpow.pop %v2452
      %v2454 = vmul.f32 %v2450, 1.442695
      %v2455 = vpow.pop %v2454
      %v2456 = vmul.f32 %v2451, 1.442695
      %v2457 = vpow.pop %v2456
      %v2458 = vsel %vm907, %v2453, 0.0
      %2459 = vadd.xlane.f32.xlu0 %v2458
      %v2460 = vpop.xlane.xlu0 %2459
      %v2461 = vsel %vm907, %v2455, 0.0
      %2462 = vadd.xlane.f32.xlu0 %v2461
      %v2463 = vpop.xlane.xlu0 %2462
      %v2464 = vsel %vm914, %v2457, 0.0
      %2465 = vadd.xlane.f32.xlu0 %v2464
      %v2466 = vpop.xlane.xlu0 %2465
      %v2467 = vrcp.pop %v2460
      %v2468 = vrcp.pop %v2463
      %v2469 = vrcp.pop %v2466
      %v2470 = vmul.f32 %v2453, %v2467
      %v2471 = vmul.f32 %v2455, %v2468
      %v2472 = vmul.f32 %v2457, %v2469
      %v2474 = vsel %vm907, %v2470, 0
      %v2477 = vsel %vm907, %v2471, 0
      %v2480 = vsel %vm907, %v2472, 0
      %v2483 = vsel %vm951, %v2331, 0
      %2485 = vmatprep.subr.mxu0 0.0
      %2486 = vmatpush1.msra.mxu0 %v2323
      %2487 = vmatprep.subr.mxu0 0.0
      %2488 = vmatpush1.msra.mxu0 %v2326
      %2489 = vmatprep.subr.mxu0 0.0
      %2490 = vmatpush1.msra.mxu0 %v2483
      %2491 = vmatprep.subr.mxu0 0.0
      %2492 = vmatpush1.msra.mxu0 0.0
      %2493 = vmatprep.subr.mxu0 0.0
      %2494 = vmatpush1.msra.mxu0 0.0
      %2495 = vmatprep.subr.mxu0 0.0
      %2496 = vmatpush1.msra.mxu0 0.0
      %2497 = vmatprep.subr.mxu0 0.0
      %2498 = vmatpush1.msra.mxu0 0.0
      %2499 = vmatprep.subr.mxu0 0.0
      %2500 = vmatpush1.msra.mxu0 0.0
      %2501 = vmatprep.subr.mxu0 0.0
      %2502 = vmatpush1.msra.mxu0 0.0
      %2503 = vmatprep.subr.mxu0 0.0
      %2504 = vmatpush1.msra.mxu0 0.0
      %2505 = vmatprep.subr.mxu0 0.0
      %2506 = vmatpush1.msra.mxu0 0.0
      %2507 = vmatprep.subr.mxu0 0.0
      %2508 = vmatpush1.msra.mxu0 0.0
      %2509 = vmatprep.subr.mxu0 0.0
      %2510 = vmatpush1.msra.mxu0 0.0
      %2511 = vmatprep.subr.mxu0 0.0
      %2512 = vmatpush1.msra.mxu0 0.0
      %2513 = vmatprep.subr.mxu0 0.0
      %2514 = vmatpush1.msra.mxu0 0.0
      %2515 = vmatprep.subr.mxu0 0.0
      %2516 = vmatpush1.msra.mxu0 0.0
      %2517 = vmatprep.subr.mxu0 0.0
      %2518 = vmatpush1.msra.mxu0 0.0
      %2519 = vmatprep.subr.mxu0 0.0
      %2520 = vmatpush1.msra.mxu0 0.0
      %2521 = vmatprep.subr.mxu0 0.0
      %2522 = vmatpush1.msra.mxu0 0.0
      %2523 = vmatprep.subr.mxu0 0.0
      %2524 = vmatpush1.msra.mxu0 0.0
      %2525 = vmatprep.subr.mxu0 0.0
      %2526 = vmatpush1.msra.mxu0 0.0
      %2527 = vmatprep.subr.mxu0 0.0
      %2528 = vmatpush1.msra.mxu0 0.0
      %2529 = vmatprep.subr.mxu0 0.0
      %2530 = vmatpush1.msra.mxu0 0.0
      %2531 = vmatprep.subr.mxu0 0.0
      %2532 = vmatpush1.msra.mxu0 0.0
      %2533 = vmatprep.subr.mxu0 0.0
      %2534 = vmatpush1.msra.mxu0 0.0
      %2535 = vmatprep.subr.mxu0 0.0
      %2536 = vmatpush1.msra.mxu0 0.0
      %2537 = vmatprep.subr.mxu0 0.0
      %2538 = vmatpush1.msra.mxu0 0.0
      %2539 = vmatprep.subr.mxu0 0.0
      %2540 = vmatpush1.msra.mxu0 0.0
      %2541 = vmatprep.subr.mxu0 0.0
      %2542 = vmatpush1.msra.mxu0 0.0
      %2543 = vmatprep.subr.mxu0 0.0
      %2544 = vmatpush1.msra.mxu0 0.0
      %2545 = vmatprep.subr.mxu0 0.0
      %2546 = vmatpush1.msra.mxu0 0.0
      %2547 = vmatprep.subr.mxu0 0.0
      %2548 = vmatpush1.msra.mxu0 0.0
      %2549 = vmatprep.mubr.f32.mxu0 0.0
      %2550 = vmatmul.mubr.f32.gmra.mrb[0].mxu0 %v2474
      %v2551 = vpop.f32.mrb[0].mxu0
      %v2552 = vadd.f32 0.0, %v2551
      %v2553 = vpop.f32.mrb[0].mxu0
      %2554 = vmatprep.mubr.f32.mxu0 0.0
      %2555 = vmatmul.mubr.f32.gmra.mrb[0].mxu0 %v2477
      %v2556 = vpop.f32.mrb[0].mxu0
      %v2557 = vadd.f32 0.0, %v2556
      %v2558 = vpop.f32.mrb[0].mxu0
      %2559 = vmatprep.mubr.f32.mxu0 0.0
      %2560 = vmatmul.mubr.f32.gmra.mrb[0].mxu0 %v2480
      %v2561 = vpop.f32.mrb[0].mxu0
      %v2562 = vadd.f32 0.0, %v2561
      %v2563 = vpop.f32.mrb[0].mxu0
      %2564 = vdwg.mxu0
      %v2565 = vpack.c.bf16 %v2557, %v2552
      %v2566 = vpack.c.bf16 %v2562, %v2562
      %s2567 = scalar_lea.vmem %s6, 12
      %v2568 = vld [vmem:[%s2567] sm:$0xf]
      %v2570 = vsel %vm802, %v2565, 0
      %v2573 = vsel %vm802, %v2566, 0
      %v2576 = vsel %vm1496, %v2568, 0
      %2578 = vmatprep.subr.bf16.mxu0 0
      %2579 = vmatpush1.bf16.msra.mxu0 %v2576
      %2580 = vmatprep.subr.bf16.mxu0 0
      %2581 = vmatpush1.bf16.msra.mxu0 0
      %2582 = vmatprep.subr.bf16.mxu0 0
      %2583 = vmatpush1.bf16.msra.mxu0 0
      %2584 = vmatprep.subr.bf16.mxu0 0
      %2585 = vmatpush1.bf16.msra.mxu0 0
      %2586 = vmatprep.subr.bf16.mxu0 0
      %2587 = vmatpush1.bf16.msra.mxu0 0
      %2588 = vmatprep.subr.bf16.mxu0 0
      %2589 = vmatpush1.bf16.msra.mxu0 0
      %2590 = vmatprep.subr.bf16.mxu0 0
      %2591 = vmatpush1.bf16.msra.mxu0 0
      %2592 = vmatprep.subr.bf16.mxu0 0
      %2593 = vmatpush1.bf16.msra.mxu0 0
      %2594 = vmatprep.subr.bf16.mxu0 0
      %2595 = vmatpush1.bf16.msra.mxu0 0
      %2596 = vmatprep.subr.bf16.mxu0 0
      %2597 = vmatpush1.bf16.msra.mxu0 0
      %2598 = vmatprep.subr.bf16.mxu0 0
      %2599 = vmatpush1.bf16.msra.mxu0 0
      %2600 = vmatprep.subr.bf16.mxu0 0
      %2601 = vmatpush1.bf16.msra.mxu0 0
      %2602 = vmatprep.subr.bf16.mxu0 0
      %2603 = vmatpush1.bf16.msra.mxu0 0
      %2604 = vmatprep.subr.bf16.mxu0 0
      %2605 = vmatpush1.bf16.msra.mxu0 0
      %2606 = vmatprep.subr.bf16.mxu0 0
      %2607 = vmatpush1.bf16.msra.mxu0 0
      %2608 = vmatprep.subr.bf16.mxu0 0
      %2609 = vmatpush1.bf16.msra.mxu0 0
      %2610 = vmatprep.mubr.bf16.mxu0 0
      %2611 = vmatmul.mubr.bf16.gmra.mrb[0].mxu0 %v2570
      %v2612 = vpop.f32.mrb[0].mxu0
      %v2613 = vadd.f32 0.0, %v2612
      %v2614 = vpop.f32.mrb[0].mxu0
      %v2615 = vpop.f32.mrb[0].mxu0
      %v2616 = vadd.f32 0.0, %v2615
      %v2617 = vpop.f32.mrb[0].mxu0
      %2618 = vmatprep.mubr.bf16.mxu0 0
      %2619 = vmatmul.mubr.bf16.gmra.mrb[0].mxu0 %v2573
      %v2620 = vpop.f32.mrb[0].mxu0
      %v2621 = vadd.f32 0.0, %v2620
      %v2622 = vpop.f32.mrb[0].mxu0
      %v2623 = vpop.f32.mrb[0].mxu0
      %v2624 = vpop.f32.mrb[0].mxu0
      %2625 = vdwg.mxu0
      %v2626 = vadd.f32 %v2114, %v2613
      %v2627 = vadd.f32 %v2115, %v2616
      %v2628 = vadd.f32 %v2116, %v2621
      %v2629 = vadd.f32 %v483, %v2626
      %v2630 = vadd.f32 %v484, %v2627
      %v2631 = vadd.f32 %v485, %v2628
      %v2632 = vld [vmem:[%s7] sm:$0x1]
      %v2634 = vlaneseq
      %v2635 = vshrl.u32 %v2634, 7
      %v2636 = vsub.s32 0, %v2635
      %v2637 = vrot.slane %v2632, %v2636
      %v2639 = vadd.f32 %v2629, %v2637
      %v2640 = vadd.f32 %v2630, %v2637
      %v2641 = vadd.f32 %v2631, %v2637
      %v2642 = vsel %vm486, %v2639, 0.0
      %2643 = vadd.xlane.f32.xlu0 %v2642
      %v2644 = vpop.xlane.xlu0 %2643
      %v2645 = vsel %vm486, %v2640, 0.0
      %2646 = vadd.xlane.f32.xlu0 %v2645
      %v2647 = vpop.xlane.xlu0 %2646
      %v2648 = vsel %vm493, %v2641, 0.0
      %2649 = vadd.xlane.f32.xlu0 %v2648
      %v2650 = vpop.xlane.xlu0 %2649
      %v2651 = vmul.f32 %v2644, %v497
      %v2652 = vmul.f32 %v2647, %v497
      %v2653 = vmul.f32 %v2650, %v497
      %v2654 = vsub.f32 %v2639, %v2651
      %v2655 = vsub.f32 %v2640, %v2652
      %v2656 = vsub.f32 %v2641, %v2653
      %v2657 = vmul.f32 %v2654, %v2654
      %v2658 = vmul.f32 %v2655, %v2655
      %v2659 = vmul.f32 %v2656, %v2656
      %v2660 = vsel %vm486, %v2657, 0.0
      %2661 = vadd.xlane.f32.xlu0 %v2660
      %v2662 = vpop.xlane.xlu0 %2661
      %v2663 = vsel %vm486, %v2658, 0.0
      %2664 = vadd.xlane.f32.xlu0 %v2663
      %v2665 = vpop.xlane.xlu0 %2664
      %v2666 = vsel %vm493, %v2659, 0.0
      %2667 = vadd.xlane.f32.xlu0 %v2666
      %v2668 = vpop.xlane.xlu0 %2667
      %v2669 = vmul.f32 %v2662, %v497
      %v2670 = vmul.f32 %v2665, %v497
      %v2671 = vmul.f32 %v2668, %v497
      %v2672 = vadd.f32 %v2669, 1e-05
      %v2673 = vadd.f32 %v2670, 1e-05
      %v2674 = vadd.f32 %v2671, 1e-05
      %v2675 = vrsqrt.pop %v2672
      %v2676 = vrsqrt.pop %v2673
      %v2677 = vrsqrt.pop %v2674
      %v2678 = vmul.f32 %v2654, %v2675
      %v2679 = vmul.f32 %v2655, %v2676
      %v2680 = vmul.f32 %v2656, %v2677
      %v2681 = vld [vmem:[%s8] sm:$0x1]
      %v2683 = vlaneseq
      %v2684 = vshrl.u32 %v2683, 7
      %v2685 = vsub.s32 0, %v2684
      %v2686 = vrot.slane %v2681, %v2685
      %v2688 = vmul.f32 %v2678, %v2686
      %v2689 = vmul.f32 %v2679, %v2686
      %v2690 = vmul.f32 %v2680, %v2686
      %v2691 = vld [vmem:[%s9] sm:$0x1]
      %v2693 = vlaneseq
      %v2694 = vshrl.u32 %v2693, 7
      %v2695 = vsub.s32 0, %v2694
      %v2696 = vrot.slane %v2691, %v2695
      %v2698 = vadd.f32 %v2688, %v2696
      %v2699 = vadd.f32 %v2689, %v2696
      %v2700 = vadd.f32 %v2690, %v2696
      %v2701 = vpack.c.bf16 %v2699, %v2698
      %v2702 = vpack.c.bf16 %v2700, %v2700
      %v2703 = vld [vmem:[%s10] sm:$0xf]
      %v2704 = vld [vmem:[%s10 + $0x4] sm:$0xf]
      %v2705 = vld [vmem:[%s10 + $0x8] sm:$0xf]
      %v2706 = vld [vmem:[%s10 + $0xc] sm:$0xf]
      %v2707 = vld [vmem:[%s11] sm:$0x1]
      %v2709 = vlaneseq
      %v2710 = vshrl.u32 %v2709, 7
      %v2711 = vsub.s32 0, %v2710
      %v2712 = vrot.slane %v2707, %v2711
      %v2718 = vunpack.c.l.b16 %v2703
      %v2719 = vunpack.c.l.b16 %v2704
      %v2720 = vunpack.c.l.b16 %v2705
      %v2721 = vunpack.c.l.b16 %v2706
      %v2722 = vpack.c.b16 %v2719, %v2718
      %v2723 = vpack.c.b16 %v2721, %v2720
      %v2727 = vsel %vm486, %v2701, 0
      %v2730 = vsel %vm486, %v2702, 0
      %2732 = vmatprep.subr.bf16.mxu0 0
      %2733 = vmatpush1.bf16.msra.mxu0 %v2722
      %2734 = vmatprep.subr.bf16.mxu0 0
      %2735 = vmatpush1.bf16.msra.mxu0 %v2723
      %2736 = vmatprep.subr.bf16.mxu0 0
      %2737 = vmatpush1.bf16.msra.mxu0 0
      %2738 = vmatprep.subr.bf16.mxu0 0
      %2739 = vmatpush1.bf16.msra.mxu0 0
      %2740 = vmatprep.subr.bf16.mxu0 0
      %2741 = vmatpush1.bf16.msra.mxu0 0
      %2742 = vmatprep.subr.bf16.mxu0 0
      %2743 = vmatpush1.bf16.msra.mxu0 0
      %2744 = vmatprep.subr.bf16.mxu0 0
      %2745 = vmatpush1.bf16.msra.mxu0 0
      %2746 = vmatprep.subr.bf16.mxu0 0
      %2747 = vmatpush1.bf16.msra.mxu0 0
      %2748 = vmatprep.subr.bf16.mxu0 0
      %2749 = vmatpush1.bf16.msra.mxu0 0
      %2750 = vmatprep.subr.bf16.mxu0 0
      %2751 = vmatpush1.bf16.msra.mxu0 0
      %2752 = vmatprep.subr.bf16.mxu0 0
      %2753 = vmatpush1.bf16.msra.mxu0 0
      %2754 = vmatprep.subr.bf16.mxu0 0
      %2755 = vmatpush1.bf16.msra.mxu0 0
      %2756 = vmatprep.subr.bf16.mxu0 0
      %2757 = vmatpush1.bf16.msra.mxu0 0
      %2758 = vmatprep.subr.bf16.mxu0 0
      %2759 = vmatpush1.bf16.msra.mxu0 0
      %2760 = vmatprep.subr.bf16.mxu0 0
      %2761 = vmatpush1.bf16.msra.mxu0 0
      %2762 = vmatprep.subr.bf16.mxu0 0
      %2763 = vmatpush1.bf16.msra.mxu0 0
      %2764 = vmatprep.mubr.bf16.mxu0 0
      %2765 = vmatmul.mubr.bf16.gmra.mrb[0].mxu0 %v2727
      %v2766 = vpop.f32.mrb[0].mxu0
      %v2767 = vadd.f32 %v2712, %v2766
      %v2768 = vpop.f32.mrb[0].mxu0
      %v2769 = vpop.f32.mrb[0].mxu0
      %v2770 = vadd.f32 %v2712, %v2769
      %v2771 = vpop.f32.mrb[0].mxu0
      %2772 = vmatprep.mubr.bf16.mxu0 0
      %2773 = vmatmul.mubr.bf16.gmra.mrb[0].mxu0 %v2730
      %v2774 = vpop.f32.mrb[0].mxu0
      %v2775 = vadd.f32 %v2712, %v2774
      %v2776 = vpop.f32.mrb[0].mxu0
      %v2777 = vpop.f32.mrb[0].mxu0
      %v2778 = vpop.f32.mrb[0].mxu0
      %2779 = vdwg.mxu0
      %v2780 = vmul.f32 %v2767, 0.5
      %v2781 = vmul.f32 %v2770, 0.5
      %v2782 = vmul.f32 %v2775, 0.5
      %v2783 = vmul.f32 %v2767, 0.044715
      %v2784 = vmul.f32 %v2770, 0.044715
      %v2785 = vmul.f32 %v2775, 0.044715
      %v2786 = vmul.f32 %v2783, %v2767
      %v2787 = vmul.f32 %v2784, %v2770
      %v2788 = vmul.f32 %v2785, %v2775
      %v2789 = vmul.f32 %v2786, %v2767
      %v2790 = vmul.f32 %v2787, %v2770
      %v2791 = vmul.f32 %v2788, %v2775
      %v2792 = vadd.f32 %v2767, %v2789
      %v2793 = vadd.f32 %v2770, %v2790
      %v2794 = vadd.f32 %v2775, %v2791
      %v2795 = vmul.f32 %v2792, 0.7978846
      %v2796 = vmul.f32 %v2793, 0.7978846
      %v2797 = vmul.f32 %v2794, 0.7978846
      %v2798 = vtanh.pop %v2795
      %v2799 = vtanh.pop %v2796
      %v2800 = vtanh.pop %v2797
      %v2801 = vadd.f32 %v2798, 1.0
      %v2802 = vadd.f32 %v2799, 1.0
      %v2803 = vadd.f32 %v2800, 1.0
      %v2804 = vmul.f32 %v2780, %v2801
      %v2805 = vmul.f32 %v2781, %v2802
      %v2806 = vmul.f32 %v2782, %v2803
      %v2807 = vpack.c.bf16 %v2805, %v2804
      %v2808 = vpack.c.bf16 %v2806, %v2806
      %v2809 = vld [vmem:[%s12] sm:$0xf]
      %v2810 = vld [vmem:[%s12 + $0x4] sm:$0xf]
      %v2811 = vld [vmem:[%s12 + $0x8] sm:$0xf]
      %v2812 = vld [vmem:[%s12 + $0xc] sm:$0xf]
      %v2813 = vld [vmem:[%s12 + $0x10] sm:$0xf]
      %v2814 = vld [vmem:[%s12 + $0x14] sm:$0xf]
      %v2815 = vld [vmem:[%s12 + $0x18] sm:$0xf]
      %v2816 = vld [vmem:[%s12 + $0x1c] sm:$0xf]
      %v2817 = vld [vmem:[%s12 + $0x20] sm:$0xf]
      %v2818 = vld [vmem:[%s12 + $0x24] sm:$0xf]
      %v2819 = vld [vmem:[%s12 + $0x28] sm:$0xf]
      %v2820 = vld [vmem:[%s12 + $0x2c] sm:$0xf]
      %v2821 = vld [vmem:[%s12 + $0x30] sm:$0xf]
      %v2822 = vld [vmem:[%s12 + $0x34] sm:$0xf]
      %v2823 = vld [vmem:[%s12 + $0x38] sm:$0xf]
      %v2824 = vld [vmem:[%s12 + $0x3c] sm:$0xf]
      %v2825 = vld [vmem:[%s13] sm:$0x1]
      %v2827 = vlaneseq
      %v2828 = vshrl.u32 %v2827, 7
      %v2829 = vsub.s32 0, %v2828
      %v2830 = vrot.slane %v2825, %v2829
      %v2848 = vunpack.c.l.b16 %v2809
      %v2849 = vunpack.c.l.b16 %v2810
      %v2850 = vunpack.c.l.b16 %v2811
      %v2851 = vunpack.c.l.b16 %v2812
      %v2852 = vunpack.c.l.b16 %v2813
      %v2853 = vunpack.c.l.b16 %v2814
      %v2854 = vunpack.c.l.b16 %v2815
      %v2855 = vunpack.c.l.b16 %v2816
      %v2856 = vunpack.c.l.b16 %v2817
      %v2857 = vunpack.c.l.b16 %v2818
      %v2858 = vunpack.c.l.b16 %v2819
      %v2859 = vunpack.c.l.b16 %v2820
      %v2860 = vunpack.c.l.b16 %v2821
      %v2861 = vunpack.c.l.b16 %v2822
      %v2862 = vunpack.c.l.b16 %v2823
      %v2863 = vunpack.c.l.b16 %v2824
      %v2864 = vpack.c.b16 %v2849, %v2848
      %v2865 = vpack.c.b16 %v2851, %v2850
      %v2866 = vpack.c.b16 %v2853, %v2852
      %v2867 = vpack.c.b16 %v2855, %v2854
      %v2868 = vpack.c.b16 %v2857, %v2856
      %v2869 = vpack.c.b16 %v2859, %v2858
      %v2870 = vpack.c.b16 %v2861, %v2860
      %v2871 = vpack.c.b16 %v2863, %v2862
      %2880 = vmatprep.subr.bf16.mxu0 0
      %2881 = vmatpush1.bf16.msra.mxu0 %v2864
      %2882 = vmatprep.subr.bf16.mxu0 0
      %2883 = vmatpush1.bf16.msra.mxu0 %v2865
      %2884 = vmatprep.subr.bf16.mxu0 0
      %2885 = vmatpush1.bf16.msra.mxu0 %v2866
      %2886 = vmatprep.subr.bf16.mxu0 0
      %2887 = vmatpush1.bf16.msra.mxu0 %v2867
      %2888 = vmatprep.subr.bf16.mxu0 0
      %2889 = vmatpush1.bf16.msra.mxu0 %v2868
      %2890 = vmatprep.subr.bf16.mxu0 0
      %2891 = vmatpush1.bf16.msra.mxu0 %v2869
      %2892 = vmatprep.subr.bf16.mxu0 0
      %2893 = vmatpush1.bf16.msra.mxu0 %v2870
      %2894 = vmatprep.subr.bf16.mxu0 0
      %2895 = vmatpush1.bf16.msra.mxu0 %v2871
      %2896 = vmatprep.subr.bf16.mxu0 0
      %2897 = vmatpush1.bf16.msra.mxu0 0
      %2898 = vmatprep.subr.bf16.mxu0 0
      %2899 = vmatpush1.bf16.msra.mxu0 0
      %2900 = vmatprep.subr.bf16.mxu0 0
      %2901 = vmatpush1.bf16.msra.mxu0 0
      %2902 = vmatprep.subr.bf16.mxu0 0
      %2903 = vmatpush1.bf16.msra.mxu0 0
      %2904 = vmatprep.subr.bf16.mxu0 0
      %2905 = vmatpush1.bf16.msra.mxu0 0
      %2906 = vmatprep.subr.bf16.mxu0 0
      %2907 = vmatpush1.bf16.msra.mxu0 0
      %2908 = vmatprep.subr.bf16.mxu0 0
      %2909 = vmatpush1.bf16.msra.mxu0 0
      %2910 = vmatprep.subr.bf16.mxu0 0
      %2911 = vmatpush1.bf16.msra.mxu0 0
      %2912 = vmatprep.mubr.bf16.mxu0 0
      %2913 = vmatmul.mubr.bf16.gmra.mrb[0].mxu0 %v2807
      %v2914 = vpop.f32.mrb[0].mxu0
      %v2915 = vadd.f32 %v2830, %v2914
      %v2916 = vpop.f32.mrb[0].mxu0
      %v2917 = vpop.f32.mrb[0].mxu0
      %v2918 = vadd.f32 %v2830, %v2917
      %v2919 = vpop.f32.mrb[0].mxu0
      %2920 = vmatprep.mubr.bf16.mxu0 0
      %2921 = vmatmul.mubr.bf16.gmra.mrb[0].mxu0 %v2808
      %v2922 = vpop.f32.mrb[0].mxu0
      %v2923 = vadd.f32 %v2830, %v2922
      %v2924 = vpop.f32.mrb[0].mxu0
      %v2925 = vpop.f32.mrb[0].mxu0
      %v2926 = vpop.f32.mrb[0].mxu0
      %2927 = vdwg.mxu0
      %v2928 = vadd.f32 %v2639, %v2915
      %v2929 = vadd.f32 %v2640, %v2918
      %v2930 = vadd.f32 %v2641, %v2923
      %2931 = vst.msk [vmem:[%s481] sm:$0xff] %vm486, %v2928
      %2932 = vst.msk [vmem:[%s481 + $0x8] sm:$0xff] %vm486, %v2929
      %2933 = vst.msk [vmem:[%s481 + $0x10] sm:$0x3] %vm493, %v2930
      %p2934 = scmp.lt.s32.totalorder %s25, 1
      %s2935 = scalar_select %p2934, %s25, 1
      %s2936 = smul.addr %s2935, 3
      %s2937 = smul.addr %s2936, 8
      %s2938 = scalar_lea.vmem %s14, %s2937
      // Predicated region
      $region77: #{run_generation.3} parent=75 // pred_check
        %p2939 = pneg %p347
      $region78: #{run_generation.3} parent=75 // pred_check_branch
        %2941 = sbr.rel (%p2939) target = $region80
      $region79: #{run_generation.3} parent=75 // pred_region
        _
      $region80: #{run_generation.3} parent=75 // pred_fallthru
        _
    $region76: #{run_generation.3} parent=5 // pred_fallthru
      _
    %p2942 = scmp.le.s32.totalorder 2, %s20
    // Predicated region
    $region81: #{run_generation.3} parent=5 // pred_check
      %p2943 = pneg %p2942
    $region82: #{run_generation.3} parent=5 // pred_check_branch
      %2945 = sbr.rel (%p2943) target = $region84
    $region83: #{run_generation.3} parent=5 // pred_region
      %s2946 = ssub.s32 %s20, 2
      // Predicated region
      $region85: #{run_generation.3} parent=83 // pred_check
        %p2947 = pneg %p353
      $region86: #{run_generation.3} parent=83 // pred_check_branch
        %2949 = sbr.rel (%p2947) target = $region88
      $region87: #{run_generation.3} parent=83 // pred_region
        %p2950 = scmp.lt.s32.totalorder %s26, 1
        %s2951 = scalar_select %p2950, %s26, 1
        %s2952 = smul.addr %s2951, 3
        %s2953 = smul.addr %s2952, 8
        %s2954 = scalar_lea.vmem %s14, %s2953
      $region88: #{run_generation.3} parent=83 // pred_fallthru
        _
    $region84: #{run_generation.3} parent=5 // pred_fallthru
      _
  $region6: #{run_generation.3} parent=0 // loop_footer
    %s24 = sadd.s32 1, %s20
  $region7: #{run_generation.3} parent=0 // loop_footer_branch
    %19 = sbr.rel target = $region3
  $region8: #{run_generation.3} parent=0 // loop_exit
    _

</llo_original>
